<compile_context>
chip_gen: v7x
topology: tpu7x:2x2x1
jax: 0.10.0
libtpu: 0.0.40
codegen_flags: <defaults>
</compile_context>

<pallas_src>
import functools

import jax
import jax.numpy as jnp
from jax import lax
from jax.experimental import pallas as pl
from jax.experimental.pallas import tpu as pltpu


# ----------------------------------------------------------------------------
# Kernel 1: fused gated conv (kh*kw accumulated matmuls over shifted windows)
#           + per-image BatchNorm partial statistics.
# Grid: (N,)  -- one upsampled image per step ("parallel" across TCs).
# ----------------------------------------------------------------------------
def _gated_conv_kernel(x_ref, w_ref, b_ref, mask_ref, y_ref, stats_ref, *,
                       kh, kw, wp, s, cout):
    """Shapes seen by the kernel (leading image dim squeezed by BlockSpec):

    x_ref    : (Cin, L)              flattened zero-padded upsampled image
    w_ref    : (kh*kw, 2*Cout, Cin)  fused (f|g) weights, one slab per tap
    b_ref    : (2*Cout, 1)           fused biases
    mask_ref : (1, S)                1.0 on valid output columns, 0.0 on the
                                     kw-1 wrap-around columns of each row
    y_ref    : (Cout, S)             gated activation (pre-BatchNorm)
    stats_ref: (Cout, 2)             per-image [sum, sum_of_squares] over the
                                     valid positions (for the BN reduction)
    """
    # Conv as kh*kw accumulated matmuls: each tap is a contiguous static
    # window of the flattened padded image (the "flattened conv" trick: the
    # kw-1 wrap columns per row are garbage and masked/sliced away later).
    fg = None
    for di in range(kh):
        for dj in range(kw):
            tap = di * kw + dj
            off = di * wp + dj
            xs = x_ref[:, off:off + s]                      # (Cin, S) window
            contrib = jnp.dot(w_ref[tap], xs,
                              preferred_element_type=jnp.float32)
            fg = contrib if fg is None else fg + contrib
    fg = fg + b_ref[...]                                    # (2*Cout, S)

    f = fg[:cout, :]                                        # feature half
    g = fg[cout:, :]                                        # gate half
    f_act = jnp.where(f > 0, f, 0.2 * f)                    # LeakyReLU(0.2)
    gate = 1.0 / (1.0 + jnp.exp(-g))                        # exact sigmoid
    y = f_act * gate                                        # (Cout, S)

    y_ref[...] = y.astype(y_ref.dtype)                      # lane-dense store

    # Fused BatchNorm partial stats (mask out the wrap-around columns).
    ym = y * mask_ref[...]
    stats_ref[:, 0:1] = jnp.sum(ym, axis=1, keepdims=True)       # sum
    stats_ref[:, 1:2] = jnp.sum(ym * ym, axis=1, keepdims=True)  # sum of sq.


# ----------------------------------------------------------------------------
# Kernel 2: apply BatchNorm scale/shift, tiled over (image, spatial).
# ----------------------------------------------------------------------------
def _bn_apply_kernel(y_ref, scale_ref, shift_ref, o_ref):
    o_ref[...] = y_ref[...] * scale_ref[...] + shift_ref[...]


# ----------------------------------------------------------------------------
# Forward pass
# ----------------------------------------------------------------------------
def gated_deconv2d_forward(x, params, *, kernel_size=3, stride=1, padding=1,
                           eps=1e-5):
    if stride != 1:
        raise NotImplementedError("only stride=1 is implemented")
    kh = kw = kernel_size

    # nearest 2x upsample (F.interpolate(scale_factor=2, mode='nearest'), NCHW)
    x_up = jnp.repeat(jnp.repeat(x, 2, axis=2), 2, axis=3)
    N, Cin, Hu, Wu = x_up.shape
    Ho = Hu + 2 * padding - kh + 1
    Wo = Wu + 2 * padding - kw + 1
    Hp = Hu + 2 * padding
    Wp = Wu + 2 * padding
    S = Ho * Wp                      # flattened output rows incl. wrap columns

    # pad + flatten spatial dims (single cheap XLA pass; no 9x im2col array)
    xp = jnp.pad(x_up, ((0, 0), (0, 0),
                        (padding, padding), (padding, padding)))
    L = Hp * Wp + (kw - 1)
    L = ((L + 127) // 128) * 128     # round resident block up to full lanes
    xf = jnp.pad(xp.reshape(N, Cin, Hp * Wp),
                 ((0, 0), (0, 0), (0, L - Hp * Wp)))

    Cout = params["wf"].shape[0]
    # fused (f|g) weights: (kh*kw, 2*Cout, Cin), tap-major
    wcat = jnp.concatenate([params["wf"], params["wg"]], axis=0)  # (2C,Cin,kh,kw)
    wcat = jnp.transpose(wcat, (2, 3, 0, 1)).reshape(kh * kw, 2 * Cout, Cin)
    bcat = jnp.concatenate([params["bf"], params["bg"]]).reshape(2 * Cout, 1)

    # validity mask over the flattened (Ho, Wp) grid: drop kw-1 wrap cols/row
    col = jnp.arange(S, dtype=jnp.int32) % Wp
    mask = (col < Wo).astype(jnp.float32).reshape(1, S)

    conv_kernel = functools.partial(_gated_conv_kernel, kh=kh, kw=kw,
                                    wp=Wp, s=S, cout=Cout)
    y, stats = pl.pallas_call(
        conv_kernel,
        grid=(N,),
        in_specs=[
            pl.BlockSpec((None, Cin, L), lambda n: (n, 0, 0)),
            pl.BlockSpec((kh * kw, 2 * Cout, Cin), lambda n: (0, 0, 0)),
            pl.BlockSpec((2 * Cout, 1), lambda n: (0, 0)),
            pl.BlockSpec((1, S), lambda n: (0, 0)),
        ],
        out_specs=(
            pl.BlockSpec((None, Cout, S), lambda n: (n, 0, 0)),
            pl.BlockSpec((None, Cout, 2), lambda n: (n, 0, 0)),
        ),
        out_shape=(
            jax.ShapeDtypeStruct((N, Cout, S), jnp.float32),
            jax.ShapeDtypeStruct((N, Cout, 2), jnp.float32),
        ),
        compiler_params=pltpu.CompilerParams(
            dimension_semantics=("parallel",)),
    )(xf, wcat, bcat, mask)

    # Tiny (Cout,) BatchNorm reduction in JAX (training mode: biased variance)
    count = float(N * Ho * Wo)
    ssum = jnp.sum(stats[:, :, 0], axis=0)
    ssq = jnp.sum(stats[:, :, 1], axis=0)
    mean = ssum / count
    var = jnp.maximum(ssq / count - mean * mean, 0.0)
    scale = params["gamma"] * lax.rsqrt(var + eps)
    shift = params["beta"] - mean * scale

    # Lightweight tiled normalize kernel (handles S not divisible by the tile)
    tS = min(512, S)
    yn = pl.pallas_call(
        _bn_apply_kernel,
        grid=(N, pl.cdiv(S, tS)),
        in_specs=[
            pl.BlockSpec((None, Cout, tS), lambda n, si: (n, 0, si)),
            pl.BlockSpec((Cout, 1), lambda n, si: (0, 0)),
            pl.BlockSpec((Cout, 1), lambda n, si: (0, 0)),
        ],
        out_specs=pl.BlockSpec((None, Cout, tS), lambda n, si: (n, 0, si)),
        out_shape=jax.ShapeDtypeStruct((N, Cout, S), jnp.float32),
        compiler_params=pltpu.CompilerParams(
            dimension_semantics=("parallel", "parallel")),
    )(y, scale.reshape(Cout, 1), shift.reshape(Cout, 1))

    # (N, Cout, Ho*Wp) -> NCHW: free reshape + drop the kw-1 wrap columns/row
    return yn.reshape(N, Cout, Ho, Wp)[:, :, :, :Wo]


# ----------------------------------------------------------------------------
# Deterministic parameter init (matches Conv2d / BatchNorm2d shapes)
# ----------------------------------------------------------------------------
def init_params(key, in_channels, out_channels, kernel_size):
    kh = kw = kernel_size
    fan_in = in_channels * kh * kw
    k1, k2, k3, k4 = jax.random.split(key, 4)
    std = (2.0 / fan_in) ** 0.5           # kaiming_normal_ (fan_in, relu gain)
    bound = 1.0 / (fan_in ** 0.5)         # default Conv2d bias init
    return {
        "wf": std * jax.random.normal(k1, (out_channels, in_channels, kh, kw),
                                      jnp.float32),
        "bf": jax.random.uniform(k2, (out_channels,), jnp.float32,
                                 -bound, bound),
        "wg": std * jax.random.normal(k3, (out_channels, in_channels, kh, kw),
                                      jnp.float32),
        "bg": jax.random.uniform(k4, (out_channels,), jnp.float32,
                                 -bound, bound),
        "gamma": jnp.ones((out_channels,), jnp.float32),
        "beta": jnp.zeros((out_channels,), jnp.float32),
    }


# ----------------------------------------------------------------------------
# Pure-JAX reference for correctness check
# ----------------------------------------------------------------------------
def reference_forward(x, params, *, kernel_size=3, stride=1, padding=1):
    x_up = jnp.repeat(jnp.repeat(x, 2, axis=2), 2, axis=3)

    def conv(inp, w, b):
        out = lax.conv_general_dilated(
            inp, w, window_strides=(stride, stride),
            padding=[(padding, padding), (padding, padding)],
            dimension_numbers=("NCHW", "OIHW", "NCHW"))
        return out + b[None, :, None, None]

    f = conv(x_up, params["wf"], params["bf"])
    g = conv(x_up, params["wg"], params["bg"])
    y = jnp.where(f > 0, f, 0.2 * f) * jax.nn.sigmoid(g)
    mean = jnp.mean(y, axis=(0, 2, 3), keepdims=True)
    var = jnp.mean((y - mean) ** 2, axis=(0, 2, 3), keepdims=True)
    y = (y - mean) * lax.rsqrt(var + 1e-5)
    y = (y * params["gamma"][None, :, None, None]
         + params["beta"][None, :, None, None])
    return y


if __name__ == "__main__":
    key = jax.random.PRNGKey(0)
    kx, kp = jax.random.split(key)

    N, Cin, H, W = 2, 4, 16, 16
    Cout, ksize = 8, 3

    x = jax.random.normal(kx, (N, Cin, H, W), jnp.float32)
    params = init_params(kp, Cin, Cout, ksize)

    out = gated_deconv2d_forward(x, params, kernel_size=ksize, stride=1,
                                 padding=1)
    out = jax.block_until_ready(out)

    ref = reference_forward(x, params, kernel_size=ksize, stride=1, padding=1)
    assert out.shape == (N, Cout, 2 * H, 2 * W), out.shape
    assert jnp.allclose(out, ref, atol=1e-4, rtol=1e-4), \
        float(jnp.max(jnp.abs(out - ref)))

    print("KERNEL_OK")
</pallas_src>

<mosaic_0001>
module attributes {stable_mosaic.version = 11 : i64} {
  func.func @_gated_conv_kernel(%arg0: i32, %arg1: memref<1x4x1280xf32, #tpu.memory_space<vmem>>, %arg2: memref<9x16x4xf32, #tpu.memory_space<vmem>>, %arg3: memref<16x1xf32, #tpu.memory_space<vmem>>, %arg4: memref<1x1088xf32, #tpu.memory_space<vmem>>, %arg5: memref<1x8x1088xf32, #tpu.memory_space<vmem>>, %arg6: memref<1x8x2xf32, #tpu.memory_space<vmem>>) attributes {dimension_semantics = [#tpu.dimension_semantics<parallel>], iteration_bounds = array<i64: 2>, scalar_prefetch = 0 : i64, scratch_operands = 0 : i64, tpu.core_type = #tpu.core_type<tc>, window_params = [{transform_indices = @transform_0, window_bounds = array<i64: 1, 4, 1280>}, {pipeline_mode = #tpu.pipeline_mode<synchronous>, transform_indices = @transform_1, window_bounds = array<i64: 9, 16, 4>}, {pipeline_mode = #tpu.pipeline_mode<synchronous>, transform_indices = @transform_2, window_bounds = array<i64: 16, 1>}, {pipeline_mode = #tpu.pipeline_mode<synchronous>, transform_indices = @transform_3, window_bounds = array<i64: 1, 1088>}, {transform_indices = @transform_4, window_bounds = array<i64: 1, 8, 1088>}, {transform_indices = @transform_5, window_bounds = array<i64: 1, 8, 2>}]} {
    %c0 = arith.constant 0 : index
    %c0_0 = arith.constant 0 : index
    %c0_1 = arith.constant 0 : index
    %0 = vector.load %arg1[%c0, %c0_0, %c0_1] : memref<1x4x1280xf32, #tpu.memory_space<vmem>>, vector<1x4x1088xf32>
    %1 = vector.shape_cast %0 : vector<1x4x1088xf32> to vector<4x1088xf32>
    %c0_2 = arith.constant 0 : index
    %c0_3 = arith.constant 0 : index
    %c0_4 = arith.constant 0 : index
    %2 = vector.load %arg2[%c0_2, %c0_3, %c0_4] : memref<9x16x4xf32, #tpu.memory_space<vmem>>, vector<1x16x4xf32>
    %3 = vector.shape_cast %2 : vector<1x16x4xf32> to vector<16x4xf32>
    %cst = arith.constant dense<0.000000e+00> : vector<16x1088xf32>
    %4 = tpu.matmul %3, %1, %cst {dimension_numbers = #tpu.dot_dimension_numbers<[1], [0], [0], [1], [0, 0, 1, 1], [], []>} : vector<16x4xf32>, vector<4x1088xf32>, vector<16x1088xf32> -> vector<16x1088xf32>
    %c0_5 = arith.constant 0 : index
    %c0_6 = arith.constant 0 : index
    %c1 = arith.constant 1 : index
    %5 = vector.load %arg1[%c0_5, %c0_6, %c1] : memref<1x4x1280xf32, #tpu.memory_space<vmem>>, vector<1x4x1088xf32>
    %6 = vector.shape_cast %5 : vector<1x4x1088xf32> to vector<4x1088xf32>
    %c1_7 = arith.constant 1 : index
    %c0_8 = arith.constant 0 : index
    %c0_9 = arith.constant 0 : index
    %7 = vector.load %arg2[%c1_7, %c0_8, %c0_9] : memref<9x16x4xf32, #tpu.memory_space<vmem>>, vector<1x16x4xf32>
    %8 = vector.shape_cast %7 : vector<1x16x4xf32> to vector<16x4xf32>
    %cst_10 = arith.constant dense<0.000000e+00> : vector<16x1088xf32>
    %9 = tpu.matmul %8, %6, %cst_10 {dimension_numbers = #tpu.dot_dimension_numbers<[1], [0], [0], [1], [0, 0, 1, 1], [], []>} : vector<16x4xf32>, vector<4x1088xf32>, vector<16x1088xf32> -> vector<16x1088xf32>
    %10 = arith.addf %4, %9 : vector<16x1088xf32>
    %c0_11 = arith.constant 0 : index
    %c0_12 = arith.constant 0 : index
    %c2 = arith.constant 2 : index
    %11 = vector.load %arg1[%c0_11, %c0_12, %c2] : memref<1x4x1280xf32, #tpu.memory_space<vmem>>, vector<1x4x1088xf32>
    %12 = vector.shape_cast %11 : vector<1x4x1088xf32> to vector<4x1088xf32>
    %c2_13 = arith.constant 2 : index
    %c0_14 = arith.constant 0 : index
    %c0_15 = arith.constant 0 : index
    %13 = vector.load %arg2[%c2_13, %c0_14, %c0_15] : memref<9x16x4xf32, #tpu.memory_space<vmem>>, vector<1x16x4xf32>
    %14 = vector.shape_cast %13 : vector<1x16x4xf32> to vector<16x4xf32>
    %cst_16 = arith.constant dense<0.000000e+00> : vector<16x1088xf32>
    %15 = tpu.matmul %14, %12, %cst_16 {dimension_numbers = #tpu.dot_dimension_numbers<[1], [0], [0], [1], [0, 0, 1, 1], [], []>} : vector<16x4xf32>, vector<4x1088xf32>, vector<16x1088xf32> -> vector<16x1088xf32>
    %16 = arith.addf %10, %15 : vector<16x1088xf32>
    %c0_17 = arith.constant 0 : index
    %c0_18 = arith.constant 0 : index
    %c34 = arith.constant 34 : index
    %17 = vector.load %arg1[%c0_17, %c0_18, %c34] : memref<1x4x1280xf32, #tpu.memory_space<vmem>>, vector<1x4x1088xf32>
    %18 = vector.shape_cast %17 : vector<1x4x1088xf32> to vector<4x1088xf32>
    %c3 = arith.constant 3 : index
    %c0_19 = arith.constant 0 : index
    %c0_20 = arith.constant 0 : index
    %19 = vector.load %arg2[%c3, %c0_19, %c0_20] : memref<9x16x4xf32, #tpu.memory_space<vmem>>, vector<1x16x4xf32>
    %20 = vector.shape_cast %19 : vector<1x16x4xf32> to vector<16x4xf32>
    %cst_21 = arith.constant dense<0.000000e+00> : vector<16x1088xf32>
    %21 = tpu.matmul %20, %18, %cst_21 {dimension_numbers = #tpu.dot_dimension_numbers<[1], [0], [0], [1], [0, 0, 1, 1], [], []>} : vector<16x4xf32>, vector<4x1088xf32>, vector<16x1088xf32> -> vector<16x1088xf32>
    %22 = arith.addf %16, %21 : vector<16x1088xf32>
    %c0_22 = arith.constant 0 : index
    %c0_23 = arith.constant 0 : index
    %c35 = arith.constant 35 : index
    %23 = vector.load %arg1[%c0_22, %c0_23, %c35] : memref<1x4x1280xf32, #tpu.memory_space<vmem>>, vector<1x4x1088xf32>
    %24 = vector.shape_cast %23 : vector<1x4x1088xf32> to vector<4x1088xf32>
    %c4 = arith.constant 4 : index
    %c0_24 = arith.constant 0 : index
    %c0_25 = arith.constant 0 : index
    %25 = vector.load %arg2[%c4, %c0_24, %c0_25] : memref<9x16x4xf32, #tpu.memory_space<vmem>>, vector<1x16x4xf32>
    %26 = vector.shape_cast %25 : vector<1x16x4xf32> to vector<16x4xf32>
    %cst_26 = arith.constant dense<0.000000e+00> : vector<16x1088xf32>
    %27 = tpu.matmul %26, %24, %cst_26 {dimension_numbers = #tpu.dot_dimension_numbers<[1], [0], [0], [1], [0, 0, 1, 1], [], []>} : vector<16x4xf32>, vector<4x1088xf32>, vector<16x1088xf32> -> vector<16x1088xf32>
    %28 = arith.addf %22, %27 : vector<16x1088xf32>
    %c0_27 = arith.constant 0 : index
    %c0_28 = arith.constant 0 : index
    %c36 = arith.constant 36 : index
    %29 = vector.load %arg1[%c0_27, %c0_28, %c36] : memref<1x4x1280xf32, #tpu.memory_space<vmem>>, vector<1x4x1088xf32>
    %30 = vector.shape_cast %29 : vector<1x4x1088xf32> to vector<4x1088xf32>
    %c5 = arith.constant 5 : index
    %c0_29 = arith.constant 0 : index
    %c0_30 = arith.constant 0 : index
    %31 = vector.load %arg2[%c5, %c0_29, %c0_30] : memref<9x16x4xf32, #tpu.memory_space<vmem>>, vector<1x16x4xf32>
    %32 = vector.shape_cast %31 : vector<1x16x4xf32> to vector<16x4xf32>
    %cst_31 = arith.constant dense<0.000000e+00> : vector<16x1088xf32>
    %33 = tpu.matmul %32, %30, %cst_31 {dimension_numbers = #tpu.dot_dimension_numbers<[1], [0], [0], [1], [0, 0, 1, 1], [], []>} : vector<16x4xf32>, vector<4x1088xf32>, vector<16x1088xf32> -> vector<16x1088xf32>
    %34 = arith.addf %28, %33 : vector<16x1088xf32>
    %c0_32 = arith.constant 0 : index
    %c0_33 = arith.constant 0 : index
    %c68 = arith.constant 68 : index
    %35 = vector.load %arg1[%c0_32, %c0_33, %c68] : memref<1x4x1280xf32, #tpu.memory_space<vmem>>, vector<1x4x1088xf32>
    %36 = vector.shape_cast %35 : vector<1x4x1088xf32> to vector<4x1088xf32>
    %c6 = arith.constant 6 : index
    %c0_34 = arith.constant 0 : index
    %c0_35 = arith.constant 0 : index
    %37 = vector.load %arg2[%c6, %c0_34, %c0_35] : memref<9x16x4xf32, #tpu.memory_space<vmem>>, vector<1x16x4xf32>
    %38 = vector.shape_cast %37 : vector<1x16x4xf32> to vector<16x4xf32>
    %cst_36 = arith.constant dense<0.000000e+00> : vector<16x1088xf32>
    %39 = tpu.matmul %38, %36, %cst_36 {dimension_numbers = #tpu.dot_dimension_numbers<[1], [0], [0], [1], [0, 0, 1, 1], [], []>} : vector<16x4xf32>, vector<4x1088xf32>, vector<16x1088xf32> -> vector<16x1088xf32>
    %40 = arith.addf %34, %39 : vector<16x1088xf32>
    %c0_37 = arith.constant 0 : index
    %c0_38 = arith.constant 0 : index
    %c69 = arith.constant 69 : index
    %41 = vector.load %arg1[%c0_37, %c0_38, %c69] : memref<1x4x1280xf32, #tpu.memory_space<vmem>>, vector<1x4x1088xf32>
    %42 = vector.shape_cast %41 : vector<1x4x1088xf32> to vector<4x1088xf32>
    %c7 = arith.constant 7 : index
    %c0_39 = arith.constant 0 : index
    %c0_40 = arith.constant 0 : index
    %43 = vector.load %arg2[%c7, %c0_39, %c0_40] : memref<9x16x4xf32, #tpu.memory_space<vmem>>, vector<1x16x4xf32>
    %44 = vector.shape_cast %43 : vector<1x16x4xf32> to vector<16x4xf32>
    %cst_41 = arith.constant dense<0.000000e+00> : vector<16x1088xf32>
    %45 = tpu.matmul %44, %42, %cst_41 {dimension_numbers = #tpu.dot_dimension_numbers<[1], [0], [0], [1], [0, 0, 1, 1], [], []>} : vector<16x4xf32>, vector<4x1088xf32>, vector<16x1088xf32> -> vector<16x1088xf32>
    %46 = arith.addf %40, %45 : vector<16x1088xf32>
    %c0_42 = arith.constant 0 : index
    %c0_43 = arith.constant 0 : index
    %c70 = arith.constant 70 : index
    %47 = vector.load %arg1[%c0_42, %c0_43, %c70] : memref<1x4x1280xf32, #tpu.memory_space<vmem>>, vector<1x4x1088xf32>
    %48 = vector.shape_cast %47 : vector<1x4x1088xf32> to vector<4x1088xf32>
    %c8 = arith.constant 8 : index
    %c0_44 = arith.constant 0 : index
    %c0_45 = arith.constant 0 : index
    %49 = vector.load %arg2[%c8, %c0_44, %c0_45] : memref<9x16x4xf32, #tpu.memory_space<vmem>>, vector<1x16x4xf32>
    %50 = vector.shape_cast %49 : vector<1x16x4xf32> to vector<16x4xf32>
    %cst_46 = arith.constant dense<0.000000e+00> : vector<16x1088xf32>
    %51 = tpu.matmul %50, %48, %cst_46 {dimension_numbers = #tpu.dot_dimension_numbers<[1], [0], [0], [1], [0, 0, 1, 1], [], []>} : vector<16x4xf32>, vector<4x1088xf32>, vector<16x1088xf32> -> vector<16x1088xf32>
    %52 = arith.addf %46, %51 : vector<16x1088xf32>
    %c0_47 = arith.constant 0 : index
    %c0_48 = arith.constant 0 : index
    %53 = vector.load %arg3[%c0_47, %c0_48] : memref<16x1xf32, #tpu.memory_space<vmem>>, vector<16x1xf32>
    %54 = vector.broadcast %53 : vector<16x1xf32> to vector<16x1088xf32>
    %55 = arith.addf %52, %54 : vector<16x1088xf32>
    %56 = vector.extract_strided_slice %55 {offsets = [0, 0], sizes = [8, 1088], strides = [1, 1]} : vector<16x1088xf32> to vector<8x1088xf32>
    %57 = vector.extract_strided_slice %55 {offsets = [8, 0], sizes = [8, 1088], strides = [1, 1]} : vector<16x1088xf32> to vector<8x1088xf32>
    %cst_49 = arith.constant 0.000000e+00 : f32
    %58 = vector.broadcast %cst_49 : f32 to vector<8x1088xf32>
    %59 = arith.cmpf ogt, %56, %58 : vector<8x1088xf32>
    %cst_50 = arith.constant 2.000000e-01 : f32
    %60 = vector.broadcast %cst_50 : f32 to vector<8x1088xf32>
    %61 = arith.mulf %60, %56 : vector<8x1088xf32>
    %62 = arith.select %59, %56, %61 : vector<8x1088xi1>, vector<8x1088xf32>
    %cst_51 = arith.constant 0.000000e+00 : f32
    %63 = vector.broadcast %cst_51 : f32 to vector<8x1088xf32>
    %64 = arith.subf %63, %57 : vector<8x1088xf32>
    %65 = math.exp %64 : vector<8x1088xf32>
    %cst_52 = arith.constant 1.000000e+00 : f32
    %66 = vector.broadcast %cst_52 : f32 to vector<8x1088xf32>
    %67 = arith.addf %66, %65 : vector<8x1088xf32>
    %cst_53 = arith.constant 1.000000e+00 : f32
    %68 = vector.broadcast %cst_53 : f32 to vector<8x1088xf32>
    %69 = arith.divf %68, %67 : vector<8x1088xf32>
    %70 = arith.mulf %62, %69 : vector<8x1088xf32>
    %c0_54 = arith.constant 0 : index
    %c0_55 = arith.constant 0 : index
    %c0_56 = arith.constant 0 : index
    %71 = vector.load %arg5[%c0_54, %c0_55, %c0_56] : memref<1x8x1088xf32, #tpu.memory_space<vmem>>, vector<1x8x1088xf32>
    %72 = vector.shape_cast %71 : vector<1x8x1088xf32> to vector<8x1088xf32>
    %73 = vector.shape_cast %70 : vector<8x1088xf32> to vector<1x8x1088xf32>
    tpu.vector_store %arg5[%c0_54, %c0_55, %c0_56], %73 {strides = array<i32>} : memref<1x8x1088xf32, #tpu.memory_space<vmem>>, vector<1x8x1088xf32>,
    %c0_57 = arith.constant 0 : index
    %c0_58 = arith.constant 0 : index
    %74 = vector.load %arg4[%c0_57, %c0_58] : memref<1x1088xf32, #tpu.memory_space<vmem>>, vector<1x1088xf32>
    %75 = vector.broadcast %74 : vector<1x1088xf32> to vector<8x1088xf32>
    %76 = arith.mulf %70, %75 : vector<8x1088xf32>
    %cst_59 = arith.constant dense<0.000000e+00> : vector<8xf32>
    %77 = vector.multi_reduction <add>, %76, %cst_59 [1] : vector<8x1088xf32> to vector<8xf32>
    %78 = vector.shape_cast %77 : vector<8xf32> to vector<8x1xf32>
    %c0_60 = arith.constant 0 : index
    %c0_61 = arith.constant 0 : index
    %c0_62 = arith.constant 0 : index
    %79 = vector.load %arg6[%c0_60, %c0_61, %c0_62] : memref<1x8x2xf32, #tpu.memory_space<vmem>>, vector<1x8x1xf32>
    %80 = vector.shape_cast %79 : vector<1x8x1xf32> to vector<8x1xf32>
    %81 = vector.shape_cast %78 : vector<8x1xf32> to vector<1x8x1xf32>
    tpu.vector_store %arg6[%c0_60, %c0_61, %c0_62], %81 {strides = array<i32>} : memref<1x8x2xf32, #tpu.memory_space<vmem>>, vector<1x8x1xf32>,
    %82 = arith.mulf %76, %76 : vector<8x1088xf32>
    %cst_63 = arith.constant dense<0.000000e+00> : vector<8xf32>
    %83 = vector.multi_reduction <add>, %82, %cst_63 [1] : vector<8x1088xf32> to vector<8xf32>
    %84 = vector.shape_cast %83 : vector<8xf32> to vector<8x1xf32>
    %c0_64 = arith.constant 0 : index
    %c0_65 = arith.constant 0 : index
    %c1_66 = arith.constant 1 : index
    %85 = vector.load %arg6[%c0_64, %c0_65, %c1_66] : memref<1x8x2xf32, #tpu.memory_space<vmem>>, vector<1x8x1xf32>
    %86 = vector.shape_cast %85 : vector<1x8x1xf32> to vector<8x1xf32>
    %87 = vector.shape_cast %84 : vector<8x1xf32> to vector<1x8x1xf32>
    tpu.vector_store %arg6[%c0_64, %c0_65, %c1_66], %87 {strides = array<i32>} : memref<1x8x2xf32, #tpu.memory_space<vmem>>, vector<1x8x1xf32>,
    return
  }
  func.func @transform_0(%arg0: i32) -> (i32, i32, i32) {
    %c0_i32 = arith.constant 0 : i32
    %c0_i32_0 = arith.constant 0 : i32
    %c0_i32_1 = arith.constant 0 : i32
    return %arg0, %c0_i32, %c0_i32_0 : i32, i32, i32
  }
  func.func @transform_1(%arg0: i32) -> (i32, i32, i32) {
    %c0_i32 = arith.constant 0 : i32
    %c0_i32_0 = arith.constant 0 : i32
    %c0_i32_1 = arith.constant 0 : i32
    %c0_i32_2 = arith.constant 0 : i32
    return %c0_i32, %c0_i32_0, %c0_i32_1 : i32, i32, i32
  }
  func.func @transform_2(%arg0: i32) -> (i32, i32) {
    %c0_i32 = arith.constant 0 : i32
    %c0_i32_0 = arith.constant 0 : i32
    %c0_i32_1 = arith.constant 0 : i32
    return %c0_i32, %c0_i32_0 : i32, i32
  }
  func.func @transform_3(%arg0: i32) -> (i32, i32) {
    %c0_i32 = arith.constant 0 : i32
    %c0_i32_0 = arith.constant 0 : i32
    %c0_i32_1 = arith.constant 0 : i32
    return %c0_i32, %c0_i32_0 : i32, i32
  }
  func.func @transform_4(%arg0: i32) -> (i32, i32, i32) {
    %c0_i32 = arith.constant 0 : i32
    %c0_i32_0 = arith.constant 0 : i32
    %c0_i32_1 = arith.constant 0 : i32
    return %arg0, %c0_i32, %c0_i32_0 : i32, i32, i32
  }
  func.func @transform_5(%arg0: i32) -> (i32, i32, i32) {
    %c0_i32 = arith.constant 0 : i32
    %c0_i32_0 = arith.constant 0 : i32
    %c0_i32_1 = arith.constant 0 : i32
    return %arg0, %c0_i32, %c0_i32_0 : i32, i32, i32
  }
}

</mosaic_0001>

<llo_original>
// kernel: tpu_custom_call.1
$region0: #{tpu_custom_call.1}
  #allocation0 [shape = 'u32[]', space=smem, size = 0x4, offset = 0x4, fixed_abs, tag = 'smem constant byte address 0x4 - core index']
  #allocation1 [shape = 'u32[144,128]{1,0:T(1,128)}', space=vmem, size = 0x12000, scoped, tag = 'internal scratch']
  %s0 = inlined_call_operand.vmem [shape: f32[2,4,1280], index: 0, kind: input, shape index: {}]
  %s1 = inlined_call_operand.vmem [shape: f32[9,16,4], index: 1, kind: input, shape index: {}]
  %s2 = inlined_call_operand.vmem [shape: f32[16,1], index: 2, kind: input, shape index: {}]
  %s3 = inlined_call_operand.vmem [shape: f32[1,1088], index: 3, kind: input, shape index: {}]
  %s4 = inlined_call_operand.hbm [shape: f32[2,8,1088], index: 4, kind: output, shape index: {0}]
  %s5 = inlined_call_operand.vmem [shape: f32[2,8,2], index: 5, kind: output, shape index: {1}]
  %6 = xla_tuple %s4, %s5
  %s7 = sld [smem:[#allocation0]]
  $region57: #{tpu_custom_call.1} parent=0
    _
  %s9 = ssub.s32 1, %s7
  %s10 = scalar_select 0, %s9, %s7
  $region1: #{tpu_custom_call.1} parent=0
    #allocation2 [shape = 'u8[73728]{0}', space=vmem, size = 0x12000, scoped, tag = 'output window, operand 0']
    #allocation3 [shape = 's32[2]{0}', space=sflag, size = 0x8, scoped, tag = 'scoped memory for tpu_custom_call.1']
    %11 = vsyncpa [#allocation3], 0
    %s12 = scalar_lea.sflag [#allocation3], 1
    %13 = vsyncpa %s12, 0
    loop: start=0, step=1, limit=4
    $region2: #{tpu_custom_call.1} parent=1 // loop_pre_header
      _
    $region3: #{tpu_custom_call.1} parent=1 // loop_header
      %s15 = sphi 0, %s19
      %p16 = scmp.ge.s32.totalorder %s15, 4
      %s25 = sphi 0, %s27
      %s28 = sphi 0, %s25
      %s29 = sphi 0, %s28
      %s45 = sphi 0, %s29
      %s49 = sphi 0, %s49
      %s51 = sphi 0, %s49
      %s52 = sphi 0, %s51
      %s66 = sphi 0, %s52
      %s70 = sphi 0, %s70
      %s72 = sphi 0, %s70
      %s73 = sphi 0, %s72
      %s87 = sphi 0, %s73
      %s91 = sphi 0, %s91
      %s93 = sphi 0, %s91
      %s94 = sphi 0, %s93
      %s108 = sphi 0, %s94
      %s114 = sphi 0, %s116
      %s117 = sphi 0, %s114
      %s118 = sphi 0, %s117
      %s134 = sphi 0, %s118
      %s140 = sphi 0, %s142
      %s143 = sphi 0, %s140
      %s144 = sphi 0, %s143
      %s160 = sphi 0, %s144
    $region4: #{tpu_custom_call.1} parent=1 // loop_header_branch
      %18 = sbr.rel (%p16) target = $region8
    $region5: #{tpu_custom_call.1} parent=1 // loop_body
      %s20 = ssub.s32 %s15, 1
      %s21 = ssub.s32 %s15, 2
      %s22 = sadd.s32 %s15, 1
      %s23 = ssub.s32 %s15, %s22
      %p24 = scmp.eq.s32.totalorder %s23, 0
      %s26 = sadd.s32 %s25, 1
      %s27 = scalar_select %p24, %s25, %s26
      %p30 = pneg %p24
      %p31 = scmp.eq.s32.totalorder %s15, 1
      %p32 = por %p30, %p31
      %p33 = scmp.ne.s32.totalorder %s25, %s28
      %p34 = scmp.eq.s32.totalorder %s15, 0
      %p35 = por %p33, %p34
      %p36 = scmp.ne.s32.totalorder %s25, %s28
      %p37 = scmp.eq.s32.totalorder %s20, 1
      %p38 = por %p36, %p37
      %p39 = scmp.ne.s32.totalorder %s28, %s29
      %p40 = scmp.eq.s32.totalorder %s20, 0
      %p41 = por %p39, %p40
      %p42 = scmp.ne.s32.totalorder %s28, %s29
      %p43 = scmp.eq.s32.totalorder %s21, 1
      %p44 = por %p42, %p43
      %p46 = scmp.ne.s32.totalorder %s29, %s45
      %p47 = scmp.eq.s32.totalorder %s21, 0
      %p48 = por %p46, %p47
      %s50 = sadd.s32 %s49, 1
      %p53 = scmp.eq.s32.totalorder %s15, 1
      %p54 = scmp.ne.s32.totalorder %s49, %s51
      %p55 = scmp.eq.s32.totalorder %s15, 0
      %p56 = por %p54, %p55
      %p57 = scmp.ne.s32.totalorder %s49, %s51
      %p58 = scmp.eq.s32.totalorder %s20, 1
      %p59 = por %p57, %p58
      %p60 = scmp.ne.s32.totalorder %s51, %s52
      %p61 = scmp.eq.s32.totalorder %s20, 0
      %p62 = por %p60, %p61
      %p63 = scmp.ne.s32.totalorder %s51, %s52
      %p64 = scmp.eq.s32.totalorder %s21, 1
      %p65 = por %p63, %p64
      %p67 = scmp.ne.s32.totalorder %s52, %s66
      %p68 = scmp.eq.s32.totalorder %s21, 0
      %p69 = por %p67, %p68
      %s71 = sadd.s32 %s70, 1
      %p74 = scmp.eq.s32.totalorder %s15, 1
      %p75 = scmp.ne.s32.totalorder %s70, %s72
      %p76 = scmp.eq.s32.totalorder %s15, 0
      %p77 = por %p75, %p76
      %p78 = scmp.ne.s32.totalorder %s70, %s72
      %p79 = scmp.eq.s32.totalorder %s20, 1
      %p80 = por %p78, %p79
      %p81 = scmp.ne.s32.totalorder %s72, %s73
      %p82 = scmp.eq.s32.totalorder %s20, 0
      %p83 = por %p81, %p82
      %p84 = scmp.ne.s32.totalorder %s72, %s73
      %p85 = scmp.eq.s32.totalorder %s21, 1
      %p86 = por %p84, %p85
      %p88 = scmp.ne.s32.totalorder %s73, %s87
      %p89 = scmp.eq.s32.totalorder %s21, 0
      %p90 = por %p88, %p89
      %s92 = sadd.s32 %s91, 1
      %p95 = scmp.eq.s32.totalorder %s15, 1
      %p96 = scmp.ne.s32.totalorder %s91, %s93
      %p97 = scmp.eq.s32.totalorder %s15, 0
      %p98 = por %p96, %p97
      %p99 = scmp.ne.s32.totalorder %s91, %s93
      %p100 = scmp.eq.s32.totalorder %s20, 1
      %p101 = por %p99, %p100
      %p102 = scmp.ne.s32.totalorder %s93, %s94
      %p103 = scmp.eq.s32.totalorder %s20, 0
      %p104 = por %p102, %p103
      %p105 = scmp.ne.s32.totalorder %s93, %s94
      %p106 = scmp.eq.s32.totalorder %s21, 1
      %p107 = por %p105, %p106
      %p109 = scmp.ne.s32.totalorder %s94, %s108
      %p110 = scmp.eq.s32.totalorder %s21, 0
      %p111 = por %p109, %p110
      %s112 = ssub.s32 %s15, %s22
      %p113 = scmp.eq.s32.totalorder %s112, 0
      %s115 = sadd.s32 %s114, 1
      %s116 = scalar_select %p113, %s114, %s115
      %p119 = pneg %p113
      %p120 = scmp.eq.s32.totalorder %s15, 1
      %p121 = por %p119, %p120
      %p122 = scmp.ne.s32.totalorder %s114, %s117
      %p123 = scmp.eq.s32.totalorder %s15, 0
      %p124 = por %p122, %p123
      %p125 = scmp.ne.s32.totalorder %s114, %s117
      %p126 = scmp.eq.s32.totalorder %s20, 1
      %p127 = por %p125, %p126
      %p128 = scmp.ne.s32.totalorder %s117, %s118
      %p129 = scmp.eq.s32.totalorder %s20, 0
      %p130 = por %p128, %p129
      %p131 = scmp.ne.s32.totalorder %s117, %s118
      %p132 = scmp.eq.s32.totalorder %s21, 1
      %p133 = por %p131, %p132
      %p135 = scmp.ne.s32.totalorder %s118, %s134
      %p136 = scmp.eq.s32.totalorder %s21, 0
      %p137 = por %p135, %p136
      %s138 = ssub.s32 %s15, %s22
      %p139 = scmp.eq.s32.totalorder %s138, 0
      %s141 = sadd.s32 %s140, 1
      %s142 = scalar_select %p139, %s140, %s141
      %p145 = pneg %p139
      %p146 = scmp.eq.s32.totalorder %s15, 1
      %p147 = por %p145, %p146
      %p148 = scmp.ne.s32.totalorder %s140, %s143
      %p149 = scmp.eq.s32.totalorder %s15, 0
      %p150 = por %p148, %p149
      %p151 = scmp.ne.s32.totalorder %s140, %s143
      %p152 = scmp.eq.s32.totalorder %s20, 1
      %p153 = por %p151, %p152
      %p154 = scmp.ne.s32.totalorder %s143, %s144
      %p155 = scmp.eq.s32.totalorder %s20, 0
      %p156 = por %p154, %p155
      %p157 = scmp.ne.s32.totalorder %s143, %s144
      %p158 = scmp.eq.s32.totalorder %s21, 1
      %p159 = por %p157, %p158
      %p161 = scmp.ne.s32.totalorder %s144, %s160
      %p162 = scmp.eq.s32.totalorder %s21, 0
      %p163 = por %p161, %p162
      %p164 = scmp.le.s32.totalorder 1, %s15
      %p165 = scmp.lt.s32.totalorder %s15, 3
      %p166 = pnand %p164, %p165
      %p167 = pneg %p166
      // Predicated region
      $region9: #{tpu_custom_call.1} parent=5 // pred_check
        _
      $region10: #{tpu_custom_call.1} parent=5 // pred_check_branch
        %169 = sbr.rel (%p166) target = $region12
      $region11: #{tpu_custom_call.1} parent=5 // pred_region
        %s170 = ssub.s32 %s15, 1
        // Predicated region
        $region13: #{tpu_custom_call.1} parent=11 // pred_check
          %p171 = pneg %p62
        $region14: #{tpu_custom_call.1} parent=11 // pred_check_branch
          %173 = sbr.rel (%p171) target = $region16
        $region15: #{tpu_custom_call.1} parent=11 // pred_region
          _
        $region16: #{tpu_custom_call.1} parent=11 // pred_fallthru
          _
        // Predicated region
        $region17: #{tpu_custom_call.1} parent=11 // pred_check
          %p174 = pneg %p83
        $region18: #{tpu_custom_call.1} parent=11 // pred_check_branch
          %176 = sbr.rel (%p174) target = $region20
        $region19: #{tpu_custom_call.1} parent=11 // pred_region
          _
        $region20: #{tpu_custom_call.1} parent=11 // pred_fallthru
          _
        // Predicated region
        $region21: #{tpu_custom_call.1} parent=11 // pred_check
          %p177 = pneg %p104
        $region22: #{tpu_custom_call.1} parent=11 // pred_check_branch
          %179 = sbr.rel (%p177) target = $region24
        $region23: #{tpu_custom_call.1} parent=11 // pred_region
          _
        $region24: #{tpu_custom_call.1} parent=11 // pred_fallthru
          _
      $region12: #{tpu_custom_call.1} parent=5 // pred_fallthru
        _
      %p180 = scmp.lt.s32.totalorder %s15, 2
      // Predicated region
      $region25: #{tpu_custom_call.1} parent=5 // pred_check
        %p181 = pneg %p180
      $region26: #{tpu_custom_call.1} parent=5 // pred_check_branch
        %183 = sbr.rel (%p181) target = $region28
      $region27: #{tpu_custom_call.1} parent=5 // pred_region
        // Predicated region
        $region29: #{tpu_custom_call.1} parent=27 // pred_check
          %p184 = pneg %p35
        $region30: #{tpu_custom_call.1} parent=27 // pred_check_branch
          %186 = sbr.rel (%p184) target = $region32
        $region31: #{tpu_custom_call.1} parent=27 // pred_region
          %p187 = scmp.lt.s32.totalorder %s15, 1
          %s188 = scalar_select %p187, %s15, 1
          %s189 = smul.addr %s188, 10
          %s190 = smul.addr %s189, 4
          %s191 = scalar_lea.vmem %s0, %s190
        $region32: #{tpu_custom_call.1} parent=27 // pred_fallthru
          _
      $region28: #{tpu_custom_call.1} parent=5 // pred_fallthru
        _
      %p192 = scmp.le.s32.totalorder 1, %s15
      %p193 = scmp.lt.s32.totalorder %s15, 3
      %p194 = pnand %p192, %p193
      %p195 = pneg %p194
      // Predicated region
      $region33: #{tpu_custom_call.1} parent=5 // pred_check
        _
      $region34: #{tpu_custom_call.1} parent=5 // pred_check_branch
        %197 = sbr.rel (%p194) target = $region36
      $region35: #{tpu_custom_call.1} parent=5 // pred_region
        %s198 = ssub.s32 %s15, 1
        %p199 = scmp.lt.s32.totalorder %s20, 1
        %s200 = scalar_select %p199, %s20, 1
        %s201 = smul.addr %s200, 10
        %s202 = smul.addr %s201, 4
        %s203 = scalar_lea.vmem %s0, %s202
        %p204 = pneg %p41
        %p205 = pneg %p38
        %p206 = pneg %p62
        %p207 = pneg %p59
        %p208 = pneg %p83
        %p209 = pneg %p80
        %p210 = pneg %p104
        %p211 = pneg %p101
        %p212 = pneg %p130
        %p213 = pneg %p127
        %s214 = sand.u32 %s117, 1
        %s215 = scalar_lea.sflag [#allocation3], %s214
        %s216 = sand.u32 %s117, 1
        %s217 = smul.addr %s216, 72
        %s218 = scalar_lea.vmem [#allocation2], %s217
        %p219 = pneg %p156
        %p220 = pneg %p153
        %p221 = scmp.lt.s32.totalorder %s20, 1
        %s222 = scalar_select %p221, %s20, 1
        %s223 = smul.addr %s222, 8
        %s224 = scalar_lea.vmem %s5, %s223
        %p225 = scmp.lt.s32.totalorder %s20, 1
        %s226 = scalar_select %p225, %s20, 1
        %s227 = smul.addr %s226, 10
        %s228 = smul.addr %s227, 4
        %s229 = scalar_lea.vmem %s0, %s228
        %p230 = scmp.lt.s32.totalorder %s20, 1
        %s231 = scalar_select %p230, %s20, 1
        %s232 = smul.addr %s231, 8
        %s233 = scalar_lea.vmem %s5, %s232
        %v234 = vld [vmem:[%s229] sm:$0xff]
        %v235 = vld [vmem:[%s229 + $0x8] sm:$0xff]
        %v236 = vld [vmem:[%s229 + $0x10] sm:$0xff]
        %v237 = vld [vmem:[%s229 + $0x18] sm:$0xff]
        %v238 = vld [vmem:[%s229 + $0x20] sm:$0xf]
        %v239 = vld [vmem:[%s1] sm:$0xff]
        %v240 = vld [vmem:[%s1 + $0x8] sm:$0xff]
        %s241 = scalar_lea.vmem %s1, 16
        %v242 = vld [vmem:[%s241] sm:$0xff]
        %v243 = vld [vmem:[%s241 + $0x8] sm:$0xff]
        %v249 = vcombine.high %v234, %v234
        %v250 = vcombine.high %v235, %v235
        %v251 = vcombine.high %v236, %v236
        %v252 = vcombine.high %v237, %v237
        %253 = vrot.lane.b32.xlu0 %v234, 127
        %v254 = vpop.permute.xlu0 %253
        %255 = vrot.lane.b32.xlu0 %v249, 127
        %v256 = vpop.permute.xlu0 %255
        %257 = vrot.lane.b32.xlu0 %v235, 127
        %v258 = vpop.permute.xlu0 %257
        %259 = vrot.lane.b32.xlu0 %v250, 127
        %v260 = vpop.permute.xlu0 %259
        %261 = vrot.lane.b32.xlu0 %v236, 127
        %v262 = vpop.permute.xlu0 %261
        %263 = vrot.lane.b32.xlu0 %v251, 127
        %v264 = vpop.permute.xlu0 %263
        %265 = vrot.lane.b32.xlu0 %v237, 127
        %v266 = vpop.permute.xlu0 %265
        %267 = vrot.lane.b32.xlu0 %v252, 127
        %v268 = vpop.permute.xlu0 %267
        %269 = vrot.lane.b32.xlu0 %v238, 127
        %v270 = vpop.permute.xlu0 %269
        %vm271 = vcmask 1039360
        %v272 = vsel %vm271, %v254, %v256
        %v273 = vsel %vm271, %v256, %v258
        %v274 = vsel %vm271, %v258, %v260
        %v275 = vsel %vm271, %v260, %v262
        %v276 = vsel %vm271, %v262, %v264
        %v277 = vsel %vm271, %v264, %v266
        %v278 = vsel %vm271, %v266, %v268
        %v279 = vsel %vm271, %v268, %v270
        %vm280 = vcmask 31744
        %v282 = vsel %vm280, %v242, 0
        %v285 = vsel %vm280, %v243, 0
        %vm287 = vcmask 1043456
        %v288 = vsel %vm287, %v272, 0
        %v290 = vsel %vm287, %v273, 0
        %v292 = vsel %vm287, %v274, 0
        %v294 = vsel %vm287, %v275, 0
        %v296 = vsel %vm287, %v276, 0
        %v298 = vsel %vm287, %v277, 0
        %v300 = vsel %vm287, %v278, 0
        %v302 = vsel %vm287, %v279, 0
        %v304 = vsel %vm287, %v270, 0
        %306 = vmatprep.subr.mxu0 %v290
        %307 = vmatpush1.msra.mxu0 %v288
        %308 = vmatprep.subr.mxu0 0.0
        %309 = vmatpush1.msra.mxu0 0.0
        %310 = vmatprep.subr.mxu0 0.0
        %311 = vmatpush1.msra.mxu0 0.0
        %312 = vmatprep.subr.mxu0 0.0
        %313 = vmatpush1.msra.mxu0 0.0
        %314 = vmatprep.subr.mxu0 0.0
        %315 = vmatpush1.msra.mxu0 0.0
        %316 = vmatprep.subr.mxu0 0.0
        %317 = vmatpush1.msra.mxu0 0.0
        %318 = vmatprep.subr.mxu0 0.0
        %319 = vmatpush1.msra.mxu0 0.0
        %320 = vmatprep.subr.mxu0 0.0
        %321 = vmatpush1.msra.mxu0 0.0
        %322 = vmatprep.subr.mxu0 0.0
        %323 = vmatpush1.msra.mxu0 0.0
        %324 = vmatprep.subr.mxu0 0.0
        %325 = vmatpush1.msra.mxu0 0.0
        %326 = vmatprep.subr.mxu0 0.0
        %327 = vmatpush1.msra.mxu0 0.0
        %328 = vmatprep.subr.mxu0 0.0
        %329 = vmatpush1.msra.mxu0 0.0
        %330 = vmatprep.subr.mxu0 0.0
        %331 = vmatpush1.msra.mxu0 0.0
        %332 = vmatprep.subr.mxu0 0.0
        %333 = vmatpush1.msra.mxu0 0.0
        %334 = vmatprep.subr.mxu0 0.0
        %335 = vmatpush1.msra.mxu0 0.0
        %336 = vmatprep.subr.mxu0 0.0
        %337 = vmatpush1.msra.mxu0 0.0
        %338 = vmatprep.subr.mxu0 0.0
        %339 = vmatpush1.msra.mxu0 0.0
        %340 = vmatprep.subr.mxu0 0.0
        %341 = vmatpush1.msra.mxu0 0.0
        %342 = vmatprep.subr.mxu0 0.0
        %343 = vmatpush1.msra.mxu0 0.0
        %344 = vmatprep.subr.mxu0 0.0
        %345 = vmatpush1.msra.mxu0 0.0
        %346 = vmatprep.subr.mxu0 0.0
        %347 = vmatpush1.msra.mxu0 0.0
        %348 = vmatprep.subr.mxu0 0.0
        %349 = vmatpush1.msra.mxu0 0.0
        %350 = vmatprep.subr.mxu0 0.0
        %351 = vmatpush1.msra.mxu0 0.0
        %352 = vmatprep.subr.mxu0 0.0
        %353 = vmatpush1.msra.mxu0 0.0
        %354 = vmatprep.subr.mxu0 0.0
        %355 = vmatpush1.msra.mxu0 0.0
        %356 = vmatprep.subr.mxu0 0.0
        %357 = vmatpush1.msra.mxu0 0.0
        %358 = vmatprep.subr.mxu0 0.0
        %359 = vmatpush1.msra.mxu0 0.0
        %360 = vmatprep.subr.mxu0 0.0
        %361 = vmatpush1.msra.mxu0 0.0
        %362 = vmatprep.subr.mxu0 0.0
        %363 = vmatpush1.msra.mxu0 0.0
        %364 = vmatprep.subr.mxu0 0.0
        %365 = vmatpush1.msra.mxu0 0.0
        %366 = vmatprep.subr.mxu0 0.0
        %367 = vmatpush1.msra.mxu0 0.0
        %368 = vmatprep.subr.mxu0 0.0
        %369 = vmatpush1.msra.mxu0 0.0
        %370 = vmatprep.mubr.f32.mxu0 0.0
        %371 = vmatmul.mubr.f32.gmra.mrb[0].mxu0 %v282
        %v372 = vpop.f32.mrb[0].mxu0
        %v373 = vadd.f32 0.0, %v372
        %v374 = vpop.f32.mrb[0].mxu0
        %v375 = vadd.f32 0.0, %v374
        %376 = vmatprep.mubr.f32.mxu0 0.0
        %377 = vmatmul.mubr.f32.gmra.mrb[0].mxu0 %v285
        %v378 = vpop.f32.mrb[0].mxu0
        %v379 = vadd.f32 0.0, %v378
        %v380 = vpop.f32.mrb[0].mxu0
        %v381 = vadd.f32 0.0, %v380
        %382 = vdwg.mxu0
        %383 = vmatprep.subr.mxu0 %v294
        %384 = vmatpush1.msra.mxu0 %v292
        %385 = vmatprep.subr.mxu0 0.0
        %386 = vmatpush1.msra.mxu0 0.0
        %387 = vmatprep.subr.mxu0 0.0
        %388 = vmatpush1.msra.mxu0 0.0
        %389 = vmatprep.subr.mxu0 0.0
        %390 = vmatpush1.msra.mxu0 0.0
        %391 = vmatprep.subr.mxu0 0.0
        %392 = vmatpush1.msra.mxu0 0.0
        %393 = vmatprep.subr.mxu0 0.0
        %394 = vmatpush1.msra.mxu0 0.0
        %395 = vmatprep.subr.mxu0 0.0
        %396 = vmatpush1.msra.mxu0 0.0
        %397 = vmatprep.subr.mxu0 0.0
        %398 = vmatpush1.msra.mxu0 0.0
        %399 = vmatprep.subr.mxu0 0.0
        %400 = vmatpush1.msra.mxu0 0.0
        %401 = vmatprep.subr.mxu0 0.0
        %402 = vmatpush1.msra.mxu0 0.0
        %403 = vmatprep.subr.mxu0 0.0
        %404 = vmatpush1.msra.mxu0 0.0
        %405 = vmatprep.subr.mxu0 0.0
        %406 = vmatpush1.msra.mxu0 0.0
        %407 = vmatprep.subr.mxu0 0.0
        %408 = vmatpush1.msra.mxu0 0.0
        %409 = vmatprep.subr.mxu0 0.0
        %410 = vmatpush1.msra.mxu0 0.0
        %411 = vmatprep.subr.mxu0 0.0
        %412 = vmatpush1.msra.mxu0 0.0
        %413 = vmatprep.subr.mxu0 0.0
        %414 = vmatpush1.msra.mxu0 0.0
        %415 = vmatprep.subr.mxu0 0.0
        %416 = vmatpush1.msra.mxu0 0.0
        %417 = vmatprep.subr.mxu0 0.0
        %418 = vmatpush1.msra.mxu0 0.0
        %419 = vmatprep.subr.mxu0 0.0
        %420 = vmatpush1.msra.mxu0 0.0
        %421 = vmatprep.subr.mxu0 0.0
        %422 = vmatpush1.msra.mxu0 0.0
        %423 = vmatprep.subr.mxu0 0.0
        %424 = vmatpush1.msra.mxu0 0.0
        %425 = vmatprep.subr.mxu0 0.0
        %426 = vmatpush1.msra.mxu0 0.0
        %427 = vmatprep.subr.mxu0 0.0
        %428 = vmatpush1.msra.mxu0 0.0
        %429 = vmatprep.subr.mxu0 0.0
        %430 = vmatpush1.msra.mxu0 0.0
        %431 = vmatprep.subr.mxu0 0.0
        %432 = vmatpush1.msra.mxu0 0.0
        %433 = vmatprep.subr.mxu0 0.0
        %434 = vmatpush1.msra.mxu0 0.0
        %435 = vmatprep.subr.mxu0 0.0
        %436 = vmatpush1.msra.mxu0 0.0
        %437 = vmatprep.subr.mxu0 0.0
        %438 = vmatpush1.msra.mxu0 0.0
        %439 = vmatprep.subr.mxu0 0.0
        %440 = vmatpush1.msra.mxu0 0.0
        %441 = vmatprep.subr.mxu0 0.0
        %442 = vmatpush1.msra.mxu0 0.0
        %443 = vmatprep.subr.mxu0 0.0
        %444 = vmatpush1.msra.mxu0 0.0
        %445 = vmatprep.subr.mxu0 0.0
        %446 = vmatpush1.msra.mxu0 0.0
        %447 = vmatprep.mubr.f32.mxu0 0.0
        %448 = vmatmul.mubr.f32.gmra.mrb[0].mxu0 %v282
        %v449 = vpop.f32.mrb[0].mxu0
        %v450 = vadd.f32 0.0, %v449
        %v451 = vpop.f32.mrb[0].mxu0
        %v452 = vadd.f32 0.0, %v451
        %453 = vmatprep.mubr.f32.mxu0 0.0
        %454 = vmatmul.mubr.f32.gmra.mrb[0].mxu0 %v285
        %v455 = vpop.f32.mrb[0].mxu0
        %v456 = vadd.f32 0.0, %v455
        %v457 = vpop.f32.mrb[0].mxu0
        %v458 = vadd.f32 0.0, %v457
        %459 = vdwg.mxu0
        %460 = vmatprep.subr.mxu0 %v298
        %461 = vmatpush1.msra.mxu0 %v296
        %462 = vmatprep.subr.mxu0 0.0
        %463 = vmatpush1.msra.mxu0 0.0
        %464 = vmatprep.subr.mxu0 0.0
        %465 = vmatpush1.msra.mxu0 0.0
        %466 = vmatprep.subr.mxu0 0.0
        %467 = vmatpush1.msra.mxu0 0.0
        %468 = vmatprep.subr.mxu0 0.0
        %469 = vmatpush1.msra.mxu0 0.0
        %470 = vmatprep.subr.mxu0 0.0
        %471 = vmatpush1.msra.mxu0 0.0
        %472 = vmatprep.subr.mxu0 0.0
        %473 = vmatpush1.msra.mxu0 0.0
        %474 = vmatprep.subr.mxu0 0.0
        %475 = vmatpush1.msra.mxu0 0.0
        %476 = vmatprep.subr.mxu0 0.0
        %477 = vmatpush1.msra.mxu0 0.0
        %478 = vmatprep.subr.mxu0 0.0
        %479 = vmatpush1.msra.mxu0 0.0
        %480 = vmatprep.subr.mxu0 0.0
        %481 = vmatpush1.msra.mxu0 0.0
        %482 = vmatprep.subr.mxu0 0.0
        %483 = vmatpush1.msra.mxu0 0.0
        %484 = vmatprep.subr.mxu0 0.0
        %485 = vmatpush1.msra.mxu0 0.0
        %486 = vmatprep.subr.mxu0 0.0
        %487 = vmatpush1.msra.mxu0 0.0
        %488 = vmatprep.subr.mxu0 0.0
        %489 = vmatpush1.msra.mxu0 0.0
        %490 = vmatprep.subr.mxu0 0.0
        %491 = vmatpush1.msra.mxu0 0.0
        %492 = vmatprep.subr.mxu0 0.0
        %493 = vmatpush1.msra.mxu0 0.0
        %494 = vmatprep.subr.mxu0 0.0
        %495 = vmatpush1.msra.mxu0 0.0
        %496 = vmatprep.subr.mxu0 0.0
        %497 = vmatpush1.msra.mxu0 0.0
        %498 = vmatprep.subr.mxu0 0.0
        %499 = vmatpush1.msra.mxu0 0.0
        %500 = vmatprep.subr.mxu0 0.0
        %501 = vmatpush1.msra.mxu0 0.0
        %502 = vmatprep.subr.mxu0 0.0
        %503 = vmatpush1.msra.mxu0 0.0
        %504 = vmatprep.subr.mxu0 0.0
        %505 = vmatpush1.msra.mxu0 0.0
        %506 = vmatprep.subr.mxu0 0.0
        %507 = vmatpush1.msra.mxu0 0.0
        %508 = vmatprep.subr.mxu0 0.0
        %509 = vmatpush1.msra.mxu0 0.0
        %510 = vmatprep.subr.mxu0 0.0
        %511 = vmatpush1.msra.mxu0 0.0
        %512 = vmatprep.subr.mxu0 0.0
        %513 = vmatpush1.msra.mxu0 0.0
        %514 = vmatprep.subr.mxu0 0.0
        %515 = vmatpush1.msra.mxu0 0.0
        %516 = vmatprep.subr.mxu0 0.0
        %517 = vmatpush1.msra.mxu0 0.0
        %518 = vmatprep.subr.mxu0 0.0
        %519 = vmatpush1.msra.mxu0 0.0
        %520 = vmatprep.subr.mxu0 0.0
        %521 = vmatpush1.msra.mxu0 0.0
        %522 = vmatprep.subr.mxu0 0.0
        %523 = vmatpush1.msra.mxu0 0.0
        %524 = vmatprep.mubr.f32.mxu0 0.0
        %525 = vmatmul.mubr.f32.gmra.mrb[0].mxu0 %v282
        %v526 = vpop.f32.mrb[0].mxu0
        %v527 = vadd.f32 0.0, %v526
        %v528 = vpop.f32.mrb[0].mxu0
        %v529 = vadd.f32 0.0, %v528
        %530 = vmatprep.mubr.f32.mxu0 0.0
        %531 = vmatmul.mubr.f32.gmra.mrb[0].mxu0 %v285
        %v532 = vpop.f32.mrb[0].mxu0
        %v533 = vadd.f32 0.0, %v532
        %v534 = vpop.f32.mrb[0].mxu0
        %v535 = vadd.f32 0.0, %v534
        %536 = vdwg.mxu0
        %537 = vmatprep.subr.mxu0 %v302
        %538 = vmatpush1.msra.mxu0 %v300
        %539 = vmatprep.subr.mxu0 0.0
        %540 = vmatpush1.msra.mxu0 0.0
        %541 = vmatprep.subr.mxu0 0.0
        %542 = vmatpush1.msra.mxu0 0.0
        %543 = vmatprep.subr.mxu0 0.0
        %544 = vmatpush1.msra.mxu0 0.0
        %545 = vmatprep.subr.mxu0 0.0
        %546 = vmatpush1.msra.mxu0 0.0
        %547 = vmatprep.subr.mxu0 0.0
        %548 = vmatpush1.msra.mxu0 0.0
        %549 = vmatprep.subr.mxu0 0.0
        %550 = vmatpush1.msra.mxu0 0.0
        %551 = vmatprep.subr.mxu0 0.0
        %552 = vmatpush1.msra.mxu0 0.0
        %553 = vmatprep.subr.mxu0 0.0
        %554 = vmatpush1.msra.mxu0 0.0
        %555 = vmatprep.subr.mxu0 0.0
        %556 = vmatpush1.msra.mxu0 0.0
        %557 = vmatprep.subr.mxu0 0.0
        %558 = vmatpush1.msra.mxu0 0.0
        %559 = vmatprep.subr.mxu0 0.0
        %560 = vmatpush1.msra.mxu0 0.0
        %561 = vmatprep.subr.mxu0 0.0
        %562 = vmatpush1.msra.mxu0 0.0
        %563 = vmatprep.subr.mxu0 0.0
        %564 = vmatpush1.msra.mxu0 0.0
        %565 = vmatprep.subr.mxu0 0.0
        %566 = vmatpush1.msra.mxu0 0.0
        %567 = vmatprep.subr.mxu0 0.0
        %568 = vmatpush1.msra.mxu0 0.0
        %569 = vmatprep.subr.mxu0 0.0
        %570 = vmatpush1.msra.mxu0 0.0
        %571 = vmatprep.subr.mxu0 0.0
        %572 = vmatpush1.msra.mxu0 0.0
        %573 = vmatprep.subr.mxu0 0.0
        %574 = vmatpush1.msra.mxu0 0.0
        %575 = vmatprep.subr.mxu0 0.0
        %576 = vmatpush1.msra.mxu0 0.0
        %577 = vmatprep.subr.mxu0 0.0
        %578 = vmatpush1.msra.mxu0 0.0
        %579 = vmatprep.subr.mxu0 0.0
        %580 = vmatpush1.msra.mxu0 0.0
        %581 = vmatprep.subr.mxu0 0.0
        %582 = vmatpush1.msra.mxu0 0.0
        %583 = vmatprep.subr.mxu0 0.0
        %584 = vmatpush1.msra.mxu0 0.0
        %585 = vmatprep.subr.mxu0 0.0
        %586 = vmatpush1.msra.mxu0 0.0
        %587 = vmatprep.subr.mxu0 0.0
        %588 = vmatpush1.msra.mxu0 0.0
        %589 = vmatprep.subr.mxu0 0.0
        %590 = vmatpush1.msra.mxu0 0.0
        %591 = vmatprep.subr.mxu0 0.0
        %592 = vmatpush1.msra.mxu0 0.0
        %593 = vmatprep.subr.mxu0 0.0
        %594 = vmatpush1.msra.mxu0 0.0
        %595 = vmatprep.subr.mxu0 0.0
        %596 = vmatpush1.msra.mxu0 0.0
        %597 = vmatprep.subr.mxu0 0.0
        %598 = vmatpush1.msra.mxu0 0.0
        %599 = vmatprep.subr.mxu0 0.0
        %600 = vmatpush1.msra.mxu0 0.0
        %601 = vmatprep.mubr.f32.mxu0 0.0
        %602 = vmatmul.mubr.f32.gmra.mrb[0].mxu0 %v282
        %v603 = vpop.f32.mrb[0].mxu0
        %v604 = vadd.f32 0.0, %v603
        %v605 = vpop.f32.mrb[0].mxu0
        %v606 = vadd.f32 0.0, %v605
        %607 = vmatprep.mubr.f32.mxu0 0.0
        %608 = vmatmul.mubr.f32.gmra.mrb[0].mxu0 %v285
        %v609 = vpop.f32.mrb[0].mxu0
        %v610 = vadd.f32 0.0, %v609
        %v611 = vpop.f32.mrb[0].mxu0
        %v612 = vadd.f32 0.0, %v611
        %613 = vdwg.mxu0
        %614 = vmatprep.subr.mxu0 0.0
        %615 = vmatpush1.msra.mxu0 %v304
        %616 = vmatprep.subr.mxu0 0.0
        %617 = vmatpush1.msra.mxu0 0.0
        %618 = vmatprep.subr.mxu0 0.0
        %619 = vmatpush1.msra.mxu0 0.0
        %620 = vmatprep.subr.mxu0 0.0
        %621 = vmatpush1.msra.mxu0 0.0
        %622 = vmatprep.subr.mxu0 0.0
        %623 = vmatpush1.msra.mxu0 0.0
        %624 = vmatprep.subr.mxu0 0.0
        %625 = vmatpush1.msra.mxu0 0.0
        %626 = vmatprep.subr.mxu0 0.0
        %627 = vmatpush1.msra.mxu0 0.0
        %628 = vmatprep.subr.mxu0 0.0
        %629 = vmatpush1.msra.mxu0 0.0
        %630 = vmatprep.subr.mxu0 0.0
        %631 = vmatpush1.msra.mxu0 0.0
        %632 = vmatprep.subr.mxu0 0.0
        %633 = vmatpush1.msra.mxu0 0.0
        %634 = vmatprep.subr.mxu0 0.0
        %635 = vmatpush1.msra.mxu0 0.0
        %636 = vmatprep.subr.mxu0 0.0
        %637 = vmatpush1.msra.mxu0 0.0
        %638 = vmatprep.subr.mxu0 0.0
        %639 = vmatpush1.msra.mxu0 0.0
        %640 = vmatprep.subr.mxu0 0.0
        %641 = vmatpush1.msra.mxu0 0.0
        %642 = vmatprep.subr.mxu0 0.0
        %643 = vmatpush1.msra.mxu0 0.0
        %644 = vmatprep.subr.mxu0 0.0
        %645 = vmatpush1.msra.mxu0 0.0
        %646 = vmatprep.subr.mxu0 0.0
        %647 = vmatpush1.msra.mxu0 0.0
        %648 = vmatprep.subr.mxu0 0.0
        %649 = vmatpush1.msra.mxu0 0.0
        %650 = vmatprep.subr.mxu0 0.0
        %651 = vmatpush1.msra.mxu0 0.0
        %652 = vmatprep.subr.mxu0 0.0
        %653 = vmatpush1.msra.mxu0 0.0
        %654 = vmatprep.subr.mxu0 0.0
        %655 = vmatpush1.msra.mxu0 0.0
        %656 = vmatprep.subr.mxu0 0.0
        %657 = vmatpush1.msra.mxu0 0.0
        %658 = vmatprep.subr.mxu0 0.0
        %659 = vmatpush1.msra.mxu0 0.0
        %660 = vmatprep.subr.mxu0 0.0
        %661 = vmatpush1.msra.mxu0 0.0
        %662 = vmatprep.subr.mxu0 0.0
        %663 = vmatpush1.msra.mxu0 0.0
        %664 = vmatprep.subr.mxu0 0.0
        %665 = vmatpush1.msra.mxu0 0.0
        %666 = vmatprep.subr.mxu0 0.0
        %667 = vmatpush1.msra.mxu0 0.0
        %668 = vmatprep.subr.mxu0 0.0
        %669 = vmatpush1.msra.mxu0 0.0
        %670 = vmatprep.subr.mxu0 0.0
        %671 = vmatpush1.msra.mxu0 0.0
        %672 = vmatprep.subr.mxu0 0.0
        %673 = vmatpush1.msra.mxu0 0.0
        %674 = vmatprep.subr.mxu0 0.0
        %675 = vmatpush1.msra.mxu0 0.0
        %676 = vmatprep.subr.mxu0 0.0
        %677 = vmatpush1.msra.mxu0 0.0
        %678 = vmatprep.mubr.f32.mxu0 0.0
        %679 = vmatmul.mubr.f32.gmra.mrb[0].mxu0 %v282
        %v680 = vpop.f32.mrb[0].mxu0
        %v681 = vadd.f32 0.0, %v680
        %v682 = vpop.f32.mrb[0].mxu0
        %683 = vmatprep.mubr.f32.mxu0 0.0
        %684 = vmatmul.mubr.f32.gmra.mrb[0].mxu0 %v285
        %v685 = vpop.f32.mrb[0].mxu0
        %v686 = vadd.f32 0.0, %v685
        %v687 = vpop.f32.mrb[0].mxu0
        %688 = vdwg.mxu0
        %v690 = vsel %vm280, %v239, 0
        %v693 = vsel %vm280, %v240, 0
        %v695 = vsel %vm287, %v234, 0
        %v697 = vsel %vm287, %v249, 0
        %v699 = vsel %vm287, %v235, 0
        %v701 = vsel %vm287, %v250, 0
        %v703 = vsel %vm287, %v236, 0
        %v705 = vsel %vm287, %v251, 0
        %v707 = vsel %vm287, %v237, 0
        %v709 = vsel %vm287, %v252, 0
        %v711 = vsel %vm287, %v238, 0
        %713 = vmatprep.subr.mxu0 %v697
        %714 = vmatpush1.msra.mxu0 %v695
        %715 = vmatprep.subr.mxu0 0.0
        %716 = vmatpush1.msra.mxu0 0.0
        %717 = vmatprep.subr.mxu0 0.0
        %718 = vmatpush1.msra.mxu0 0.0
        %719 = vmatprep.subr.mxu0 0.0
        %720 = vmatpush1.msra.mxu0 0.0
        %721 = vmatprep.subr.mxu0 0.0
        %722 = vmatpush1.msra.mxu0 0.0
        %723 = vmatprep.subr.mxu0 0.0
        %724 = vmatpush1.msra.mxu0 0.0
        %725 = vmatprep.subr.mxu0 0.0
        %726 = vmatpush1.msra.mxu0 0.0
        %727 = vmatprep.subr.mxu0 0.0
        %728 = vmatpush1.msra.mxu0 0.0
        %729 = vmatprep.subr.mxu0 0.0
        %730 = vmatpush1.msra.mxu0 0.0
        %731 = vmatprep.subr.mxu0 0.0
        %732 = vmatpush1.msra.mxu0 0.0
        %733 = vmatprep.subr.mxu0 0.0
        %734 = vmatpush1.msra.mxu0 0.0
        %735 = vmatprep.subr.mxu0 0.0
        %736 = vmatpush1.msra.mxu0 0.0
        %737 = vmatprep.subr.mxu0 0.0
        %738 = vmatpush1.msra.mxu0 0.0
        %739 = vmatprep.subr.mxu0 0.0
        %740 = vmatpush1.msra.mxu0 0.0
        %741 = vmatprep.subr.mxu0 0.0
        %742 = vmatpush1.msra.mxu0 0.0
        %743 = vmatprep.subr.mxu0 0.0
        %744 = vmatpush1.msra.mxu0 0.0
        %745 = vmatprep.subr.mxu0 0.0
        %746 = vmatpush1.msra.mxu0 0.0
        %747 = vmatprep.subr.mxu0 0.0
        %748 = vmatpush1.msra.mxu0 0.0
        %749 = vmatprep.subr.mxu0 0.0
        %750 = vmatpush1.msra.mxu0 0.0
        %751 = vmatprep.subr.mxu0 0.0
        %752 = vmatpush1.msra.mxu0 0.0
        %753 = vmatprep.subr.mxu0 0.0
        %754 = vmatpush1.msra.mxu0 0.0
        %755 = vmatprep.subr.mxu0 0.0
        %756 = vmatpush1.msra.mxu0 0.0
        %757 = vmatprep.subr.mxu0 0.0
        %758 = vmatpush1.msra.mxu0 0.0
        %759 = vmatprep.subr.mxu0 0.0
        %760 = vmatpush1.msra.mxu0 0.0
        %761 = vmatprep.subr.mxu0 0.0
        %762 = vmatpush1.msra.mxu0 0.0
        %763 = vmatprep.subr.mxu0 0.0
        %764 = vmatpush1.msra.mxu0 0.0
        %765 = vmatprep.subr.mxu0 0.0
        %766 = vmatpush1.msra.mxu0 0.0
        %767 = vmatprep.subr.mxu0 0.0
        %768 = vmatpush1.msra.mxu0 0.0
        %769 = vmatprep.subr.mxu0 0.0
        %770 = vmatpush1.msra.mxu0 0.0
        %771 = vmatprep.subr.mxu0 0.0
        %772 = vmatpush1.msra.mxu0 0.0
        %773 = vmatprep.subr.mxu0 0.0
        %774 = vmatpush1.msra.mxu0 0.0
        %775 = vmatprep.subr.mxu0 0.0
        %776 = vmatpush1.msra.mxu0 0.0
        %777 = vmatprep.mubr.f32.mxu0 0.0
        %778 = vmatmul.mubr.f32.gmra.mrb[0].mxu0 %v690
        %v779 = vpop.f32.mrb[0].mxu0
        %v780 = vadd.f32 %v373, %v779
        %v781 = vpop.f32.mrb[0].mxu0
        %v782 = vadd.f32 %v375, %v781
        %783 = vmatprep.mubr.f32.mxu0 0.0
        %784 = vmatmul.mubr.f32.gmra.mrb[0].mxu0 %v693
        %v785 = vpop.f32.mrb[0].mxu0
        %v786 = vadd.f32 %v379, %v785
        %v787 = vpop.f32.mrb[0].mxu0
        %v788 = vadd.f32 %v381, %v787
        %789 = vdwg.mxu0
        %790 = vmatprep.subr.mxu0 %v701
        %791 = vmatpush1.msra.mxu0 %v699
        %792 = vmatprep.subr.mxu0 0.0
        %793 = vmatpush1.msra.mxu0 0.0
        %794 = vmatprep.subr.mxu0 0.0
        %795 = vmatpush1.msra.mxu0 0.0
        %796 = vmatprep.subr.mxu0 0.0
        %797 = vmatpush1.msra.mxu0 0.0
        %798 = vmatprep.subr.mxu0 0.0
        %799 = vmatpush1.msra.mxu0 0.0
        %800 = vmatprep.subr.mxu0 0.0
        %801 = vmatpush1.msra.mxu0 0.0
        %802 = vmatprep.subr.mxu0 0.0
        %803 = vmatpush1.msra.mxu0 0.0
        %804 = vmatprep.subr.mxu0 0.0
        %805 = vmatpush1.msra.mxu0 0.0
        %806 = vmatprep.subr.mxu0 0.0
        %807 = vmatpush1.msra.mxu0 0.0
        %808 = vmatprep.subr.mxu0 0.0
        %809 = vmatpush1.msra.mxu0 0.0
        %810 = vmatprep.subr.mxu0 0.0
        %811 = vmatpush1.msra.mxu0 0.0
        %812 = vmatprep.subr.mxu0 0.0
        %813 = vmatpush1.msra.mxu0 0.0
        %814 = vmatprep.subr.mxu0 0.0
        %815 = vmatpush1.msra.mxu0 0.0
        %816 = vmatprep.subr.mxu0 0.0
        %817 = vmatpush1.msra.mxu0 0.0
        %818 = vmatprep.subr.mxu0 0.0
        %819 = vmatpush1.msra.mxu0 0.0
        %820 = vmatprep.subr.mxu0 0.0
        %821 = vmatpush1.msra.mxu0 0.0
        %822 = vmatprep.subr.mxu0 0.0
        %823 = vmatpush1.msra.mxu0 0.0
        %824 = vmatprep.subr.mxu0 0.0
        %825 = vmatpush1.msra.mxu0 0.0
        %826 = vmatprep.subr.mxu0 0.0
        %827 = vmatpush1.msra.mxu0 0.0
        %828 = vmatprep.subr.mxu0 0.0
        %829 = vmatpush1.msra.mxu0 0.0
        %830 = vmatprep.subr.mxu0 0.0
        %831 = vmatpush1.msra.mxu0 0.0
        %832 = vmatprep.subr.mxu0 0.0
        %833 = vmatpush1.msra.mxu0 0.0
        %834 = vmatprep.subr.mxu0 0.0
        %835 = vmatpush1.msra.mxu0 0.0
        %836 = vmatprep.subr.mxu0 0.0
        %837 = vmatpush1.msra.mxu0 0.0
        %838 = vmatprep.subr.mxu0 0.0
        %839 = vmatpush1.msra.mxu0 0.0
        %840 = vmatprep.subr.mxu0 0.0
        %841 = vmatpush1.msra.mxu0 0.0
        %842 = vmatprep.subr.mxu0 0.0
        %843 = vmatpush1.msra.mxu0 0.0
        %844 = vmatprep.subr.mxu0 0.0
        %845 = vmatpush1.msra.mxu0 0.0
        %846 = vmatprep.subr.mxu0 0.0
        %847 = vmatpush1.msra.mxu0 0.0
        %848 = vmatprep.subr.mxu0 0.0
        %849 = vmatpush1.msra.mxu0 0.0
        %850 = vmatprep.subr.mxu0 0.0
        %851 = vmatpush1.msra.mxu0 0.0
        %852 = vmatprep.subr.mxu0 0.0
        %853 = vmatpush1.msra.mxu0 0.0
        %854 = vmatprep.mubr.f32.mxu0 0.0
        %855 = vmatmul.mubr.f32.gmra.mrb[0].mxu0 %v690
        %v856 = vpop.f32.mrb[0].mxu0
        %v857 = vadd.f32 %v450, %v856
        %v858 = vpop.f32.mrb[0].mxu0
        %v859 = vadd.f32 %v452, %v858
        %860 = vmatprep.mubr.f32.mxu0 0.0
        %861 = vmatmul.mubr.f32.gmra.mrb[0].mxu0 %v693
        %v862 = vpop.f32.mrb[0].mxu0
        %v863 = vadd.f32 %v456, %v862
        %v864 = vpop.f32.mrb[0].mxu0
        %v865 = vadd.f32 %v458, %v864
        %866 = vdwg.mxu0
        %867 = vmatprep.subr.mxu0 %v705
        %868 = vmatpush1.msra.mxu0 %v703
        %869 = vmatprep.subr.mxu0 0.0
        %870 = vmatpush1.msra.mxu0 0.0
        %871 = vmatprep.subr.mxu0 0.0
        %872 = vmatpush1.msra.mxu0 0.0
        %873 = vmatprep.subr.mxu0 0.0
        %874 = vmatpush1.msra.mxu0 0.0
        %875 = vmatprep.subr.mxu0 0.0
        %876 = vmatpush1.msra.mxu0 0.0
        %877 = vmatprep.subr.mxu0 0.0
        %878 = vmatpush1.msra.mxu0 0.0
        %879 = vmatprep.subr.mxu0 0.0
        %880 = vmatpush1.msra.mxu0 0.0
        %881 = vmatprep.subr.mxu0 0.0
        %882 = vmatpush1.msra.mxu0 0.0
        %883 = vmatprep.subr.mxu0 0.0
        %884 = vmatpush1.msra.mxu0 0.0
        %885 = vmatprep.subr.mxu0 0.0
        %886 = vmatpush1.msra.mxu0 0.0
        %887 = vmatprep.subr.mxu0 0.0
        %888 = vmatpush1.msra.mxu0 0.0
        %889 = vmatprep.subr.mxu0 0.0
        %890 = vmatpush1.msra.mxu0 0.0
        %891 = vmatprep.subr.mxu0 0.0
        %892 = vmatpush1.msra.mxu0 0.0
        %893 = vmatprep.subr.mxu0 0.0
        %894 = vmatpush1.msra.mxu0 0.0
        %895 = vmatprep.subr.mxu0 0.0
        %896 = vmatpush1.msra.mxu0 0.0
        %897 = vmatprep.subr.mxu0 0.0
        %898 = vmatpush1.msra.mxu0 0.0
        %899 = vmatprep.subr.mxu0 0.0
        %900 = vmatpush1.msra.mxu0 0.0
        %901 = vmatprep.subr.mxu0 0.0
        %902 = vmatpush1.msra.mxu0 0.0
        %903 = vmatprep.subr.mxu0 0.0
        %904 = vmatpush1.msra.mxu0 0.0
        %905 = vmatprep.subr.mxu0 0.0
        %906 = vmatpush1.msra.mxu0 0.0
        %907 = vmatprep.subr.mxu0 0.0
        %908 = vmatpush1.msra.mxu0 0.0
        %909 = vmatprep.subr.mxu0 0.0
        %910 = vmatpush1.msra.mxu0 0.0
        %911 = vmatprep.subr.mxu0 0.0
        %912 = vmatpush1.msra.mxu0 0.0
        %913 = vmatprep.subr.mxu0 0.0
        %914 = vmatpush1.msra.mxu0 0.0
        %915 = vmatprep.subr.mxu0 0.0
        %916 = vmatpush1.msra.mxu0 0.0
        %917 = vmatprep.subr.mxu0 0.0
        %918 = vmatpush1.msra.mxu0 0.0
        %919 = vmatprep.subr.mxu0 0.0
        %920 = vmatpush1.msra.mxu0 0.0
        %921 = vmatprep.subr.mxu0 0.0
        %922 = vmatpush1.msra.mxu0 0.0
        %923 = vmatprep.subr.mxu0 0.0
        %924 = vmatpush1.msra.mxu0 0.0
        %925 = vmatprep.subr.mxu0 0.0
        %926 = vmatpush1.msra.mxu0 0.0
        %927 = vmatprep.subr.mxu0 0.0
        %928 = vmatpush1.msra.mxu0 0.0
        %929 = vmatprep.subr.mxu0 0.0
        %930 = vmatpush1.msra.mxu0 0.0
        %931 = vmatprep.mubr.f32.mxu0 0.0
        %932 = vmatmul.mubr.f32.gmra.mrb[0].mxu0 %v690
        %v933 = vpop.f32.mrb[0].mxu0
        %v934 = vadd.f32 %v527, %v933
        %v935 = vpop.f32.mrb[0].mxu0
        %v936 = vadd.f32 %v529, %v935
        %937 = vmatprep.mubr.f32.mxu0 0.0
        %938 = vmatmul.mubr.f32.gmra.mrb[0].mxu0 %v693
        %v939 = vpop.f32.mrb[0].mxu0
        %v940 = vadd.f32 %v533, %v939
        %v941 = vpop.f32.mrb[0].mxu0
        %v942 = vadd.f32 %v535, %v941
        %943 = vdwg.mxu0
        %944 = vmatprep.subr.mxu0 %v709
        %945 = vmatpush1.msra.mxu0 %v707
        %946 = vmatprep.subr.mxu0 0.0
        %947 = vmatpush1.msra.mxu0 0.0
        %948 = vmatprep.subr.mxu0 0.0
        %949 = vmatpush1.msra.mxu0 0.0
        %950 = vmatprep.subr.mxu0 0.0
        %951 = vmatpush1.msra.mxu0 0.0
        %952 = vmatprep.subr.mxu0 0.0
        %953 = vmatpush1.msra.mxu0 0.0
        %954 = vmatprep.subr.mxu0 0.0
        %955 = vmatpush1.msra.mxu0 0.0
        %956 = vmatprep.subr.mxu0 0.0
        %957 = vmatpush1.msra.mxu0 0.0
        %958 = vmatprep.subr.mxu0 0.0
        %959 = vmatpush1.msra.mxu0 0.0
        %960 = vmatprep.subr.mxu0 0.0
        %961 = vmatpush1.msra.mxu0 0.0
        %962 = vmatprep.subr.mxu0 0.0
        %963 = vmatpush1.msra.mxu0 0.0
        %964 = vmatprep.subr.mxu0 0.0
        %965 = vmatpush1.msra.mxu0 0.0
        %966 = vmatprep.subr.mxu0 0.0
        %967 = vmatpush1.msra.mxu0 0.0
        %968 = vmatprep.subr.mxu0 0.0
        %969 = vmatpush1.msra.mxu0 0.0
        %970 = vmatprep.subr.mxu0 0.0
        %971 = vmatpush1.msra.mxu0 0.0
        %972 = vmatprep.subr.mxu0 0.0
        %973 = vmatpush1.msra.mxu0 0.0
        %974 = vmatprep.subr.mxu0 0.0
        %975 = vmatpush1.msra.mxu0 0.0
        %976 = vmatprep.subr.mxu0 0.0
        %977 = vmatpush1.msra.mxu0 0.0
        %978 = vmatprep.subr.mxu0 0.0
        %979 = vmatpush1.msra.mxu0 0.0
        %980 = vmatprep.subr.mxu0 0.0
        %981 = vmatpush1.msra.mxu0 0.0
        %982 = vmatprep.subr.mxu0 0.0
        %983 = vmatpush1.msra.mxu0 0.0
        %984 = vmatprep.subr.mxu0 0.0
        %985 = vmatpush1.msra.mxu0 0.0
        %986 = vmatprep.subr.mxu0 0.0
        %987 = vmatpush1.msra.mxu0 0.0
        %988 = vmatprep.subr.mxu0 0.0
        %989 = vmatpush1.msra.mxu0 0.0
        %990 = vmatprep.subr.mxu0 0.0
        %991 = vmatpush1.msra.mxu0 0.0
        %992 = vmatprep.subr.mxu0 0.0
        %993 = vmatpush1.msra.mxu0 0.0
        %994 = vmatprep.subr.mxu0 0.0
        %995 = vmatpush1.msra.mxu0 0.0
        %996 = vmatprep.subr.mxu0 0.0
        %997 = vmatpush1.msra.mxu0 0.0
        %998 = vmatprep.subr.mxu0 0.0
        %999 = vmatpush1.msra.mxu0 0.0
        %1000 = vmatprep.subr.mxu0 0.0
        %1001 = vmatpush1.msra.mxu0 0.0
        %1002 = vmatprep.subr.mxu0 0.0
        %1003 = vmatpush1.msra.mxu0 0.0
        %1004 = vmatprep.subr.mxu0 0.0
        %1005 = vmatpush1.msra.mxu0 0.0
        %1006 = vmatprep.subr.mxu0 0.0
        %1007 = vmatpush1.msra.mxu0 0.0
        %1008 = vmatprep.mubr.f32.mxu0 0.0
        %1009 = vmatmul.mubr.f32.gmra.mrb[0].mxu0 %v690
        %v1010 = vpop.f32.mrb[0].mxu0
        %v1011 = vadd.f32 %v604, %v1010
        %v1012 = vpop.f32.mrb[0].mxu0
        %v1013 = vadd.f32 %v606, %v1012
        %1014 = vmatprep.mubr.f32.mxu0 0.0
        %1015 = vmatmul.mubr.f32.gmra.mrb[0].mxu0 %v693
        %v1016 = vpop.f32.mrb[0].mxu0
        %v1017 = vadd.f32 %v610, %v1016
        %v1018 = vpop.f32.mrb[0].mxu0
        %v1019 = vadd.f32 %v612, %v1018
        %1020 = vdwg.mxu0
        %1021 = vmatprep.subr.mxu0 0.0
        %1022 = vmatpush1.msra.mxu0 %v711
        %1023 = vmatprep.subr.mxu0 0.0
        %1024 = vmatpush1.msra.mxu0 0.0
        %1025 = vmatprep.subr.mxu0 0.0
        %1026 = vmatpush1.msra.mxu0 0.0
        %1027 = vmatprep.subr.mxu0 0.0
        %1028 = vmatpush1.msra.mxu0 0.0
        %1029 = vmatprep.subr.mxu0 0.0
        %1030 = vmatpush1.msra.mxu0 0.0
        %1031 = vmatprep.subr.mxu0 0.0
        %1032 = vmatpush1.msra.mxu0 0.0
        %1033 = vmatprep.subr.mxu0 0.0
        %1034 = vmatpush1.msra.mxu0 0.0
        %1035 = vmatprep.subr.mxu0 0.0
        %1036 = vmatpush1.msra.mxu0 0.0
        %1037 = vmatprep.subr.mxu0 0.0
        %1038 = vmatpush1.msra.mxu0 0.0
        %1039 = vmatprep.subr.mxu0 0.0
        %1040 = vmatpush1.msra.mxu0 0.0
        %1041 = vmatprep.subr.mxu0 0.0
        %1042 = vmatpush1.msra.mxu0 0.0
        %1043 = vmatprep.subr.mxu0 0.0
        %1044 = vmatpush1.msra.mxu0 0.0
        %1045 = vmatprep.subr.mxu0 0.0
        %1046 = vmatpush1.msra.mxu0 0.0
        %1047 = vmatprep.subr.mxu0 0.0
        %1048 = vmatpush1.msra.mxu0 0.0
        %1049 = vmatprep.subr.mxu0 0.0
        %1050 = vmatpush1.msra.mxu0 0.0
        %1051 = vmatprep.subr.mxu0 0.0
        %1052 = vmatpush1.msra.mxu0 0.0
        %1053 = vmatprep.subr.mxu0 0.0
        %1054 = vmatpush1.msra.mxu0 0.0
        %1055 = vmatprep.subr.mxu0 0.0
        %1056 = vmatpush1.msra.mxu0 0.0
        %1057 = vmatprep.subr.mxu0 0.0
        %1058 = vmatpush1.msra.mxu0 0.0
        %1059 = vmatprep.subr.mxu0 0.0
        %1060 = vmatpush1.msra.mxu0 0.0
        %1061 = vmatprep.subr.mxu0 0.0
        %1062 = vmatpush1.msra.mxu0 0.0
        %1063 = vmatprep.subr.mxu0 0.0
        %1064 = vmatpush1.msra.mxu0 0.0
        %1065 = vmatprep.subr.mxu0 0.0
        %1066 = vmatpush1.msra.mxu0 0.0
        %1067 = vmatprep.subr.mxu0 0.0
        %1068 = vmatpush1.msra.mxu0 0.0
        %1069 = vmatprep.subr.mxu0 0.0
        %1070 = vmatpush1.msra.mxu0 0.0
        %1071 = vmatprep.subr.mxu0 0.0
        %1072 = vmatpush1.msra.mxu0 0.0
        %1073 = vmatprep.subr.mxu0 0.0
        %1074 = vmatpush1.msra.mxu0 0.0
        %1075 = vmatprep.subr.mxu0 0.0
        %1076 = vmatpush1.msra.mxu0 0.0
        %1077 = vmatprep.subr.mxu0 0.0
        %1078 = vmatpush1.msra.mxu0 0.0
        %1079 = vmatprep.subr.mxu0 0.0
        %1080 = vmatpush1.msra.mxu0 0.0
        %1081 = vmatprep.subr.mxu0 0.0
        %1082 = vmatpush1.msra.mxu0 0.0
        %1083 = vmatprep.subr.mxu0 0.0
        %1084 = vmatpush1.msra.mxu0 0.0
        %1085 = vmatprep.mubr.f32.mxu0 0.0
        %1086 = vmatmul.mubr.f32.gmra.mrb[0].mxu0 %v690
        %v1087 = vpop.f32.mrb[0].mxu0
        %v1088 = vadd.f32 %v681, %v1087
        %v1089 = vpop.f32.mrb[0].mxu0
        %1090 = vmatprep.mubr.f32.mxu0 0.0
        %1091 = vmatmul.mubr.f32.gmra.mrb[0].mxu0 %v693
        %v1092 = vpop.f32.mrb[0].mxu0
        %v1093 = vadd.f32 %v686, %v1092
        %v1094 = vpop.f32.mrb[0].mxu0
        %1095 = vdwg.mxu0
        %v1096 = vld [vmem:[%s229] sm:$0xff]
        %v1097 = vld [vmem:[%s229 + $0x8] sm:$0xff]
        %v1098 = vld [vmem:[%s229 + $0x10] sm:$0xff]
        %v1099 = vld [vmem:[%s229 + $0x18] sm:$0xff]
        %v1100 = vld [vmem:[%s229 + $0x20] sm:$0xf]
        %s1101 = scalar_lea.vmem %s1, 32
        %v1102 = vld [vmem:[%s1101] sm:$0xff]
        %v1103 = vld [vmem:[%s1101 + $0x8] sm:$0xff]
        %v1109 = vcombine.high %v1096, %v1096
        %v1110 = vcombine.high %v1097, %v1097
        %v1111 = vcombine.high %v1098, %v1098
        %v1112 = vcombine.high %v1099, %v1099
        %1113 = vrot.lane.b32.xlu0 %v1096, 126
        %v1114 = vpop.permute.xlu0 %1113
        %1115 = vrot.lane.b32.xlu0 %v1109, 126
        %v1116 = vpop.permute.xlu0 %1115
        %1117 = vrot.lane.b32.xlu0 %v1097, 126
        %v1118 = vpop.permute.xlu0 %1117
        %1119 = vrot.lane.b32.xlu0 %v1110, 126
        %v1120 = vpop.permute.xlu0 %1119
        %1121 = vrot.lane.b32.xlu0 %v1098, 126
        %v1122 = vpop.permute.xlu0 %1121
        %1123 = vrot.lane.b32.xlu0 %v1111, 126
        %v1124 = vpop.permute.xlu0 %1123
        %1125 = vrot.lane.b32.xlu0 %v1099, 126
        %v1126 = vpop.permute.xlu0 %1125
        %1127 = vrot.lane.b32.xlu0 %v1112, 126
        %v1128 = vpop.permute.xlu0 %1127
        %1129 = vrot.lane.b32.xlu0 %v1100, 126
        %v1130 = vpop.permute.xlu0 %1129
        %vm1131 = vcmask 1031168
        %v1132 = vsel %vm1131, %v1114, %v1116
        %v1133 = vsel %vm1131, %v1116, %v1118
        %v1134 = vsel %vm1131, %v1118, %v1120
        %v1135 = vsel %vm1131, %v1120, %v1122
        %v1136 = vsel %vm1131, %v1122, %v1124
        %v1137 = vsel %vm1131, %v1124, %v1126
        %v1138 = vsel %vm1131, %v1126, %v1128
        %v1139 = vsel %vm1131, %v1128, %v1130
        %v1141 = vsel %vm280, %v1102, 0
        %v1144 = vsel %vm280, %v1103, 0
        %v1146 = vsel %vm287, %v1132, 0
        %v1148 = vsel %vm287, %v1133, 0
        %v1150 = vsel %vm287, %v1134, 0
        %v1152 = vsel %vm287, %v1135, 0
        %v1154 = vsel %vm287, %v1136, 0
        %v1156 = vsel %vm287, %v1137, 0
        %v1158 = vsel %vm287, %v1138, 0
        %v1160 = vsel %vm287, %v1139, 0
        %v1162 = vsel %vm287, %v1130, 0
        %1164 = vmatprep.subr.mxu0 %v1148
        %1165 = vmatpush1.msra.mxu0 %v1146
        %1166 = vmatprep.subr.mxu0 0.0
        %1167 = vmatpush1.msra.mxu0 0.0
        %1168 = vmatprep.subr.mxu0 0.0
        %1169 = vmatpush1.msra.mxu0 0.0
        %1170 = vmatprep.subr.mxu0 0.0
        %1171 = vmatpush1.msra.mxu0 0.0
        %1172 = vmatprep.subr.mxu0 0.0
        %1173 = vmatpush1.msra.mxu0 0.0
        %1174 = vmatprep.subr.mxu0 0.0
        %1175 = vmatpush1.msra.mxu0 0.0
        %1176 = vmatprep.subr.mxu0 0.0
        %1177 = vmatpush1.msra.mxu0 0.0
        %1178 = vmatprep.subr.mxu0 0.0
        %1179 = vmatpush1.msra.mxu0 0.0
        %1180 = vmatprep.subr.mxu0 0.0
        %1181 = vmatpush1.msra.mxu0 0.0
        %1182 = vmatprep.subr.mxu0 0.0
        %1183 = vmatpush1.msra.mxu0 0.0
        %1184 = vmatprep.subr.mxu0 0.0
        %1185 = vmatpush1.msra.mxu0 0.0
        %1186 = vmatprep.subr.mxu0 0.0
        %1187 = vmatpush1.msra.mxu0 0.0
        %1188 = vmatprep.subr.mxu0 0.0
        %1189 = vmatpush1.msra.mxu0 0.0
        %1190 = vmatprep.subr.mxu0 0.0
        %1191 = vmatpush1.msra.mxu0 0.0
        %1192 = vmatprep.subr.mxu0 0.0
        %1193 = vmatpush1.msra.mxu0 0.0
        %1194 = vmatprep.subr.mxu0 0.0
        %1195 = vmatpush1.msra.mxu0 0.0
        %1196 = vmatprep.subr.mxu0 0.0
        %1197 = vmatpush1.msra.mxu0 0.0
        %1198 = vmatprep.subr.mxu0 0.0
        %1199 = vmatpush1.msra.mxu0 0.0
        %1200 = vmatprep.subr.mxu0 0.0
        %1201 = vmatpush1.msra.mxu0 0.0
        %1202 = vmatprep.subr.mxu0 0.0
        %1203 = vmatpush1.msra.mxu0 0.0
        %1204 = vmatprep.subr.mxu0 0.0
        %1205 = vmatpush1.msra.mxu0 0.0
        %1206 = vmatprep.subr.mxu0 0.0
        %1207 = vmatpush1.msra.mxu0 0.0
        %1208 = vmatprep.subr.mxu0 0.0
        %1209 = vmatpush1.msra.mxu0 0.0
        %1210 = vmatprep.subr.mxu0 0.0
        %1211 = vmatpush1.msra.mxu0 0.0
        %1212 = vmatprep.subr.mxu0 0.0
        %1213 = vmatpush1.msra.mxu0 0.0
        %1214 = vmatprep.subr.mxu0 0.0
        %1215 = vmatpush1.msra.mxu0 0.0
        %1216 = vmatprep.subr.mxu0 0.0
        %1217 = vmatpush1.msra.mxu0 0.0
        %1218 = vmatprep.subr.mxu0 0.0
        %1219 = vmatpush1.msra.mxu0 0.0
        %1220 = vmatprep.subr.mxu0 0.0
        %1221 = vmatpush1.msra.mxu0 0.0
        %1222 = vmatprep.subr.mxu0 0.0
        %1223 = vmatpush1.msra.mxu0 0.0
        %1224 = vmatprep.subr.mxu0 0.0
        %1225 = vmatpush1.msra.mxu0 0.0
        %1226 = vmatprep.subr.mxu0 0.0
        %1227 = vmatpush1.msra.mxu0 0.0
        %1228 = vmatprep.mubr.f32.mxu0 0.0
        %1229 = vmatmul.mubr.f32.gmra.mrb[0].mxu0 %v1141
        %v1230 = vpop.f32.mrb[0].mxu0
        %v1231 = vadd.f32 0.0, %v1230
        %v1232 = vpop.f32.mrb[0].mxu0
        %v1233 = vadd.f32 0.0, %v1232
        %1234 = vmatprep.mubr.f32.mxu0 0.0
        %1235 = vmatmul.mubr.f32.gmra.mrb[0].mxu0 %v1144
        %v1236 = vpop.f32.mrb[0].mxu0
        %v1237 = vadd.f32 0.0, %v1236
        %v1238 = vpop.f32.mrb[0].mxu0
        %v1239 = vadd.f32 0.0, %v1238
        %1240 = vdwg.mxu0
        %1241 = vmatprep.subr.mxu0 %v1152
        %1242 = vmatpush1.msra.mxu0 %v1150
        %1243 = vmatprep.subr.mxu0 0.0
        %1244 = vmatpush1.msra.mxu0 0.0
        %1245 = vmatprep.subr.mxu0 0.0
        %1246 = vmatpush1.msra.mxu0 0.0
        %1247 = vmatprep.subr.mxu0 0.0
        %1248 = vmatpush1.msra.mxu0 0.0
        %1249 = vmatprep.subr.mxu0 0.0
        %1250 = vmatpush1.msra.mxu0 0.0
        %1251 = vmatprep.subr.mxu0 0.0
        %1252 = vmatpush1.msra.mxu0 0.0
        %1253 = vmatprep.subr.mxu0 0.0
        %1254 = vmatpush1.msra.mxu0 0.0
        %1255 = vmatprep.subr.mxu0 0.0
        %1256 = vmatpush1.msra.mxu0 0.0
        %1257 = vmatprep.subr.mxu0 0.0
        %1258 = vmatpush1.msra.mxu0 0.0
        %1259 = vmatprep.subr.mxu0 0.0
        %1260 = vmatpush1.msra.mxu0 0.0
        %1261 = vmatprep.subr.mxu0 0.0
        %1262 = vmatpush1.msra.mxu0 0.0
        %1263 = vmatprep.subr.mxu0 0.0
        %1264 = vmatpush1.msra.mxu0 0.0
        %1265 = vmatprep.subr.mxu0 0.0
        %1266 = vmatpush1.msra.mxu0 0.0
        %1267 = vmatprep.subr.mxu0 0.0
        %1268 = vmatpush1.msra.mxu0 0.0
        %1269 = vmatprep.subr.mxu0 0.0
        %1270 = vmatpush1.msra.mxu0 0.0
        %1271 = vmatprep.subr.mxu0 0.0
        %1272 = vmatpush1.msra.mxu0 0.0
        %1273 = vmatprep.subr.mxu0 0.0
        %1274 = vmatpush1.msra.mxu0 0.0
        %1275 = vmatprep.subr.mxu0 0.0
        %1276 = vmatpush1.msra.mxu0 0.0
        %1277 = vmatprep.subr.mxu0 0.0
        %1278 = vmatpush1.msra.mxu0 0.0
        %1279 = vmatprep.subr.mxu0 0.0
        %1280 = vmatpush1.msra.mxu0 0.0
        %1281 = vmatprep.subr.mxu0 0.0
        %1282 = vmatpush1.msra.mxu0 0.0
        %1283 = vmatprep.subr.mxu0 0.0
        %1284 = vmatpush1.msra.mxu0 0.0
        %1285 = vmatprep.subr.mxu0 0.0
        %1286 = vmatpush1.msra.mxu0 0.0
        %1287 = vmatprep.subr.mxu0 0.0
        %1288 = vmatpush1.msra.mxu0 0.0
        %1289 = vmatprep.subr.mxu0 0.0
        %1290 = vmatpush1.msra.mxu0 0.0
        %1291 = vmatprep.subr.mxu0 0.0
        %1292 = vmatpush1.msra.mxu0 0.0
        %1293 = vmatprep.subr.mxu0 0.0
        %1294 = vmatpush1.msra.mxu0 0.0
        %1295 = vmatprep.subr.mxu0 0.0
        %1296 = vmatpush1.msra.mxu0 0.0
        %1297 = vmatprep.subr.mxu0 0.0
        %1298 = vmatpush1.msra.mxu0 0.0
        %1299 = vmatprep.subr.mxu0 0.0
        %1300 = vmatpush1.msra.mxu0 0.0
        %1301 = vmatprep.subr.mxu0 0.0
        %1302 = vmatpush1.msra.mxu0 0.0
        %1303 = vmatprep.subr.mxu0 0.0
        %1304 = vmatpush1.msra.mxu0 0.0
        %1305 = vmatprep.mubr.f32.mxu0 0.0
        %1306 = vmatmul.mubr.f32.gmra.mrb[0].mxu0 %v1141
        %v1307 = vpop.f32.mrb[0].mxu0
        %v1308 = vadd.f32 0.0, %v1307
        %v1309 = vpop.f32.mrb[0].mxu0
        %v1310 = vadd.f32 0.0, %v1309
        %1311 = vmatprep.mubr.f32.mxu0 0.0
        %1312 = vmatmul.mubr.f32.gmra.mrb[0].mxu0 %v1144
        %v1313 = vpop.f32.mrb[0].mxu0
        %v1314 = vadd.f32 0.0, %v1313
        %v1315 = vpop.f32.mrb[0].mxu0
        %v1316 = vadd.f32 0.0, %v1315
        %1317 = vdwg.mxu0
        %1318 = vmatprep.subr.mxu0 %v1156
        %1319 = vmatpush1.msra.mxu0 %v1154
        %1320 = vmatprep.subr.mxu0 0.0
        %1321 = vmatpush1.msra.mxu0 0.0
        %1322 = vmatprep.subr.mxu0 0.0
        %1323 = vmatpush1.msra.mxu0 0.0
        %1324 = vmatprep.subr.mxu0 0.0
        %1325 = vmatpush1.msra.mxu0 0.0
        %1326 = vmatprep.subr.mxu0 0.0
        %1327 = vmatpush1.msra.mxu0 0.0
        %1328 = vmatprep.subr.mxu0 0.0
        %1329 = vmatpush1.msra.mxu0 0.0
        %1330 = vmatprep.subr.mxu0 0.0
        %1331 = vmatpush1.msra.mxu0 0.0
        %1332 = vmatprep.subr.mxu0 0.0
        %1333 = vmatpush1.msra.mxu0 0.0
        %1334 = vmatprep.subr.mxu0 0.0
        %1335 = vmatpush1.msra.mxu0 0.0
        %1336 = vmatprep.subr.mxu0 0.0
        %1337 = vmatpush1.msra.mxu0 0.0
        %1338 = vmatprep.subr.mxu0 0.0
        %1339 = vmatpush1.msra.mxu0 0.0
        %1340 = vmatprep.subr.mxu0 0.0
        %1341 = vmatpush1.msra.mxu0 0.0
        %1342 = vmatprep.subr.mxu0 0.0
        %1343 = vmatpush1.msra.mxu0 0.0
        %1344 = vmatprep.subr.mxu0 0.0
        %1345 = vmatpush1.msra.mxu0 0.0
        %1346 = vmatprep.subr.mxu0 0.0
        %1347 = vmatpush1.msra.mxu0 0.0
        %1348 = vmatprep.subr.mxu0 0.0
        %1349 = vmatpush1.msra.mxu0 0.0
        %1350 = vmatprep.subr.mxu0 0.0
        %1351 = vmatpush1.msra.mxu0 0.0
        %1352 = vmatprep.subr.mxu0 0.0
        %1353 = vmatpush1.msra.mxu0 0.0
        %1354 = vmatprep.subr.mxu0 0.0
        %1355 = vmatpush1.msra.mxu0 0.0
        %1356 = vmatprep.subr.mxu0 0.0
        %1357 = vmatpush1.msra.mxu0 0.0
        %1358 = vmatprep.subr.mxu0 0.0
        %1359 = vmatpush1.msra.mxu0 0.0
        %1360 = vmatprep.subr.mxu0 0.0
        %1361 = vmatpush1.msra.mxu0 0.0
        %1362 = vmatprep.subr.mxu0 0.0
        %1363 = vmatpush1.msra.mxu0 0.0
        %1364 = vmatprep.subr.mxu0 0.0
        %1365 = vmatpush1.msra.mxu0 0.0
        %1366 = vmatprep.subr.mxu0 0.0
        %1367 = vmatpush1.msra.mxu0 0.0
        %1368 = vmatprep.subr.mxu0 0.0
        %1369 = vmatpush1.msra.mxu0 0.0
        %1370 = vmatprep.subr.mxu0 0.0
        %1371 = vmatpush1.msra.mxu0 0.0
        %1372 = vmatprep.subr.mxu0 0.0
        %1373 = vmatpush1.msra.mxu0 0.0
        %1374 = vmatprep.subr.mxu0 0.0
        %1375 = vmatpush1.msra.mxu0 0.0
        %1376 = vmatprep.subr.mxu0 0.0
        %1377 = vmatpush1.msra.mxu0 0.0
        %1378 = vmatprep.subr.mxu0 0.0
        %1379 = vmatpush1.msra.mxu0 0.0
        %1380 = vmatprep.subr.mxu0 0.0
        %1381 = vmatpush1.msra.mxu0 0.0
        %1382 = vmatprep.mubr.f32.mxu0 0.0
        %1383 = vmatmul.mubr.f32.gmra.mrb[0].mxu0 %v1141
        %v1384 = vpop.f32.mrb[0].mxu0
        %v1385 = vadd.f32 0.0, %v1384
        %v1386 = vpop.f32.mrb[0].mxu0
        %v1387 = vadd.f32 0.0, %v1386
        %1388 = vmatprep.mubr.f32.mxu0 0.0
        %1389 = vmatmul.mubr.f32.gmra.mrb[0].mxu0 %v1144
        %v1390 = vpop.f32.mrb[0].mxu0
        %v1391 = vadd.f32 0.0, %v1390
        %v1392 = vpop.f32.mrb[0].mxu0
        %v1393 = vadd.f32 0.0, %v1392
        %1394 = vdwg.mxu0
        %1395 = vmatprep.subr.mxu0 %v1160
        %1396 = vmatpush1.msra.mxu0 %v1158
        %1397 = vmatprep.subr.mxu0 0.0
        %1398 = vmatpush1.msra.mxu0 0.0
        %1399 = vmatprep.subr.mxu0 0.0
        %1400 = vmatpush1.msra.mxu0 0.0
        %1401 = vmatprep.subr.mxu0 0.0
        %1402 = vmatpush1.msra.mxu0 0.0
        %1403 = vmatprep.subr.mxu0 0.0
        %1404 = vmatpush1.msra.mxu0 0.0
        %1405 = vmatprep.subr.mxu0 0.0
        %1406 = vmatpush1.msra.mxu0 0.0
        %1407 = vmatprep.subr.mxu0 0.0
        %1408 = vmatpush1.msra.mxu0 0.0
        %1409 = vmatprep.subr.mxu0 0.0
        %1410 = vmatpush1.msra.mxu0 0.0
        %1411 = vmatprep.subr.mxu0 0.0
        %1412 = vmatpush1.msra.mxu0 0.0
        %1413 = vmatprep.subr.mxu0 0.0
        %1414 = vmatpush1.msra.mxu0 0.0
        %1415 = vmatprep.subr.mxu0 0.0
        %1416 = vmatpush1.msra.mxu0 0.0
        %1417 = vmatprep.subr.mxu0 0.0
        %1418 = vmatpush1.msra.mxu0 0.0
        %1419 = vmatprep.subr.mxu0 0.0
        %1420 = vmatpush1.msra.mxu0 0.0
        %1421 = vmatprep.subr.mxu0 0.0
        %1422 = vmatpush1.msra.mxu0 0.0
        %1423 = vmatprep.subr.mxu0 0.0
        %1424 = vmatpush1.msra.mxu0 0.0
        %1425 = vmatprep.subr.mxu0 0.0
        %1426 = vmatpush1.msra.mxu0 0.0
        %1427 = vmatprep.subr.mxu0 0.0
        %1428 = vmatpush1.msra.mxu0 0.0
        %1429 = vmatprep.subr.mxu0 0.0
        %1430 = vmatpush1.msra.mxu0 0.0
        %1431 = vmatprep.subr.mxu0 0.0
        %1432 = vmatpush1.msra.mxu0 0.0
        %1433 = vmatprep.subr.mxu0 0.0
        %1434 = vmatpush1.msra.mxu0 0.0
        %1435 = vmatprep.subr.mxu0 0.0
        %1436 = vmatpush1.msra.mxu0 0.0
        %1437 = vmatprep.subr.mxu0 0.0
        %1438 = vmatpush1.msra.mxu0 0.0
        %1439 = vmatprep.subr.mxu0 0.0
        %1440 = vmatpush1.msra.mxu0 0.0
        %1441 = vmatprep.subr.mxu0 0.0
        %1442 = vmatpush1.msra.mxu0 0.0
        %1443 = vmatprep.subr.mxu0 0.0
        %1444 = vmatpush1.msra.mxu0 0.0
        %1445 = vmatprep.subr.mxu0 0.0
        %1446 = vmatpush1.msra.mxu0 0.0
        %1447 = vmatprep.subr.mxu0 0.0
        %1448 = vmatpush1.msra.mxu0 0.0
        %1449 = vmatprep.subr.mxu0 0.0
        %1450 = vmatpush1.msra.mxu0 0.0
        %1451 = vmatprep.subr.mxu0 0.0
        %1452 = vmatpush1.msra.mxu0 0.0
        %1453 = vmatprep.subr.mxu0 0.0
        %1454 = vmatpush1.msra.mxu0 0.0
        %1455 = vmatprep.subr.mxu0 0.0
        %1456 = vmatpush1.msra.mxu0 0.0
        %1457 = vmatprep.subr.mxu0 0.0
        %1458 = vmatpush1.msra.mxu0 0.0
        %1459 = vmatprep.mubr.f32.mxu0 0.0
        %1460 = vmatmul.mubr.f32.gmra.mrb[0].mxu0 %v1141
        %v1461 = vpop.f32.mrb[0].mxu0
        %v1462 = vadd.f32 0.0, %v1461
        %v1463 = vpop.f32.mrb[0].mxu0
        %v1464 = vadd.f32 0.0, %v1463
        %1465 = vmatprep.mubr.f32.mxu0 0.0
        %1466 = vmatmul.mubr.f32.gmra.mrb[0].mxu0 %v1144
        %v1467 = vpop.f32.mrb[0].mxu0
        %v1468 = vadd.f32 0.0, %v1467
        %v1469 = vpop.f32.mrb[0].mxu0
        %v1470 = vadd.f32 0.0, %v1469
        %1471 = vdwg.mxu0
        %1472 = vmatprep.subr.mxu0 0.0
        %1473 = vmatpush1.msra.mxu0 %v1162
        %1474 = vmatprep.subr.mxu0 0.0
        %1475 = vmatpush1.msra.mxu0 0.0
        %1476 = vmatprep.subr.mxu0 0.0
        %1477 = vmatpush1.msra.mxu0 0.0
        %1478 = vmatprep.subr.mxu0 0.0
        %1479 = vmatpush1.msra.mxu0 0.0
        %1480 = vmatprep.subr.mxu0 0.0
        %1481 = vmatpush1.msra.mxu0 0.0
        %1482 = vmatprep.subr.mxu0 0.0
        %1483 = vmatpush1.msra.mxu0 0.0
        %1484 = vmatprep.subr.mxu0 0.0
        %1485 = vmatpush1.msra.mxu0 0.0
        %1486 = vmatprep.subr.mxu0 0.0
        %1487 = vmatpush1.msra.mxu0 0.0
        %1488 = vmatprep.subr.mxu0 0.0
        %1489 = vmatpush1.msra.mxu0 0.0
        %1490 = vmatprep.subr.mxu0 0.0
        %1491 = vmatpush1.msra.mxu0 0.0
        %1492 = vmatprep.subr.mxu0 0.0
        %1493 = vmatpush1.msra.mxu0 0.0
        %1494 = vmatprep.subr.mxu0 0.0
        %1495 = vmatpush1.msra.mxu0 0.0
        %1496 = vmatprep.subr.mxu0 0.0
        %1497 = vmatpush1.msra.mxu0 0.0
        %1498 = vmatprep.subr.mxu0 0.0
        %1499 = vmatpush1.msra.mxu0 0.0
        %1500 = vmatprep.subr.mxu0 0.0
        %1501 = vmatpush1.msra.mxu0 0.0
        %1502 = vmatprep.subr.mxu0 0.0
        %1503 = vmatpush1.msra.mxu0 0.0
        %1504 = vmatprep.subr.mxu0 0.0
        %1505 = vmatpush1.msra.mxu0 0.0
        %1506 = vmatprep.subr.mxu0 0.0
        %1507 = vmatpush1.msra.mxu0 0.0
        %1508 = vmatprep.subr.mxu0 0.0
        %1509 = vmatpush1.msra.mxu0 0.0
        %1510 = vmatprep.subr.mxu0 0.0
        %1511 = vmatpush1.msra.mxu0 0.0
        %1512 = vmatprep.subr.mxu0 0.0
        %1513 = vmatpush1.msra.mxu0 0.0
        %1514 = vmatprep.subr.mxu0 0.0
        %1515 = vmatpush1.msra.mxu0 0.0
        %1516 = vmatprep.subr.mxu0 0.0
        %1517 = vmatpush1.msra.mxu0 0.0
        %1518 = vmatprep.subr.mxu0 0.0
        %1519 = vmatpush1.msra.mxu0 0.0
        %1520 = vmatprep.subr.mxu0 0.0
        %1521 = vmatpush1.msra.mxu0 0.0
        %1522 = vmatprep.subr.mxu0 0.0
        %1523 = vmatpush1.msra.mxu0 0.0
        %1524 = vmatprep.subr.mxu0 0.0
        %1525 = vmatpush1.msra.mxu0 0.0
        %1526 = vmatprep.subr.mxu0 0.0
        %1527 = vmatpush1.msra.mxu0 0.0
        %1528 = vmatprep.subr.mxu0 0.0
        %1529 = vmatpush1.msra.mxu0 0.0
        %1530 = vmatprep.subr.mxu0 0.0
        %1531 = vmatpush1.msra.mxu0 0.0
        %1532 = vmatprep.subr.mxu0 0.0
        %1533 = vmatpush1.msra.mxu0 0.0
        %1534 = vmatprep.subr.mxu0 0.0
        %1535 = vmatpush1.msra.mxu0 0.0
        %1536 = vmatprep.mubr.f32.mxu0 0.0
        %1537 = vmatmul.mubr.f32.gmra.mrb[0].mxu0 %v1141
        %v1538 = vpop.f32.mrb[0].mxu0
        %v1539 = vadd.f32 0.0, %v1538
        %v1540 = vpop.f32.mrb[0].mxu0
        %1541 = vmatprep.mubr.f32.mxu0 0.0
        %1542 = vmatmul.mubr.f32.gmra.mrb[0].mxu0 %v1144
        %v1543 = vpop.f32.mrb[0].mxu0
        %v1544 = vadd.f32 0.0, %v1543
        %v1545 = vpop.f32.mrb[0].mxu0
        %1546 = vdwg.mxu0
        %v1547 = vadd.f32 %v780, %v1231
        %v1548 = vadd.f32 %v782, %v1233
        %v1549 = vadd.f32 %v857, %v1308
        %v1550 = vadd.f32 %v859, %v1310
        %v1551 = vadd.f32 %v934, %v1385
        %v1552 = vadd.f32 %v936, %v1387
        %v1553 = vadd.f32 %v1011, %v1462
        %v1554 = vadd.f32 %v1013, %v1464
        %v1555 = vadd.f32 %v1088, %v1539
        %v1556 = vadd.f32 %v786, %v1237
        %v1557 = vadd.f32 %v788, %v1239
        %v1558 = vadd.f32 %v863, %v1314
        %v1559 = vadd.f32 %v865, %v1316
        %v1560 = vadd.f32 %v940, %v1391
        %v1561 = vadd.f32 %v942, %v1393
        %v1562 = vadd.f32 %v1017, %v1468
        %v1563 = vadd.f32 %v1019, %v1470
        %v1564 = vadd.f32 %v1093, %v1544
        %v1565 = vld [vmem:[%s229] sm:$0xff]
        %v1566 = vld [vmem:[%s229 + $0x8] sm:$0xff]
        %v1567 = vld [vmem:[%s229 + $0x10] sm:$0xff]
        %v1568 = vld [vmem:[%s229 + $0x18] sm:$0xff]
        %v1569 = vld [vmem:[%s229 + $0x20] sm:$0xf]
        %s1570 = scalar_lea.vmem %s1, 48
        %v1571 = vld [vmem:[%s1570] sm:$0xff]
        %v1572 = vld [vmem:[%s1570 + $0x8] sm:$0xff]
        %v1578 = vcombine.high %v1565, %v1565
        %v1579 = vcombine.high %v1566, %v1566
        %v1580 = vcombine.high %v1567, %v1567
        %v1581 = vcombine.high %v1568, %v1568
        %1582 = vrot.lane.b32.xlu0 %v1565, 94
        %v1583 = vpop.permute.xlu0 %1582
        %1584 = vrot.lane.b32.xlu0 %v1578, 94
        %v1585 = vpop.permute.xlu0 %1584
        %1586 = vrot.lane.b32.xlu0 %v1566, 94
        %v1587 = vpop.permute.xlu0 %1586
        %1588 = vrot.lane.b32.xlu0 %v1579, 94
        %v1589 = vpop.permute.xlu0 %1588
        %1590 = vrot.lane.b32.xlu0 %v1567, 94
        %v1591 = vpop.permute.xlu0 %1590
        %1592 = vrot.lane.b32.xlu0 %v1580, 94
        %v1593 = vpop.permute.xlu0 %1592
        %1594 = vrot.lane.b32.xlu0 %v1568, 94
        %v1595 = vpop.permute.xlu0 %1594
        %1596 = vrot.lane.b32.xlu0 %v1581, 94
        %v1597 = vpop.permute.xlu0 %1596
        %1598 = vrot.lane.b32.xlu0 %v1569, 94
        %v1599 = vpop.permute.xlu0 %1598
        %vm1600 = vcmask 769024
        %v1601 = vsel %vm1600, %v1583, %v1585
        %v1602 = vsel %vm1600, %v1585, %v1587
        %v1603 = vsel %vm1600, %v1587, %v1589
        %v1604 = vsel %vm1600, %v1589, %v1591
        %v1605 = vsel %vm1600, %v1591, %v1593
        %v1606 = vsel %vm1600, %v1593, %v1595
        %v1607 = vsel %vm1600, %v1595, %v1597
        %v1608 = vsel %vm1600, %v1597, %v1599
        %v1610 = vsel %vm280, %v1571, 0
        %v1613 = vsel %vm280, %v1572, 0
        %v1615 = vsel %vm287, %v1601, 0
        %v1617 = vsel %vm287, %v1602, 0
        %v1619 = vsel %vm287, %v1603, 0
        %v1621 = vsel %vm287, %v1604, 0
        %v1623 = vsel %vm287, %v1605, 0
        %v1625 = vsel %vm287, %v1606, 0
        %v1627 = vsel %vm287, %v1607, 0
        %v1629 = vsel %vm287, %v1608, 0
        %v1631 = vsel %vm287, %v1599, 0
        %1633 = vmatprep.subr.mxu0 %v1617
        %1634 = vmatpush1.msra.mxu0 %v1615
        %1635 = vmatprep.subr.mxu0 0.0
        %1636 = vmatpush1.msra.mxu0 0.0
        %1637 = vmatprep.subr.mxu0 0.0
        %1638 = vmatpush1.msra.mxu0 0.0
        %1639 = vmatprep.subr.mxu0 0.0
        %1640 = vmatpush1.msra.mxu0 0.0
        %1641 = vmatprep.subr.mxu0 0.0
        %1642 = vmatpush1.msra.mxu0 0.0
        %1643 = vmatprep.subr.mxu0 0.0
        %1644 = vmatpush1.msra.mxu0 0.0
        %1645 = vmatprep.subr.mxu0 0.0
        %1646 = vmatpush1.msra.mxu0 0.0
        %1647 = vmatprep.subr.mxu0 0.0
        %1648 = vmatpush1.msra.mxu0 0.0
        %1649 = vmatprep.subr.mxu0 0.0
        %1650 = vmatpush1.msra.mxu0 0.0
        %1651 = vmatprep.subr.mxu0 0.0
        %1652 = vmatpush1.msra.mxu0 0.0
        %1653 = vmatprep.subr.mxu0 0.0
        %1654 = vmatpush1.msra.mxu0 0.0
        %1655 = vmatprep.subr.mxu0 0.0
        %1656 = vmatpush1.msra.mxu0 0.0
        %1657 = vmatprep.subr.mxu0 0.0
        %1658 = vmatpush1.msra.mxu0 0.0
        %1659 = vmatprep.subr.mxu0 0.0
        %1660 = vmatpush1.msra.mxu0 0.0
        %1661 = vmatprep.subr.mxu0 0.0
        %1662 = vmatpush1.msra.mxu0 0.0
        %1663 = vmatprep.subr.mxu0 0.0
        %1664 = vmatpush1.msra.mxu0 0.0
        %1665 = vmatprep.subr.mxu0 0.0
        %1666 = vmatpush1.msra.mxu0 0.0
        %1667 = vmatprep.subr.mxu0 0.0
        %1668 = vmatpush1.msra.mxu0 0.0
        %1669 = vmatprep.subr.mxu0 0.0
        %1670 = vmatpush1.msra.mxu0 0.0
        %1671 = vmatprep.subr.mxu0 0.0
        %1672 = vmatpush1.msra.mxu0 0.0
        %1673 = vmatprep.subr.mxu0 0.0
        %1674 = vmatpush1.msra.mxu0 0.0
        %1675 = vmatprep.subr.mxu0 0.0
        %1676 = vmatpush1.msra.mxu0 0.0
        %1677 = vmatprep.subr.mxu0 0.0
        %1678 = vmatpush1.msra.mxu0 0.0
        %1679 = vmatprep.subr.mxu0 0.0
        %1680 = vmatpush1.msra.mxu0 0.0
        %1681 = vmatprep.subr.mxu0 0.0
        %1682 = vmatpush1.msra.mxu0 0.0
        %1683 = vmatprep.subr.mxu0 0.0
        %1684 = vmatpush1.msra.mxu0 0.0
        %1685 = vmatprep.subr.mxu0 0.0
        %1686 = vmatpush1.msra.mxu0 0.0
        %1687 = vmatprep.subr.mxu0 0.0
        %1688 = vmatpush1.msra.mxu0 0.0
        %1689 = vmatprep.subr.mxu0 0.0
        %1690 = vmatpush1.msra.mxu0 0.0
        %1691 = vmatprep.subr.mxu0 0.0
        %1692 = vmatpush1.msra.mxu0 0.0
        %1693 = vmatprep.subr.mxu0 0.0
        %1694 = vmatpush1.msra.mxu0 0.0
        %1695 = vmatprep.subr.mxu0 0.0
        %1696 = vmatpush1.msra.mxu0 0.0
        %1697 = vmatprep.mubr.f32.mxu0 0.0
        %1698 = vmatmul.mubr.f32.gmra.mrb[0].mxu0 %v1610
        %v1699 = vpop.f32.mrb[0].mxu0
        %v1700 = vadd.f32 0.0, %v1699
        %v1701 = vpop.f32.mrb[0].mxu0
        %v1702 = vadd.f32 0.0, %v1701
        %1703 = vmatprep.mubr.f32.mxu0 0.0
        %1704 = vmatmul.mubr.f32.gmra.mrb[0].mxu0 %v1613
        %v1705 = vpop.f32.mrb[0].mxu0
        %v1706 = vadd.f32 0.0, %v1705
        %v1707 = vpop.f32.mrb[0].mxu0
        %v1708 = vadd.f32 0.0, %v1707
        %1709 = vdwg.mxu0
        %1710 = vmatprep.subr.mxu0 %v1621
        %1711 = vmatpush1.msra.mxu0 %v1619
        %1712 = vmatprep.subr.mxu0 0.0
        %1713 = vmatpush1.msra.mxu0 0.0
        %1714 = vmatprep.subr.mxu0 0.0
        %1715 = vmatpush1.msra.mxu0 0.0
        %1716 = vmatprep.subr.mxu0 0.0
        %1717 = vmatpush1.msra.mxu0 0.0
        %1718 = vmatprep.subr.mxu0 0.0
        %1719 = vmatpush1.msra.mxu0 0.0
        %1720 = vmatprep.subr.mxu0 0.0
        %1721 = vmatpush1.msra.mxu0 0.0
        %1722 = vmatprep.subr.mxu0 0.0
        %1723 = vmatpush1.msra.mxu0 0.0
        %1724 = vmatprep.subr.mxu0 0.0
        %1725 = vmatpush1.msra.mxu0 0.0
        %1726 = vmatprep.subr.mxu0 0.0
        %1727 = vmatpush1.msra.mxu0 0.0
        %1728 = vmatprep.subr.mxu0 0.0
        %1729 = vmatpush1.msra.mxu0 0.0
        %1730 = vmatprep.subr.mxu0 0.0
        %1731 = vmatpush1.msra.mxu0 0.0
        %1732 = vmatprep.subr.mxu0 0.0
        %1733 = vmatpush1.msra.mxu0 0.0
        %1734 = vmatprep.subr.mxu0 0.0
        %1735 = vmatpush1.msra.mxu0 0.0
        %1736 = vmatprep.subr.mxu0 0.0
        %1737 = vmatpush1.msra.mxu0 0.0
        %1738 = vmatprep.subr.mxu0 0.0
        %1739 = vmatpush1.msra.mxu0 0.0
        %1740 = vmatprep.subr.mxu0 0.0
        %1741 = vmatpush1.msra.mxu0 0.0
        %1742 = vmatprep.subr.mxu0 0.0
        %1743 = vmatpush1.msra.mxu0 0.0
        %1744 = vmatprep.subr.mxu0 0.0
        %1745 = vmatpush1.msra.mxu0 0.0
        %1746 = vmatprep.subr.mxu0 0.0
        %1747 = vmatpush1.msra.mxu0 0.0
        %1748 = vmatprep.subr.mxu0 0.0
        %1749 = vmatpush1.msra.mxu0 0.0
        %1750 = vmatprep.subr.mxu0 0.0
        %1751 = vmatpush1.msra.mxu0 0.0
        %1752 = vmatprep.subr.mxu0 0.0
        %1753 = vmatpush1.msra.mxu0 0.0
        %1754 = vmatprep.subr.mxu0 0.0
        %1755 = vmatpush1.msra.mxu0 0.0
        %1756 = vmatprep.subr.mxu0 0.0
        %1757 = vmatpush1.msra.mxu0 0.0
        %1758 = vmatprep.subr.mxu0 0.0
        %1759 = vmatpush1.msra.mxu0 0.0
        %1760 = vmatprep.subr.mxu0 0.0
        %1761 = vmatpush1.msra.mxu0 0.0
        %1762 = vmatprep.subr.mxu0 0.0
        %1763 = vmatpush1.msra.mxu0 0.0
        %1764 = vmatprep.subr.mxu0 0.0
        %1765 = vmatpush1.msra.mxu0 0.0
        %1766 = vmatprep.subr.mxu0 0.0
        %1767 = vmatpush1.msra.mxu0 0.0
        %1768 = vmatprep.subr.mxu0 0.0
        %1769 = vmatpush1.msra.mxu0 0.0
        %1770 = vmatprep.subr.mxu0 0.0
        %1771 = vmatpush1.msra.mxu0 0.0
        %1772 = vmatprep.subr.mxu0 0.0
        %1773 = vmatpush1.msra.mxu0 0.0
        %1774 = vmatprep.mubr.f32.mxu0 0.0
        %1775 = vmatmul.mubr.f32.gmra.mrb[0].mxu0 %v1610
        %v1776 = vpop.f32.mrb[0].mxu0
        %v1777 = vadd.f32 0.0, %v1776
        %v1778 = vpop.f32.mrb[0].mxu0
        %v1779 = vadd.f32 0.0, %v1778
        %1780 = vmatprep.mubr.f32.mxu0 0.0
        %1781 = vmatmul.mubr.f32.gmra.mrb[0].mxu0 %v1613
        %v1782 = vpop.f32.mrb[0].mxu0
        %v1783 = vadd.f32 0.0, %v1782
        %v1784 = vpop.f32.mrb[0].mxu0
        %v1785 = vadd.f32 0.0, %v1784
        %1786 = vdwg.mxu0
        %1787 = vmatprep.subr.mxu0 %v1625
        %1788 = vmatpush1.msra.mxu0 %v1623
        %1789 = vmatprep.subr.mxu0 0.0
        %1790 = vmatpush1.msra.mxu0 0.0
        %1791 = vmatprep.subr.mxu0 0.0
        %1792 = vmatpush1.msra.mxu0 0.0
        %1793 = vmatprep.subr.mxu0 0.0
        %1794 = vmatpush1.msra.mxu0 0.0
        %1795 = vmatprep.subr.mxu0 0.0
        %1796 = vmatpush1.msra.mxu0 0.0
        %1797 = vmatprep.subr.mxu0 0.0
        %1798 = vmatpush1.msra.mxu0 0.0
        %1799 = vmatprep.subr.mxu0 0.0
        %1800 = vmatpush1.msra.mxu0 0.0
        %1801 = vmatprep.subr.mxu0 0.0
        %1802 = vmatpush1.msra.mxu0 0.0
        %1803 = vmatprep.subr.mxu0 0.0
        %1804 = vmatpush1.msra.mxu0 0.0
        %1805 = vmatprep.subr.mxu0 0.0
        %1806 = vmatpush1.msra.mxu0 0.0
        %1807 = vmatprep.subr.mxu0 0.0
        %1808 = vmatpush1.msra.mxu0 0.0
        %1809 = vmatprep.subr.mxu0 0.0
        %1810 = vmatpush1.msra.mxu0 0.0
        %1811 = vmatprep.subr.mxu0 0.0
        %1812 = vmatpush1.msra.mxu0 0.0
        %1813 = vmatprep.subr.mxu0 0.0
        %1814 = vmatpush1.msra.mxu0 0.0
        %1815 = vmatprep.subr.mxu0 0.0
        %1816 = vmatpush1.msra.mxu0 0.0
        %1817 = vmatprep.subr.mxu0 0.0
        %1818 = vmatpush1.msra.mxu0 0.0
        %1819 = vmatprep.subr.mxu0 0.0
        %1820 = vmatpush1.msra.mxu0 0.0
        %1821 = vmatprep.subr.mxu0 0.0
        %1822 = vmatpush1.msra.mxu0 0.0
        %1823 = vmatprep.subr.mxu0 0.0
        %1824 = vmatpush1.msra.mxu0 0.0
        %1825 = vmatprep.subr.mxu0 0.0
        %1826 = vmatpush1.msra.mxu0 0.0
        %1827 = vmatprep.subr.mxu0 0.0
        %1828 = vmatpush1.msra.mxu0 0.0
        %1829 = vmatprep.subr.mxu0 0.0
        %1830 = vmatpush1.msra.mxu0 0.0
        %1831 = vmatprep.subr.mxu0 0.0
        %1832 = vmatpush1.msra.mxu0 0.0
        %1833 = vmatprep.subr.mxu0 0.0
        %1834 = vmatpush1.msra.mxu0 0.0
        %1835 = vmatprep.subr.mxu0 0.0
        %1836 = vmatpush1.msra.mxu0 0.0
        %1837 = vmatprep.subr.mxu0 0.0
        %1838 = vmatpush1.msra.mxu0 0.0
        %1839 = vmatprep.subr.mxu0 0.0
        %1840 = vmatpush1.msra.mxu0 0.0
        %1841 = vmatprep.subr.mxu0 0.0
        %1842 = vmatpush1.msra.mxu0 0.0
        %1843 = vmatprep.subr.mxu0 0.0
        %1844 = vmatpush1.msra.mxu0 0.0
        %1845 = vmatprep.subr.mxu0 0.0
        %1846 = vmatpush1.msra.mxu0 0.0
        %1847 = vmatprep.subr.mxu0 0.0
        %1848 = vmatpush1.msra.mxu0 0.0
        %1849 = vmatprep.subr.mxu0 0.0
        %1850 = vmatpush1.msra.mxu0 0.0
        %1851 = vmatprep.mubr.f32.mxu0 0.0
        %1852 = vmatmul.mubr.f32.gmra.mrb[0].mxu0 %v1610
        %v1853 = vpop.f32.mrb[0].mxu0
        %v1854 = vadd.f32 0.0, %v1853
        %v1855 = vpop.f32.mrb[0].mxu0
        %v1856 = vadd.f32 0.0, %v1855
        %1857 = vmatprep.mubr.f32.mxu0 0.0
        %1858 = vmatmul.mubr.f32.gmra.mrb[0].mxu0 %v1613
        %v1859 = vpop.f32.mrb[0].mxu0
        %v1860 = vadd.f32 0.0, %v1859
        %v1861 = vpop.f32.mrb[0].mxu0
        %v1862 = vadd.f32 0.0, %v1861
        %1863 = vdwg.mxu0
        %1864 = vmatprep.subr.mxu0 %v1629
        %1865 = vmatpush1.msra.mxu0 %v1627
        %1866 = vmatprep.subr.mxu0 0.0
        %1867 = vmatpush1.msra.mxu0 0.0
        %1868 = vmatprep.subr.mxu0 0.0
        %1869 = vmatpush1.msra.mxu0 0.0
        %1870 = vmatprep.subr.mxu0 0.0
        %1871 = vmatpush1.msra.mxu0 0.0
        %1872 = vmatprep.subr.mxu0 0.0
        %1873 = vmatpush1.msra.mxu0 0.0
        %1874 = vmatprep.subr.mxu0 0.0
        %1875 = vmatpush1.msra.mxu0 0.0
        %1876 = vmatprep.subr.mxu0 0.0
        %1877 = vmatpush1.msra.mxu0 0.0
        %1878 = vmatprep.subr.mxu0 0.0
        %1879 = vmatpush1.msra.mxu0 0.0
        %1880 = vmatprep.subr.mxu0 0.0
        %1881 = vmatpush1.msra.mxu0 0.0
        %1882 = vmatprep.subr.mxu0 0.0
        %1883 = vmatpush1.msra.mxu0 0.0
        %1884 = vmatprep.subr.mxu0 0.0
        %1885 = vmatpush1.msra.mxu0 0.0
        %1886 = vmatprep.subr.mxu0 0.0
        %1887 = vmatpush1.msra.mxu0 0.0
        %1888 = vmatprep.subr.mxu0 0.0
        %1889 = vmatpush1.msra.mxu0 0.0
        %1890 = vmatprep.subr.mxu0 0.0
        %1891 = vmatpush1.msra.mxu0 0.0
        %1892 = vmatprep.subr.mxu0 0.0
        %1893 = vmatpush1.msra.mxu0 0.0
        %1894 = vmatprep.subr.mxu0 0.0
        %1895 = vmatpush1.msra.mxu0 0.0
        %1896 = vmatprep.subr.mxu0 0.0
        %1897 = vmatpush1.msra.mxu0 0.0
        %1898 = vmatprep.subr.mxu0 0.0
        %1899 = vmatpush1.msra.mxu0 0.0
        %1900 = vmatprep.subr.mxu0 0.0
        %1901 = vmatpush1.msra.mxu0 0.0
        %1902 = vmatprep.subr.mxu0 0.0
        %1903 = vmatpush1.msra.mxu0 0.0
        %1904 = vmatprep.subr.mxu0 0.0
        %1905 = vmatpush1.msra.mxu0 0.0
        %1906 = vmatprep.subr.mxu0 0.0
        %1907 = vmatpush1.msra.mxu0 0.0
        %1908 = vmatprep.subr.mxu0 0.0
        %1909 = vmatpush1.msra.mxu0 0.0
        %1910 = vmatprep.subr.mxu0 0.0
        %1911 = vmatpush1.msra.mxu0 0.0
        %1912 = vmatprep.subr.mxu0 0.0
        %1913 = vmatpush1.msra.mxu0 0.0
        %1914 = vmatprep.subr.mxu0 0.0
        %1915 = vmatpush1.msra.mxu0 0.0
        %1916 = vmatprep.subr.mxu0 0.0
        %1917 = vmatpush1.msra.mxu0 0.0
        %1918 = vmatprep.subr.mxu0 0.0
        %1919 = vmatpush1.msra.mxu0 0.0
        %1920 = vmatprep.subr.mxu0 0.0
        %1921 = vmatpush1.msra.mxu0 0.0
        %1922 = vmatprep.subr.mxu0 0.0
        %1923 = vmatpush1.msra.mxu0 0.0
        %1924 = vmatprep.subr.mxu0 0.0
        %1925 = vmatpush1.msra.mxu0 0.0
        %1926 = vmatprep.subr.mxu0 0.0
        %1927 = vmatpush1.msra.mxu0 0.0
        %1928 = vmatprep.mubr.f32.mxu0 0.0
        %1929 = vmatmul.mubr.f32.gmra.mrb[0].mxu0 %v1610
        %v1930 = vpop.f32.mrb[0].mxu0
        %v1931 = vadd.f32 0.0, %v1930
        %v1932 = vpop.f32.mrb[0].mxu0
        %v1933 = vadd.f32 0.0, %v1932
        %1934 = vmatprep.mubr.f32.mxu0 0.0
        %1935 = vmatmul.mubr.f32.gmra.mrb[0].mxu0 %v1613
        %v1936 = vpop.f32.mrb[0].mxu0
        %v1937 = vadd.f32 0.0, %v1936
        %v1938 = vpop.f32.mrb[0].mxu0
        %v1939 = vadd.f32 0.0, %v1938
        %1940 = vdwg.mxu0
        %1941 = vmatprep.subr.mxu0 0.0
        %1942 = vmatpush1.msra.mxu0 %v1631
        %1943 = vmatprep.subr.mxu0 0.0
        %1944 = vmatpush1.msra.mxu0 0.0
        %1945 = vmatprep.subr.mxu0 0.0
        %1946 = vmatpush1.msra.mxu0 0.0
        %1947 = vmatprep.subr.mxu0 0.0
        %1948 = vmatpush1.msra.mxu0 0.0
        %1949 = vmatprep.subr.mxu0 0.0
        %1950 = vmatpush1.msra.mxu0 0.0
        %1951 = vmatprep.subr.mxu0 0.0
        %1952 = vmatpush1.msra.mxu0 0.0
        %1953 = vmatprep.subr.mxu0 0.0
        %1954 = vmatpush1.msra.mxu0 0.0
        %1955 = vmatprep.subr.mxu0 0.0
        %1956 = vmatpush1.msra.mxu0 0.0
        %1957 = vmatprep.subr.mxu0 0.0
        %1958 = vmatpush1.msra.mxu0 0.0
        %1959 = vmatprep.subr.mxu0 0.0
        %1960 = vmatpush1.msra.mxu0 0.0
        %1961 = vmatprep.subr.mxu0 0.0
        %1962 = vmatpush1.msra.mxu0 0.0
        %1963 = vmatprep.subr.mxu0 0.0
        %1964 = vmatpush1.msra.mxu0 0.0
        %1965 = vmatprep.subr.mxu0 0.0
        %1966 = vmatpush1.msra.mxu0 0.0
        %1967 = vmatprep.subr.mxu0 0.0
        %1968 = vmatpush1.msra.mxu0 0.0
        %1969 = vmatprep.subr.mxu0 0.0
        %1970 = vmatpush1.msra.mxu0 0.0
        %1971 = vmatprep.subr.mxu0 0.0
        %1972 = vmatpush1.msra.mxu0 0.0
        %1973 = vmatprep.subr.mxu0 0.0
        %1974 = vmatpush1.msra.mxu0 0.0
        %1975 = vmatprep.subr.mxu0 0.0
        %1976 = vmatpush1.msra.mxu0 0.0
        %1977 = vmatprep.subr.mxu0 0.0
        %1978 = vmatpush1.msra.mxu0 0.0
        %1979 = vmatprep.subr.mxu0 0.0
        %1980 = vmatpush1.msra.mxu0 0.0
        %1981 = vmatprep.subr.mxu0 0.0
        %1982 = vmatpush1.msra.mxu0 0.0
        %1983 = vmatprep.subr.mxu0 0.0
        %1984 = vmatpush1.msra.mxu0 0.0
        %1985 = vmatprep.subr.mxu0 0.0
        %1986 = vmatpush1.msra.mxu0 0.0
        %1987 = vmatprep.subr.mxu0 0.0
        %1988 = vmatpush1.msra.mxu0 0.0
        %1989 = vmatprep.subr.mxu0 0.0
        %1990 = vmatpush1.msra.mxu0 0.0
        %1991 = vmatprep.subr.mxu0 0.0
        %1992 = vmatpush1.msra.mxu0 0.0
        %1993 = vmatprep.subr.mxu0 0.0
        %1994 = vmatpush1.msra.mxu0 0.0
        %1995 = vmatprep.subr.mxu0 0.0
        %1996 = vmatpush1.msra.mxu0 0.0
        %1997 = vmatprep.subr.mxu0 0.0
        %1998 = vmatpush1.msra.mxu0 0.0
        %1999 = vmatprep.subr.mxu0 0.0
        %2000 = vmatpush1.msra.mxu0 0.0
        %2001 = vmatprep.subr.mxu0 0.0
        %2002 = vmatpush1.msra.mxu0 0.0
        %2003 = vmatprep.subr.mxu0 0.0
        %2004 = vmatpush1.msra.mxu0 0.0
        %2005 = vmatprep.mubr.f32.mxu0 0.0
        %2006 = vmatmul.mubr.f32.gmra.mrb[0].mxu0 %v1610
        %v2007 = vpop.f32.mrb[0].mxu0
        %v2008 = vadd.f32 0.0, %v2007
        %v2009 = vpop.f32.mrb[0].mxu0
        %2010 = vmatprep.mubr.f32.mxu0 0.0
        %2011 = vmatmul.mubr.f32.gmra.mrb[0].mxu0 %v1613
        %v2012 = vpop.f32.mrb[0].mxu0
        %v2013 = vadd.f32 0.0, %v2012
        %v2014 = vpop.f32.mrb[0].mxu0
        %2015 = vdwg.mxu0
        %v2016 = vadd.f32 %v1547, %v1700
        %v2017 = vadd.f32 %v1548, %v1702
        %v2018 = vadd.f32 %v1549, %v1777
        %v2019 = vadd.f32 %v1550, %v1779
        %v2020 = vadd.f32 %v1551, %v1854
        %v2021 = vadd.f32 %v1552, %v1856
        %v2022 = vadd.f32 %v1553, %v1931
        %v2023 = vadd.f32 %v1554, %v1933
        %v2024 = vadd.f32 %v1555, %v2008
        %v2025 = vadd.f32 %v1556, %v1706
        %v2026 = vadd.f32 %v1557, %v1708
        %v2027 = vadd.f32 %v1558, %v1783
        %v2028 = vadd.f32 %v1559, %v1785
        %v2029 = vadd.f32 %v1560, %v1860
        %v2030 = vadd.f32 %v1561, %v1862
        %v2031 = vadd.f32 %v1562, %v1937
        %v2032 = vadd.f32 %v1563, %v1939
        %v2033 = vadd.f32 %v1564, %v2013
        %v2034 = vld [vmem:[%s229] sm:$0xff]
        %v2035 = vld [vmem:[%s229 + $0x8] sm:$0xff]
        %v2036 = vld [vmem:[%s229 + $0x10] sm:$0xff]
        %v2037 = vld [vmem:[%s229 + $0x18] sm:$0xff]
        %v2038 = vld [vmem:[%s229 + $0x20] sm:$0xf]
        %s2039 = scalar_lea.vmem %s1, 64
        %v2040 = vld [vmem:[%s2039] sm:$0xff]
        %v2041 = vld [vmem:[%s2039 + $0x8] sm:$0xff]
        %v2047 = vcombine.high %v2034, %v2034
        %v2048 = vcombine.high %v2035, %v2035
        %v2049 = vcombine.high %v2036, %v2036
        %v2050 = vcombine.high %v2037, %v2037
        %2051 = vrot.lane.b32.xlu0 %v2034, 93
        %v2052 = vpop.permute.xlu0 %2051
        %2053 = vrot.lane.b32.xlu0 %v2047, 93
        %v2054 = vpop.permute.xlu0 %2053
        %2055 = vrot.lane.b32.xlu0 %v2035, 93
        %v2056 = vpop.permute.xlu0 %2055
        %2057 = vrot.lane.b32.xlu0 %v2048, 93
        %v2058 = vpop.permute.xlu0 %2057
        %2059 = vrot.lane.b32.xlu0 %v2036, 93
        %v2060 = vpop.permute.xlu0 %2059
        %2061 = vrot.lane.b32.xlu0 %v2049, 93
        %v2062 = vpop.permute.xlu0 %2061
        %2063 = vrot.lane.b32.xlu0 %v2037, 93
        %v2064 = vpop.permute.xlu0 %2063
        %2065 = vrot.lane.b32.xlu0 %v2050, 93
        %v2066 = vpop.permute.xlu0 %2065
        %2067 = vrot.lane.b32.xlu0 %v2038, 93
        %v2068 = vpop.permute.xlu0 %2067
        %vm2069 = vcmask 760832
        %v2070 = vsel %vm2069, %v2052, %v2054
        %v2071 = vsel %vm2069, %v2054, %v2056
        %v2072 = vsel %vm2069, %v2056, %v2058
        %v2073 = vsel %vm2069, %v2058, %v2060
        %v2074 = vsel %vm2069, %v2060, %v2062
        %v2075 = vsel %vm2069, %v2062, %v2064
        %v2076 = vsel %vm2069, %v2064, %v2066
        %v2077 = vsel %vm2069, %v2066, %v2068
        %v2079 = vsel %vm280, %v2040, 0
        %v2082 = vsel %vm280, %v2041, 0
        %v2084 = vsel %vm287, %v2070, 0
        %v2086 = vsel %vm287, %v2071, 0
        %v2088 = vsel %vm287, %v2072, 0
        %v2090 = vsel %vm287, %v2073, 0
        %v2092 = vsel %vm287, %v2074, 0
        %v2094 = vsel %vm287, %v2075, 0
        %v2096 = vsel %vm287, %v2076, 0
        %v2098 = vsel %vm287, %v2077, 0
        %v2100 = vsel %vm287, %v2068, 0
        %2102 = vmatprep.subr.mxu0 %v2086
        %2103 = vmatpush1.msra.mxu0 %v2084
        %2104 = vmatprep.subr.mxu0 0.0
        %2105 = vmatpush1.msra.mxu0 0.0
        %2106 = vmatprep.subr.mxu0 0.0
        %2107 = vmatpush1.msra.mxu0 0.0
        %2108 = vmatprep.subr.mxu0 0.0
        %2109 = vmatpush1.msra.mxu0 0.0
        %2110 = vmatprep.subr.mxu0 0.0
        %2111 = vmatpush1.msra.mxu0 0.0
        %2112 = vmatprep.subr.mxu0 0.0
        %2113 = vmatpush1.msra.mxu0 0.0
        %2114 = vmatprep.subr.mxu0 0.0
        %2115 = vmatpush1.msra.mxu0 0.0
        %2116 = vmatprep.subr.mxu0 0.0
        %2117 = vmatpush1.msra.mxu0 0.0
        %2118 = vmatprep.subr.mxu0 0.0
        %2119 = vmatpush1.msra.mxu0 0.0
        %2120 = vmatprep.subr.mxu0 0.0
        %2121 = vmatpush1.msra.mxu0 0.0
        %2122 = vmatprep.subr.mxu0 0.0
        %2123 = vmatpush1.msra.mxu0 0.0
        %2124 = vmatprep.subr.mxu0 0.0
        %2125 = vmatpush1.msra.mxu0 0.0
        %2126 = vmatprep.subr.mxu0 0.0
        %2127 = vmatpush1.msra.mxu0 0.0
        %2128 = vmatprep.subr.mxu0 0.0
        %2129 = vmatpush1.msra.mxu0 0.0
        %2130 = vmatprep.subr.mxu0 0.0
        %2131 = vmatpush1.msra.mxu0 0.0
        %2132 = vmatprep.subr.mxu0 0.0
        %2133 = vmatpush1.msra.mxu0 0.0
        %2134 = vmatprep.subr.mxu0 0.0
        %2135 = vmatpush1.msra.mxu0 0.0
        %2136 = vmatprep.subr.mxu0 0.0
        %2137 = vmatpush1.msra.mxu0 0.0
        %2138 = vmatprep.subr.mxu0 0.0
        %2139 = vmatpush1.msra.mxu0 0.0
        %2140 = vmatprep.subr.mxu0 0.0
        %2141 = vmatpush1.msra.mxu0 0.0
        %2142 = vmatprep.subr.mxu0 0.0
        %2143 = vmatpush1.msra.mxu0 0.0
        %2144 = vmatprep.subr.mxu0 0.0
        %2145 = vmatpush1.msra.mxu0 0.0
        %2146 = vmatprep.subr.mxu0 0.0
        %2147 = vmatpush1.msra.mxu0 0.0
        %2148 = vmatprep.subr.mxu0 0.0
        %2149 = vmatpush1.msra.mxu0 0.0
        %2150 = vmatprep.subr.mxu0 0.0
        %2151 = vmatpush1.msra.mxu0 0.0
        %2152 = vmatprep.subr.mxu0 0.0
        %2153 = vmatpush1.msra.mxu0 0.0
        %2154 = vmatprep.subr.mxu0 0.0
        %2155 = vmatpush1.msra.mxu0 0.0
        %2156 = vmatprep.subr.mxu0 0.0
        %2157 = vmatpush1.msra.mxu0 0.0
        %2158 = vmatprep.subr.mxu0 0.0
        %2159 = vmatpush1.msra.mxu0 0.0
        %2160 = vmatprep.subr.mxu0 0.0
        %2161 = vmatpush1.msra.mxu0 0.0
        %2162 = vmatprep.subr.mxu0 0.0
        %2163 = vmatpush1.msra.mxu0 0.0
        %2164 = vmatprep.subr.mxu0 0.0
        %2165 = vmatpush1.msra.mxu0 0.0
        %2166 = vmatprep.mubr.f32.mxu0 0.0
        %2167 = vmatmul.mubr.f32.gmra.mrb[0].mxu0 %v2079
        %v2168 = vpop.f32.mrb[0].mxu0
        %v2169 = vadd.f32 0.0, %v2168
        %v2170 = vpop.f32.mrb[0].mxu0
        %v2171 = vadd.f32 0.0, %v2170
        %2172 = vmatprep.mubr.f32.mxu0 0.0
        %2173 = vmatmul.mubr.f32.gmra.mrb[0].mxu0 %v2082
        %v2174 = vpop.f32.mrb[0].mxu0
        %v2175 = vadd.f32 0.0, %v2174
        %v2176 = vpop.f32.mrb[0].mxu0
        %v2177 = vadd.f32 0.0, %v2176
        %2178 = vdwg.mxu0
        %2179 = vmatprep.subr.mxu0 %v2090
        %2180 = vmatpush1.msra.mxu0 %v2088
        %2181 = vmatprep.subr.mxu0 0.0
        %2182 = vmatpush1.msra.mxu0 0.0
        %2183 = vmatprep.subr.mxu0 0.0
        %2184 = vmatpush1.msra.mxu0 0.0
        %2185 = vmatprep.subr.mxu0 0.0
        %2186 = vmatpush1.msra.mxu0 0.0
        %2187 = vmatprep.subr.mxu0 0.0
        %2188 = vmatpush1.msra.mxu0 0.0
        %2189 = vmatprep.subr.mxu0 0.0
        %2190 = vmatpush1.msra.mxu0 0.0
        %2191 = vmatprep.subr.mxu0 0.0
        %2192 = vmatpush1.msra.mxu0 0.0
        %2193 = vmatprep.subr.mxu0 0.0
        %2194 = vmatpush1.msra.mxu0 0.0
        %2195 = vmatprep.subr.mxu0 0.0
        %2196 = vmatpush1.msra.mxu0 0.0
        %2197 = vmatprep.subr.mxu0 0.0
        %2198 = vmatpush1.msra.mxu0 0.0
        %2199 = vmatprep.subr.mxu0 0.0
        %2200 = vmatpush1.msra.mxu0 0.0
        %2201 = vmatprep.subr.mxu0 0.0
        %2202 = vmatpush1.msra.mxu0 0.0
        %2203 = vmatprep.subr.mxu0 0.0
        %2204 = vmatpush1.msra.mxu0 0.0
        %2205 = vmatprep.subr.mxu0 0.0
        %2206 = vmatpush1.msra.mxu0 0.0
        %2207 = vmatprep.subr.mxu0 0.0
        %2208 = vmatpush1.msra.mxu0 0.0
        %2209 = vmatprep.subr.mxu0 0.0
        %2210 = vmatpush1.msra.mxu0 0.0
        %2211 = vmatprep.subr.mxu0 0.0
        %2212 = vmatpush1.msra.mxu0 0.0
        %2213 = vmatprep.subr.mxu0 0.0
        %2214 = vmatpush1.msra.mxu0 0.0
        %2215 = vmatprep.subr.mxu0 0.0
        %2216 = vmatpush1.msra.mxu0 0.0
        %2217 = vmatprep.subr.mxu0 0.0
        %2218 = vmatpush1.msra.mxu0 0.0
        %2219 = vmatprep.subr.mxu0 0.0
        %2220 = vmatpush1.msra.mxu0 0.0
        %2221 = vmatprep.subr.mxu0 0.0
        %2222 = vmatpush1.msra.mxu0 0.0
        %2223 = vmatprep.subr.mxu0 0.0
        %2224 = vmatpush1.msra.mxu0 0.0
        %2225 = vmatprep.subr.mxu0 0.0
        %2226 = vmatpush1.msra.mxu0 0.0
        %2227 = vmatprep.subr.mxu0 0.0
        %2228 = vmatpush1.msra.mxu0 0.0
        %2229 = vmatprep.subr.mxu0 0.0
        %2230 = vmatpush1.msra.mxu0 0.0
        %2231 = vmatprep.subr.mxu0 0.0
        %2232 = vmatpush1.msra.mxu0 0.0
        %2233 = vmatprep.subr.mxu0 0.0
        %2234 = vmatpush1.msra.mxu0 0.0
        %2235 = vmatprep.subr.mxu0 0.0
        %2236 = vmatpush1.msra.mxu0 0.0
        %2237 = vmatprep.subr.mxu0 0.0
        %2238 = vmatpush1.msra.mxu0 0.0
        %2239 = vmatprep.subr.mxu0 0.0
        %2240 = vmatpush1.msra.mxu0 0.0
        %2241 = vmatprep.subr.mxu0 0.0
        %2242 = vmatpush1.msra.mxu0 0.0
        %2243 = vmatprep.mubr.f32.mxu0 0.0
        %2244 = vmatmul.mubr.f32.gmra.mrb[0].mxu0 %v2079
        %v2245 = vpop.f32.mrb[0].mxu0
        %v2246 = vadd.f32 0.0, %v2245
        %v2247 = vpop.f32.mrb[0].mxu0
        %v2248 = vadd.f32 0.0, %v2247
        %2249 = vmatprep.mubr.f32.mxu0 0.0
        %2250 = vmatmul.mubr.f32.gmra.mrb[0].mxu0 %v2082
        %v2251 = vpop.f32.mrb[0].mxu0
        %v2252 = vadd.f32 0.0, %v2251
        %v2253 = vpop.f32.mrb[0].mxu0
        %v2254 = vadd.f32 0.0, %v2253
        %2255 = vdwg.mxu0
        %2256 = vmatprep.subr.mxu0 %v2094
        %2257 = vmatpush1.msra.mxu0 %v2092
        %2258 = vmatprep.subr.mxu0 0.0
        %2259 = vmatpush1.msra.mxu0 0.0
        %2260 = vmatprep.subr.mxu0 0.0
        %2261 = vmatpush1.msra.mxu0 0.0
        %2262 = vmatprep.subr.mxu0 0.0
        %2263 = vmatpush1.msra.mxu0 0.0
        %2264 = vmatprep.subr.mxu0 0.0
        %2265 = vmatpush1.msra.mxu0 0.0
        %2266 = vmatprep.subr.mxu0 0.0
        %2267 = vmatpush1.msra.mxu0 0.0
        %2268 = vmatprep.subr.mxu0 0.0
        %2269 = vmatpush1.msra.mxu0 0.0
        %2270 = vmatprep.subr.mxu0 0.0
        %2271 = vmatpush1.msra.mxu0 0.0
        %2272 = vmatprep.subr.mxu0 0.0
        %2273 = vmatpush1.msra.mxu0 0.0
        %2274 = vmatprep.subr.mxu0 0.0
        %2275 = vmatpush1.msra.mxu0 0.0
        %2276 = vmatprep.subr.mxu0 0.0
        %2277 = vmatpush1.msra.mxu0 0.0
        %2278 = vmatprep.subr.mxu0 0.0
        %2279 = vmatpush1.msra.mxu0 0.0
        %2280 = vmatprep.subr.mxu0 0.0
        %2281 = vmatpush1.msra.mxu0 0.0
        %2282 = vmatprep.subr.mxu0 0.0
        %2283 = vmatpush1.msra.mxu0 0.0
        %2284 = vmatprep.subr.mxu0 0.0
        %2285 = vmatpush1.msra.mxu0 0.0
        %2286 = vmatprep.subr.mxu0 0.0
        %2287 = vmatpush1.msra.mxu0 0.0
        %2288 = vmatprep.subr.mxu0 0.0
        %2289 = vmatpush1.msra.mxu0 0.0
        %2290 = vmatprep.subr.mxu0 0.0
        %2291 = vmatpush1.msra.mxu0 0.0
        %2292 = vmatprep.subr.mxu0 0.0
        %2293 = vmatpush1.msra.mxu0 0.0
        %2294 = vmatprep.subr.mxu0 0.0
        %2295 = vmatpush1.msra.mxu0 0.0
        %2296 = vmatprep.subr.mxu0 0.0
        %2297 = vmatpush1.msra.mxu0 0.0
        %2298 = vmatprep.subr.mxu0 0.0
        %2299 = vmatpush1.msra.mxu0 0.0
        %2300 = vmatprep.subr.mxu0 0.0
        %2301 = vmatpush1.msra.mxu0 0.0
        %2302 = vmatprep.subr.mxu0 0.0
        %2303 = vmatpush1.msra.mxu0 0.0
        %2304 = vmatprep.subr.mxu0 0.0
        %2305 = vmatpush1.msra.mxu0 0.0
        %2306 = vmatprep.subr.mxu0 0.0
        %2307 = vmatpush1.msra.mxu0 0.0
        %2308 = vmatprep.subr.mxu0 0.0
        %2309 = vmatpush1.msra.mxu0 0.0
        %2310 = vmatprep.subr.mxu0 0.0
        %2311 = vmatpush1.msra.mxu0 0.0
        %2312 = vmatprep.subr.mxu0 0.0
        %2313 = vmatpush1.msra.mxu0 0.0
        %2314 = vmatprep.subr.mxu0 0.0
        %2315 = vmatpush1.msra.mxu0 0.0
        %2316 = vmatprep.subr.mxu0 0.0
        %2317 = vmatpush1.msra.mxu0 0.0
        %2318 = vmatprep.subr.mxu0 0.0
        %2319 = vmatpush1.msra.mxu0 0.0
        %2320 = vmatprep.mubr.f32.mxu0 0.0
        %2321 = vmatmul.mubr.f32.gmra.mrb[0].mxu0 %v2079
        %v2322 = vpop.f32.mrb[0].mxu0
        %v2323 = vadd.f32 0.0, %v2322
        %v2324 = vpop.f32.mrb[0].mxu0
        %v2325 = vadd.f32 0.0, %v2324
        %2326 = vmatprep.mubr.f32.mxu0 0.0
        %2327 = vmatmul.mubr.f32.gmra.mrb[0].mxu0 %v2082
        %v2328 = vpop.f32.mrb[0].mxu0
        %v2329 = vadd.f32 0.0, %v2328
        %v2330 = vpop.f32.mrb[0].mxu0
        %v2331 = vadd.f32 0.0, %v2330
        %2332 = vdwg.mxu0
        %2333 = vmatprep.subr.mxu0 %v2098
        %2334 = vmatpush1.msra.mxu0 %v2096
        %2335 = vmatprep.subr.mxu0 0.0
        %2336 = vmatpush1.msra.mxu0 0.0
        %2337 = vmatprep.subr.mxu0 0.0
        %2338 = vmatpush1.msra.mxu0 0.0
        %2339 = vmatprep.subr.mxu0 0.0
        %2340 = vmatpush1.msra.mxu0 0.0
        %2341 = vmatprep.subr.mxu0 0.0
        %2342 = vmatpush1.msra.mxu0 0.0
        %2343 = vmatprep.subr.mxu0 0.0
        %2344 = vmatpush1.msra.mxu0 0.0
        %2345 = vmatprep.subr.mxu0 0.0
        %2346 = vmatpush1.msra.mxu0 0.0
        %2347 = vmatprep.subr.mxu0 0.0
        %2348 = vmatpush1.msra.mxu0 0.0
        %2349 = vmatprep.subr.mxu0 0.0
        %2350 = vmatpush1.msra.mxu0 0.0
        %2351 = vmatprep.subr.mxu0 0.0
        %2352 = vmatpush1.msra.mxu0 0.0
        %2353 = vmatprep.subr.mxu0 0.0
        %2354 = vmatpush1.msra.mxu0 0.0
        %2355 = vmatprep.subr.mxu0 0.0
        %2356 = vmatpush1.msra.mxu0 0.0
        %2357 = vmatprep.subr.mxu0 0.0
        %2358 = vmatpush1.msra.mxu0 0.0
        %2359 = vmatprep.subr.mxu0 0.0
        %2360 = vmatpush1.msra.mxu0 0.0
        %2361 = vmatprep.subr.mxu0 0.0
        %2362 = vmatpush1.msra.mxu0 0.0
        %2363 = vmatprep.subr.mxu0 0.0
        %2364 = vmatpush1.msra.mxu0 0.0
        %2365 = vmatprep.subr.mxu0 0.0
        %2366 = vmatpush1.msra.mxu0 0.0
        %2367 = vmatprep.subr.mxu0 0.0
        %2368 = vmatpush1.msra.mxu0 0.0
        %2369 = vmatprep.subr.mxu0 0.0
        %2370 = vmatpush1.msra.mxu0 0.0
        %2371 = vmatprep.subr.mxu0 0.0
        %2372 = vmatpush1.msra.mxu0 0.0
        %2373 = vmatprep.subr.mxu0 0.0
        %2374 = vmatpush1.msra.mxu0 0.0
        %2375 = vmatprep.subr.mxu0 0.0
        %2376 = vmatpush1.msra.mxu0 0.0
        %2377 = vmatprep.subr.mxu0 0.0
        %2378 = vmatpush1.msra.mxu0 0.0
        %2379 = vmatprep.subr.mxu0 0.0
        %2380 = vmatpush1.msra.mxu0 0.0
        %2381 = vmatprep.subr.mxu0 0.0
        %2382 = vmatpush1.msra.mxu0 0.0
        %2383 = vmatprep.subr.mxu0 0.0
        %2384 = vmatpush1.msra.mxu0 0.0
        %2385 = vmatprep.subr.mxu0 0.0
        %2386 = vmatpush1.msra.mxu0 0.0
        %2387 = vmatprep.subr.mxu0 0.0
        %2388 = vmatpush1.msra.mxu0 0.0
        %2389 = vmatprep.subr.mxu0 0.0
        %2390 = vmatpush1.msra.mxu0 0.0
        %2391 = vmatprep.subr.mxu0 0.0
        %2392 = vmatpush1.msra.mxu0 0.0
        %2393 = vmatprep.subr.mxu0 0.0
        %2394 = vmatpush1.msra.mxu0 0.0
        %2395 = vmatprep.subr.mxu0 0.0
        %2396 = vmatpush1.msra.mxu0 0.0
        %2397 = vmatprep.mubr.f32.mxu0 0.0
        %2398 = vmatmul.mubr.f32.gmra.mrb[0].mxu0 %v2079
        %v2399 = vpop.f32.mrb[0].mxu0
        %v2400 = vadd.f32 0.0, %v2399
        %v2401 = vpop.f32.mrb[0].mxu0
        %v2402 = vadd.f32 0.0, %v2401
        %2403 = vmatprep.mubr.f32.mxu0 0.0
        %2404 = vmatmul.mubr.f32.gmra.mrb[0].mxu0 %v2082
        %v2405 = vpop.f32.mrb[0].mxu0
        %v2406 = vadd.f32 0.0, %v2405
        %v2407 = vpop.f32.mrb[0].mxu0
        %v2408 = vadd.f32 0.0, %v2407
        %2409 = vdwg.mxu0
        %2410 = vmatprep.subr.mxu0 0.0
        %2411 = vmatpush1.msra.mxu0 %v2100
        %2412 = vmatprep.subr.mxu0 0.0
        %2413 = vmatpush1.msra.mxu0 0.0
        %2414 = vmatprep.subr.mxu0 0.0
        %2415 = vmatpush1.msra.mxu0 0.0
        %2416 = vmatprep.subr.mxu0 0.0
        %2417 = vmatpush1.msra.mxu0 0.0
        %2418 = vmatprep.subr.mxu0 0.0
        %2419 = vmatpush1.msra.mxu0 0.0
        %2420 = vmatprep.subr.mxu0 0.0
        %2421 = vmatpush1.msra.mxu0 0.0
        %2422 = vmatprep.subr.mxu0 0.0
        %2423 = vmatpush1.msra.mxu0 0.0
        %2424 = vmatprep.subr.mxu0 0.0
        %2425 = vmatpush1.msra.mxu0 0.0
        %2426 = vmatprep.subr.mxu0 0.0
        %2427 = vmatpush1.msra.mxu0 0.0
        %2428 = vmatprep.subr.mxu0 0.0
        %2429 = vmatpush1.msra.mxu0 0.0
        %2430 = vmatprep.subr.mxu0 0.0
        %2431 = vmatpush1.msra.mxu0 0.0
        %2432 = vmatprep.subr.mxu0 0.0
        %2433 = vmatpush1.msra.mxu0 0.0
        %2434 = vmatprep.subr.mxu0 0.0
        %2435 = vmatpush1.msra.mxu0 0.0
        %2436 = vmatprep.subr.mxu0 0.0
        %2437 = vmatpush1.msra.mxu0 0.0
        %2438 = vmatprep.subr.mxu0 0.0
        %2439 = vmatpush1.msra.mxu0 0.0
        %2440 = vmatprep.subr.mxu0 0.0
        %2441 = vmatpush1.msra.mxu0 0.0
        %2442 = vmatprep.subr.mxu0 0.0
        %2443 = vmatpush1.msra.mxu0 0.0
        %2444 = vmatprep.subr.mxu0 0.0
        %2445 = vmatpush1.msra.mxu0 0.0
        %2446 = vmatprep.subr.mxu0 0.0
        %2447 = vmatpush1.msra.mxu0 0.0
        %2448 = vmatprep.subr.mxu0 0.0
        %2449 = vmatpush1.msra.mxu0 0.0
        %2450 = vmatprep.subr.mxu0 0.0
        %2451 = vmatpush1.msra.mxu0 0.0
        %2452 = vmatprep.subr.mxu0 0.0
        %2453 = vmatpush1.msra.mxu0 0.0
        %2454 = vmatprep.subr.mxu0 0.0
        %2455 = vmatpush1.msra.mxu0 0.0
        %2456 = vmatprep.subr.mxu0 0.0
        %2457 = vmatpush1.msra.mxu0 0.0
        %2458 = vmatprep.subr.mxu0 0.0
        %2459 = vmatpush1.msra.mxu0 0.0
        %2460 = vmatprep.subr.mxu0 0.0
        %2461 = vmatpush1.msra.mxu0 0.0
        %2462 = vmatprep.subr.mxu0 0.0
        %2463 = vmatpush1.msra.mxu0 0.0
        %2464 = vmatprep.subr.mxu0 0.0
        %2465 = vmatpush1.msra.mxu0 0.0
        %2466 = vmatprep.subr.mxu0 0.0
        %2467 = vmatpush1.msra.mxu0 0.0
        %2468 = vmatprep.subr.mxu0 0.0
        %2469 = vmatpush1.msra.mxu0 0.0
        %2470 = vmatprep.subr.mxu0 0.0
        %2471 = vmatpush1.msra.mxu0 0.0
        %2472 = vmatprep.subr.mxu0 0.0
        %2473 = vmatpush1.msra.mxu0 0.0
        %2474 = vmatprep.mubr.f32.mxu0 0.0
        %2475 = vmatmul.mubr.f32.gmra.mrb[0].mxu0 %v2079
        %v2476 = vpop.f32.mrb[0].mxu0
        %v2477 = vadd.f32 0.0, %v2476
        %v2478 = vpop.f32.mrb[0].mxu0
        %2479 = vmatprep.mubr.f32.mxu0 0.0
        %2480 = vmatmul.mubr.f32.gmra.mrb[0].mxu0 %v2082
        %v2481 = vpop.f32.mrb[0].mxu0
        %v2482 = vadd.f32 0.0, %v2481
        %v2483 = vpop.f32.mrb[0].mxu0
        %2484 = vdwg.mxu0
        %v2485 = vadd.f32 %v2016, %v2169
        %v2486 = vadd.f32 %v2017, %v2171
        %v2487 = vadd.f32 %v2018, %v2246
        %v2488 = vadd.f32 %v2019, %v2248
        %v2489 = vadd.f32 %v2020, %v2323
        %v2490 = vadd.f32 %v2021, %v2325
        %v2491 = vadd.f32 %v2022, %v2400
        %v2492 = vadd.f32 %v2023, %v2402
        %v2493 = vadd.f32 %v2024, %v2477
        %v2494 = vadd.f32 %v2025, %v2175
        %v2495 = vadd.f32 %v2026, %v2177
        %v2496 = vadd.f32 %v2027, %v2252
        %v2497 = vadd.f32 %v2028, %v2254
        %v2498 = vadd.f32 %v2029, %v2329
        %v2499 = vadd.f32 %v2030, %v2331
        %v2500 = vadd.f32 %v2031, %v2406
        %v2501 = vadd.f32 %v2032, %v2408
        %v2502 = vadd.f32 %v2033, %v2482
        %v2503 = vld [vmem:[%s229] sm:$0xff]
        %v2504 = vld [vmem:[%s229 + $0x8] sm:$0xff]
        %v2505 = vld [vmem:[%s229 + $0x10] sm:$0xff]
        %v2506 = vld [vmem:[%s229 + $0x18] sm:$0xff]
        %v2507 = vld [vmem:[%s229 + $0x20] sm:$0xf]
        %s2508 = scalar_lea.vmem %s1, 80
        %v2509 = vld [vmem:[%s2508] sm:$0xff]
        %v2510 = vld [vmem:[%s2508 + $0x8] sm:$0xff]
        %v2516 = vcombine.high %v2503, %v2503
        %v2517 = vcombine.high %v2504, %v2504
        %v2518 = vcombine.high %v2505, %v2505
        %v2519 = vcombine.high %v2506, %v2506
        %2520 = vrot.lane.b32.xlu0 %v2503, 92
        %v2521 = vpop.permute.xlu0 %2520
        %2522 = vrot.lane.b32.xlu0 %v2516, 92
        %v2523 = vpop.permute.xlu0 %2522
        %2524 = vrot.lane.b32.xlu0 %v2504, 92
        %v2525 = vpop.permute.xlu0 %2524
        %2526 = vrot.lane.b32.xlu0 %v2517, 92
        %v2527 = vpop.permute.xlu0 %2526
        %2528 = vrot.lane.b32.xlu0 %v2505, 92
        %v2529 = vpop.permute.xlu0 %2528
        %2530 = vrot.lane.b32.xlu0 %v2518, 92
        %v2531 = vpop.permute.xlu0 %2530
        %2532 = vrot.lane.b32.xlu0 %v2506, 92
        %v2533 = vpop.permute.xlu0 %2532
        %2534 = vrot.lane.b32.xlu0 %v2519, 92
        %v2535 = vpop.permute.xlu0 %2534
        %2536 = vrot.lane.b32.xlu0 %v2507, 92
        %v2537 = vpop.permute.xlu0 %2536
        %vm2538 = vcmask 752640
        %v2539 = vsel %vm2538, %v2521, %v2523
        %v2540 = vsel %vm2538, %v2523, %v2525
        %v2541 = vsel %vm2538, %v2525, %v2527
        %v2542 = vsel %vm2538, %v2527, %v2529
        %v2543 = vsel %vm2538, %v2529, %v2531
        %v2544 = vsel %vm2538, %v2531, %v2533
        %v2545 = vsel %vm2538, %v2533, %v2535
        %v2546 = vsel %vm2538, %v2535, %v2537
        %v2548 = vsel %vm280, %v2509, 0
        %v2551 = vsel %vm280, %v2510, 0
        %v2553 = vsel %vm287, %v2539, 0
        %v2555 = vsel %vm287, %v2540, 0
        %v2557 = vsel %vm287, %v2541, 0
        %v2559 = vsel %vm287, %v2542, 0
        %v2561 = vsel %vm287, %v2543, 0
        %v2563 = vsel %vm287, %v2544, 0
        %v2565 = vsel %vm287, %v2545, 0
        %v2567 = vsel %vm287, %v2546, 0
        %v2569 = vsel %vm287, %v2537, 0
        %2571 = vmatprep.subr.mxu0 %v2555
        %2572 = vmatpush1.msra.mxu0 %v2553
        %2573 = vmatprep.subr.mxu0 0.0
        %2574 = vmatpush1.msra.mxu0 0.0
        %2575 = vmatprep.subr.mxu0 0.0
        %2576 = vmatpush1.msra.mxu0 0.0
        %2577 = vmatprep.subr.mxu0 0.0
        %2578 = vmatpush1.msra.mxu0 0.0
        %2579 = vmatprep.subr.mxu0 0.0
        %2580 = vmatpush1.msra.mxu0 0.0
        %2581 = vmatprep.subr.mxu0 0.0
        %2582 = vmatpush1.msra.mxu0 0.0
        %2583 = vmatprep.subr.mxu0 0.0
        %2584 = vmatpush1.msra.mxu0 0.0
        %2585 = vmatprep.subr.mxu0 0.0
        %2586 = vmatpush1.msra.mxu0 0.0
        %2587 = vmatprep.subr.mxu0 0.0
        %2588 = vmatpush1.msra.mxu0 0.0
        %2589 = vmatprep.subr.mxu0 0.0
        %2590 = vmatpush1.msra.mxu0 0.0
        %2591 = vmatprep.subr.mxu0 0.0
        %2592 = vmatpush1.msra.mxu0 0.0
        %2593 = vmatprep.subr.mxu0 0.0
        %2594 = vmatpush1.msra.mxu0 0.0
        %2595 = vmatprep.subr.mxu0 0.0
        %2596 = vmatpush1.msra.mxu0 0.0
        %2597 = vmatprep.subr.mxu0 0.0
        %2598 = vmatpush1.msra.mxu0 0.0
        %2599 = vmatprep.subr.mxu0 0.0
        %2600 = vmatpush1.msra.mxu0 0.0
        %2601 = vmatprep.subr.mxu0 0.0
        %2602 = vmatpush1.msra.mxu0 0.0
        %2603 = vmatprep.subr.mxu0 0.0
        %2604 = vmatpush1.msra.mxu0 0.0
        %2605 = vmatprep.subr.mxu0 0.0
        %2606 = vmatpush1.msra.mxu0 0.0
        %2607 = vmatprep.subr.mxu0 0.0
        %2608 = vmatpush1.msra.mxu0 0.0
        %2609 = vmatprep.subr.mxu0 0.0
        %2610 = vmatpush1.msra.mxu0 0.0
        %2611 = vmatprep.subr.mxu0 0.0
        %2612 = vmatpush1.msra.mxu0 0.0
        %2613 = vmatprep.subr.mxu0 0.0
        %2614 = vmatpush1.msra.mxu0 0.0
        %2615 = vmatprep.subr.mxu0 0.0
        %2616 = vmatpush1.msra.mxu0 0.0
        %2617 = vmatprep.subr.mxu0 0.0
        %2618 = vmatpush1.msra.mxu0 0.0
        %2619 = vmatprep.subr.mxu0 0.0
        %2620 = vmatpush1.msra.mxu0 0.0
        %2621 = vmatprep.subr.mxu0 0.0
        %2622 = vmatpush1.msra.mxu0 0.0
        %2623 = vmatprep.subr.mxu0 0.0
        %2624 = vmatpush1.msra.mxu0 0.0
        %2625 = vmatprep.subr.mxu0 0.0
        %2626 = vmatpush1.msra.mxu0 0.0
        %2627 = vmatprep.subr.mxu0 0.0
        %2628 = vmatpush1.msra.mxu0 0.0
        %2629 = vmatprep.subr.mxu0 0.0
        %2630 = vmatpush1.msra.mxu0 0.0
        %2631 = vmatprep.subr.mxu0 0.0
        %2632 = vmatpush1.msra.mxu0 0.0
        %2633 = vmatprep.subr.mxu0 0.0
        %2634 = vmatpush1.msra.mxu0 0.0
        %2635 = vmatprep.mubr.f32.mxu0 0.0
        %2636 = vmatmul.mubr.f32.gmra.mrb[0].mxu0 %v2548
        %v2637 = vpop.f32.mrb[0].mxu0
        %v2638 = vadd.f32 0.0, %v2637
        %v2639 = vpop.f32.mrb[0].mxu0
        %v2640 = vadd.f32 0.0, %v2639
        %2641 = vmatprep.mubr.f32.mxu0 0.0
        %2642 = vmatmul.mubr.f32.gmra.mrb[0].mxu0 %v2551
        %v2643 = vpop.f32.mrb[0].mxu0
        %v2644 = vadd.f32 0.0, %v2643
        %v2645 = vpop.f32.mrb[0].mxu0
        %v2646 = vadd.f32 0.0, %v2645
        %2647 = vdwg.mxu0
        %2648 = vmatprep.subr.mxu0 %v2559
        %2649 = vmatpush1.msra.mxu0 %v2557
        %2650 = vmatprep.subr.mxu0 0.0
        %2651 = vmatpush1.msra.mxu0 0.0
        %2652 = vmatprep.subr.mxu0 0.0
        %2653 = vmatpush1.msra.mxu0 0.0
        %2654 = vmatprep.subr.mxu0 0.0
        %2655 = vmatpush1.msra.mxu0 0.0
        %2656 = vmatprep.subr.mxu0 0.0
        %2657 = vmatpush1.msra.mxu0 0.0
        %2658 = vmatprep.subr.mxu0 0.0
        %2659 = vmatpush1.msra.mxu0 0.0
        %2660 = vmatprep.subr.mxu0 0.0
        %2661 = vmatpush1.msra.mxu0 0.0
        %2662 = vmatprep.subr.mxu0 0.0
        %2663 = vmatpush1.msra.mxu0 0.0
        %2664 = vmatprep.subr.mxu0 0.0
        %2665 = vmatpush1.msra.mxu0 0.0
        %2666 = vmatprep.subr.mxu0 0.0
        %2667 = vmatpush1.msra.mxu0 0.0
        %2668 = vmatprep.subr.mxu0 0.0
        %2669 = vmatpush1.msra.mxu0 0.0
        %2670 = vmatprep.subr.mxu0 0.0
        %2671 = vmatpush1.msra.mxu0 0.0
        %2672 = vmatprep.subr.mxu0 0.0
        %2673 = vmatpush1.msra.mxu0 0.0
        %2674 = vmatprep.subr.mxu0 0.0
        %2675 = vmatpush1.msra.mxu0 0.0
        %2676 = vmatprep.subr.mxu0 0.0
        %2677 = vmatpush1.msra.mxu0 0.0
        %2678 = vmatprep.subr.mxu0 0.0
        %2679 = vmatpush1.msra.mxu0 0.0
        %2680 = vmatprep.subr.mxu0 0.0
        %2681 = vmatpush1.msra.mxu0 0.0
        %2682 = vmatprep.subr.mxu0 0.0
        %2683 = vmatpush1.msra.mxu0 0.0
        %2684 = vmatprep.subr.mxu0 0.0
        %2685 = vmatpush1.msra.mxu0 0.0
        %2686 = vmatprep.subr.mxu0 0.0
        %2687 = vmatpush1.msra.mxu0 0.0
        %2688 = vmatprep.subr.mxu0 0.0
        %2689 = vmatpush1.msra.mxu0 0.0
        %2690 = vmatprep.subr.mxu0 0.0
        %2691 = vmatpush1.msra.mxu0 0.0
        %2692 = vmatprep.subr.mxu0 0.0
        %2693 = vmatpush1.msra.mxu0 0.0
        %2694 = vmatprep.subr.mxu0 0.0
        %2695 = vmatpush1.msra.mxu0 0.0
        %2696 = vmatprep.subr.mxu0 0.0
        %2697 = vmatpush1.msra.mxu0 0.0
        %2698 = vmatprep.subr.mxu0 0.0
        %2699 = vmatpush1.msra.mxu0 0.0
        %2700 = vmatprep.subr.mxu0 0.0
        %2701 = vmatpush1.msra.mxu0 0.0
        %2702 = vmatprep.subr.mxu0 0.0
        %2703 = vmatpush1.msra.mxu0 0.0
        %2704 = vmatprep.subr.mxu0 0.0
        %2705 = vmatpush1.msra.mxu0 0.0
        %2706 = vmatprep.subr.mxu0 0.0
        %2707 = vmatpush1.msra.mxu0 0.0
        %2708 = vmatprep.subr.mxu0 0.0
        %2709 = vmatpush1.msra.mxu0 0.0
        %2710 = vmatprep.subr.mxu0 0.0
        %2711 = vmatpush1.msra.mxu0 0.0
        %2712 = vmatprep.mubr.f32.mxu0 0.0
        %2713 = vmatmul.mubr.f32.gmra.mrb[0].mxu0 %v2548
        %v2714 = vpop.f32.mrb[0].mxu0
        %v2715 = vadd.f32 0.0, %v2714
        %v2716 = vpop.f32.mrb[0].mxu0
        %v2717 = vadd.f32 0.0, %v2716
        %2718 = vmatprep.mubr.f32.mxu0 0.0
        %2719 = vmatmul.mubr.f32.gmra.mrb[0].mxu0 %v2551
        %v2720 = vpop.f32.mrb[0].mxu0
        %v2721 = vadd.f32 0.0, %v2720
        %v2722 = vpop.f32.mrb[0].mxu0
        %v2723 = vadd.f32 0.0, %v2722
        %2724 = vdwg.mxu0
        %2725 = vmatprep.subr.mxu0 %v2563
        %2726 = vmatpush1.msra.mxu0 %v2561
        %2727 = vmatprep.subr.mxu0 0.0
        %2728 = vmatpush1.msra.mxu0 0.0
        %2729 = vmatprep.subr.mxu0 0.0
        %2730 = vmatpush1.msra.mxu0 0.0
        %2731 = vmatprep.subr.mxu0 0.0
        %2732 = vmatpush1.msra.mxu0 0.0
        %2733 = vmatprep.subr.mxu0 0.0
        %2734 = vmatpush1.msra.mxu0 0.0
        %2735 = vmatprep.subr.mxu0 0.0
        %2736 = vmatpush1.msra.mxu0 0.0
        %2737 = vmatprep.subr.mxu0 0.0
        %2738 = vmatpush1.msra.mxu0 0.0
        %2739 = vmatprep.subr.mxu0 0.0
        %2740 = vmatpush1.msra.mxu0 0.0
        %2741 = vmatprep.subr.mxu0 0.0
        %2742 = vmatpush1.msra.mxu0 0.0
        %2743 = vmatprep.subr.mxu0 0.0
        %2744 = vmatpush1.msra.mxu0 0.0
        %2745 = vmatprep.subr.mxu0 0.0
        %2746 = vmatpush1.msra.mxu0 0.0
        %2747 = vmatprep.subr.mxu0 0.0
        %2748 = vmatpush1.msra.mxu0 0.0
        %2749 = vmatprep.subr.mxu0 0.0
        %2750 = vmatpush1.msra.mxu0 0.0
        %2751 = vmatprep.subr.mxu0 0.0
        %2752 = vmatpush1.msra.mxu0 0.0
        %2753 = vmatprep.subr.mxu0 0.0
        %2754 = vmatpush1.msra.mxu0 0.0
        %2755 = vmatprep.subr.mxu0 0.0
        %2756 = vmatpush1.msra.mxu0 0.0
        %2757 = vmatprep.subr.mxu0 0.0
        %2758 = vmatpush1.msra.mxu0 0.0
        %2759 = vmatprep.subr.mxu0 0.0
        %2760 = vmatpush1.msra.mxu0 0.0
        %2761 = vmatprep.subr.mxu0 0.0
        %2762 = vmatpush1.msra.mxu0 0.0
        %2763 = vmatprep.subr.mxu0 0.0
        %2764 = vmatpush1.msra.mxu0 0.0
        %2765 = vmatprep.subr.mxu0 0.0
        %2766 = vmatpush1.msra.mxu0 0.0
        %2767 = vmatprep.subr.mxu0 0.0
        %2768 = vmatpush1.msra.mxu0 0.0
        %2769 = vmatprep.subr.mxu0 0.0
        %2770 = vmatpush1.msra.mxu0 0.0
        %2771 = vmatprep.subr.mxu0 0.0
        %2772 = vmatpush1.msra.mxu0 0.0
        %2773 = vmatprep.subr.mxu0 0.0
        %2774 = vmatpush1.msra.mxu0 0.0
        %2775 = vmatprep.subr.mxu0 0.0
        %2776 = vmatpush1.msra.mxu0 0.0
        %2777 = vmatprep.subr.mxu0 0.0
        %2778 = vmatpush1.msra.mxu0 0.0
        %2779 = vmatprep.subr.mxu0 0.0
        %2780 = vmatpush1.msra.mxu0 0.0
        %2781 = vmatprep.subr.mxu0 0.0
        %2782 = vmatpush1.msra.mxu0 0.0
        %2783 = vmatprep.subr.mxu0 0.0
        %2784 = vmatpush1.msra.mxu0 0.0
        %2785 = vmatprep.subr.mxu0 0.0
        %2786 = vmatpush1.msra.mxu0 0.0
        %2787 = vmatprep.subr.mxu0 0.0
        %2788 = vmatpush1.msra.mxu0 0.0
        %2789 = vmatprep.mubr.f32.mxu0 0.0
        %2790 = vmatmul.mubr.f32.gmra.mrb[0].mxu0 %v2548
        %v2791 = vpop.f32.mrb[0].mxu0
        %v2792 = vadd.f32 0.0, %v2791
        %v2793 = vpop.f32.mrb[0].mxu0
        %v2794 = vadd.f32 0.0, %v2793
        %2795 = vmatprep.mubr.f32.mxu0 0.0
        %2796 = vmatmul.mubr.f32.gmra.mrb[0].mxu0 %v2551
        %v2797 = vpop.f32.mrb[0].mxu0
        %v2798 = vadd.f32 0.0, %v2797
        %v2799 = vpop.f32.mrb[0].mxu0
        %v2800 = vadd.f32 0.0, %v2799
        %2801 = vdwg.mxu0
        %2802 = vmatprep.subr.mxu0 %v2567
        %2803 = vmatpush1.msra.mxu0 %v2565
        %2804 = vmatprep.subr.mxu0 0.0
        %2805 = vmatpush1.msra.mxu0 0.0
        %2806 = vmatprep.subr.mxu0 0.0
        %2807 = vmatpush1.msra.mxu0 0.0
        %2808 = vmatprep.subr.mxu0 0.0
        %2809 = vmatpush1.msra.mxu0 0.0
        %2810 = vmatprep.subr.mxu0 0.0
        %2811 = vmatpush1.msra.mxu0 0.0
        %2812 = vmatprep.subr.mxu0 0.0
        %2813 = vmatpush1.msra.mxu0 0.0
        %2814 = vmatprep.subr.mxu0 0.0
        %2815 = vmatpush1.msra.mxu0 0.0
        %2816 = vmatprep.subr.mxu0 0.0
        %2817 = vmatpush1.msra.mxu0 0.0
        %2818 = vmatprep.subr.mxu0 0.0
        %2819 = vmatpush1.msra.mxu0 0.0
        %2820 = vmatprep.subr.mxu0 0.0
        %2821 = vmatpush1.msra.mxu0 0.0
        %2822 = vmatprep.subr.mxu0 0.0
        %2823 = vmatpush1.msra.mxu0 0.0
        %2824 = vmatprep.subr.mxu0 0.0
        %2825 = vmatpush1.msra.mxu0 0.0
        %2826 = vmatprep.subr.mxu0 0.0
        %2827 = vmatpush1.msra.mxu0 0.0
        %2828 = vmatprep.subr.mxu0 0.0
        %2829 = vmatpush1.msra.mxu0 0.0
        %2830 = vmatprep.subr.mxu0 0.0
        %2831 = vmatpush1.msra.mxu0 0.0
        %2832 = vmatprep.subr.mxu0 0.0
        %2833 = vmatpush1.msra.mxu0 0.0
        %2834 = vmatprep.subr.mxu0 0.0
        %2835 = vmatpush1.msra.mxu0 0.0
        %2836 = vmatprep.subr.mxu0 0.0
        %2837 = vmatpush1.msra.mxu0 0.0
        %2838 = vmatprep.subr.mxu0 0.0
        %2839 = vmatpush1.msra.mxu0 0.0
        %2840 = vmatprep.subr.mxu0 0.0
        %2841 = vmatpush1.msra.mxu0 0.0
        %2842 = vmatprep.subr.mxu0 0.0
        %2843 = vmatpush1.msra.mxu0 0.0
        %2844 = vmatprep.subr.mxu0 0.0
        %2845 = vmatpush1.msra.mxu0 0.0
        %2846 = vmatprep.subr.mxu0 0.0
        %2847 = vmatpush1.msra.mxu0 0.0
        %2848 = vmatprep.subr.mxu0 0.0
        %2849 = vmatpush1.msra.mxu0 0.0
        %2850 = vmatprep.subr.mxu0 0.0
        %2851 = vmatpush1.msra.mxu0 0.0
        %2852 = vmatprep.subr.mxu0 0.0
        %2853 = vmatpush1.msra.mxu0 0.0
        %2854 = vmatprep.subr.mxu0 0.0
        %2855 = vmatpush1.msra.mxu0 0.0
        %2856 = vmatprep.subr.mxu0 0.0
        %2857 = vmatpush1.msra.mxu0 0.0
        %2858 = vmatprep.subr.mxu0 0.0
        %2859 = vmatpush1.msra.mxu0 0.0
        %2860 = vmatprep.subr.mxu0 0.0
        %2861 = vmatpush1.msra.mxu0 0.0
        %2862 = vmatprep.subr.mxu0 0.0
        %2863 = vmatpush1.msra.mxu0 0.0
        %2864 = vmatprep.subr.mxu0 0.0
        %2865 = vmatpush1.msra.mxu0 0.0
        %2866 = vmatprep.mubr.f32.mxu0 0.0
        %2867 = vmatmul.mubr.f32.gmra.mrb[0].mxu0 %v2548
        %v2868 = vpop.f32.mrb[0].mxu0
        %v2869 = vadd.f32 0.0, %v2868
        %v2870 = vpop.f32.mrb[0].mxu0
        %v2871 = vadd.f32 0.0, %v2870
        %2872 = vmatprep.mubr.f32.mxu0 0.0
        %2873 = vmatmul.mubr.f32.gmra.mrb[0].mxu0 %v2551
        %v2874 = vpop.f32.mrb[0].mxu0
        %v2875 = vadd.f32 0.0, %v2874
        %v2876 = vpop.f32.mrb[0].mxu0
        %v2877 = vadd.f32 0.0, %v2876
        %2878 = vdwg.mxu0
        %2879 = vmatprep.subr.mxu0 0.0
        %2880 = vmatpush1.msra.mxu0 %v2569
        %2881 = vmatprep.subr.mxu0 0.0
        %2882 = vmatpush1.msra.mxu0 0.0
        %2883 = vmatprep.subr.mxu0 0.0
        %2884 = vmatpush1.msra.mxu0 0.0
        %2885 = vmatprep.subr.mxu0 0.0
        %2886 = vmatpush1.msra.mxu0 0.0
        %2887 = vmatprep.subr.mxu0 0.0
        %2888 = vmatpush1.msra.mxu0 0.0
        %2889 = vmatprep.subr.mxu0 0.0
        %2890 = vmatpush1.msra.mxu0 0.0
        %2891 = vmatprep.subr.mxu0 0.0
        %2892 = vmatpush1.msra.mxu0 0.0
        %2893 = vmatprep.subr.mxu0 0.0
        %2894 = vmatpush1.msra.mxu0 0.0
        %2895 = vmatprep.subr.mxu0 0.0
        %2896 = vmatpush1.msra.mxu0 0.0
        %2897 = vmatprep.subr.mxu0 0.0
        %2898 = vmatpush1.msra.mxu0 0.0
        %2899 = vmatprep.subr.mxu0 0.0
        %2900 = vmatpush1.msra.mxu0 0.0
        %2901 = vmatprep.subr.mxu0 0.0
        %2902 = vmatpush1.msra.mxu0 0.0
        %2903 = vmatprep.subr.mxu0 0.0
        %2904 = vmatpush1.msra.mxu0 0.0
        %2905 = vmatprep.subr.mxu0 0.0
        %2906 = vmatpush1.msra.mxu0 0.0
        %2907 = vmatprep.subr.mxu0 0.0
        %2908 = vmatpush1.msra.mxu0 0.0
        %2909 = vmatprep.subr.mxu0 0.0
        %2910 = vmatpush1.msra.mxu0 0.0
        %2911 = vmatprep.subr.mxu0 0.0
        %2912 = vmatpush1.msra.mxu0 0.0
        %2913 = vmatprep.subr.mxu0 0.0
        %2914 = vmatpush1.msra.mxu0 0.0
        %2915 = vmatprep.subr.mxu0 0.0
        %2916 = vmatpush1.msra.mxu0 0.0
        %2917 = vmatprep.subr.mxu0 0.0
        %2918 = vmatpush1.msra.mxu0 0.0
        %2919 = vmatprep.subr.mxu0 0.0
        %2920 = vmatpush1.msra.mxu0 0.0
        %2921 = vmatprep.subr.mxu0 0.0
        %2922 = vmatpush1.msra.mxu0 0.0
        %2923 = vmatprep.subr.mxu0 0.0
        %2924 = vmatpush1.msra.mxu0 0.0
        %2925 = vmatprep.subr.mxu0 0.0
        %2926 = vmatpush1.msra.mxu0 0.0
        %2927 = vmatprep.subr.mxu0 0.0
        %2928 = vmatpush1.msra.mxu0 0.0
        %2929 = vmatprep.subr.mxu0 0.0
        %2930 = vmatpush1.msra.mxu0 0.0
        %2931 = vmatprep.subr.mxu0 0.0
        %2932 = vmatpush1.msra.mxu0 0.0
        %2933 = vmatprep.subr.mxu0 0.0
        %2934 = vmatpush1.msra.mxu0 0.0
        %2935 = vmatprep.subr.mxu0 0.0
        %2936 = vmatpush1.msra.mxu0 0.0
        %2937 = vmatprep.subr.mxu0 0.0
        %2938 = vmatpush1.msra.mxu0 0.0
        %2939 = vmatprep.subr.mxu0 0.0
        %2940 = vmatpush1.msra.mxu0 0.0
        %2941 = vmatprep.subr.mxu0 0.0
        %2942 = vmatpush1.msra.mxu0 0.0
        %2943 = vmatprep.mubr.f32.mxu0 0.0
        %2944 = vmatmul.mubr.f32.gmra.mrb[0].mxu0 %v2548
        %v2945 = vpop.f32.mrb[0].mxu0
        %v2946 = vadd.f32 0.0, %v2945
        %v2947 = vpop.f32.mrb[0].mxu0
        %2948 = vmatprep.mubr.f32.mxu0 0.0
        %2949 = vmatmul.mubr.f32.gmra.mrb[0].mxu0 %v2551
        %v2950 = vpop.f32.mrb[0].mxu0
        %v2951 = vadd.f32 0.0, %v2950
        %v2952 = vpop.f32.mrb[0].mxu0
        %2953 = vdwg.mxu0
        %v2954 = vadd.f32 %v2485, %v2638
        %v2955 = vadd.f32 %v2486, %v2640
        %v2956 = vadd.f32 %v2487, %v2715
        %v2957 = vadd.f32 %v2488, %v2717
        %v2958 = vadd.f32 %v2489, %v2792
        %v2959 = vadd.f32 %v2490, %v2794
        %v2960 = vadd.f32 %v2491, %v2869
        %v2961 = vadd.f32 %v2492, %v2871
        %v2962 = vadd.f32 %v2493, %v2946
        %v2963 = vadd.f32 %v2494, %v2644
        %v2964 = vadd.f32 %v2495, %v2646
        %v2965 = vadd.f32 %v2496, %v2721
        %v2966 = vadd.f32 %v2497, %v2723
        %v2967 = vadd.f32 %v2498, %v2798
        %v2968 = vadd.f32 %v2499, %v2800
        %v2969 = vadd.f32 %v2500, %v2875
        %v2970 = vadd.f32 %v2501, %v2877
        %v2971 = vadd.f32 %v2502, %v2951
        %v2972 = vld [vmem:[%s229] sm:$0xff]
        %v2973 = vld [vmem:[%s229 + $0x8] sm:$0xff]
        %v2974 = vld [vmem:[%s229 + $0x10] sm:$0xff]
        %v2975 = vld [vmem:[%s229 + $0x18] sm:$0xff]
        %v2976 = vld [vmem:[%s229 + $0x20] sm:$0xff]
        %s2977 = scalar_lea.vmem %s1, 96
        %v2978 = vld [vmem:[%s2977] sm:$0xff]
        %v2979 = vld [vmem:[%s2977 + $0x8] sm:$0xff]
        %v2985 = vcombine.high %v2972, %v2972
        %v2986 = vcombine.high %v2973, %v2973
        %v2987 = vcombine.high %v2974, %v2974
        %v2988 = vcombine.high %v2975, %v2975
        %v2989 = vcombine.high %v2976, %v2976
        %2990 = vrot.lane.b32.xlu0 %v2972, 60
        %v2991 = vpop.permute.xlu0 %2990
        %2992 = vrot.lane.b32.xlu0 %v2985, 60
        %v2993 = vpop.permute.xlu0 %2992
        %2994 = vrot.lane.b32.xlu0 %v2973, 60
        %v2995 = vpop.permute.xlu0 %2994
        %2996 = vrot.lane.b32.xlu0 %v2986, 60
        %v2997 = vpop.permute.xlu0 %2996
        %2998 = vrot.lane.b32.xlu0 %v2974, 60
        %v2999 = vpop.permute.xlu0 %2998
        %3000 = vrot.lane.b32.xlu0 %v2987, 60
        %v3001 = vpop.permute.xlu0 %3000
        %3002 = vrot.lane.b32.xlu0 %v2975, 60
        %v3003 = vpop.permute.xlu0 %3002
        %3004 = vrot.lane.b32.xlu0 %v2988, 60
        %v3005 = vpop.permute.xlu0 %3004
        %3006 = vrot.lane.b32.xlu0 %v2976, 60
        %v3007 = vpop.permute.xlu0 %3006
        %3008 = vrot.lane.b32.xlu0 %v2989, 60
        %v3009 = vpop.permute.xlu0 %3008
        %vm3010 = vcmask 490496
        %v3011 = vsel %vm3010, %v2991, %v2993
        %v3012 = vsel %vm3010, %v2993, %v2995
        %v3013 = vsel %vm3010, %v2995, %v2997
        %v3014 = vsel %vm3010, %v2997, %v2999
        %v3015 = vsel %vm3010, %v2999, %v3001
        %v3016 = vsel %vm3010, %v3001, %v3003
        %v3017 = vsel %vm3010, %v3003, %v3005
        %v3018 = vsel %vm3010, %v3005, %v3007
        %v3019 = vsel %vm3010, %v3007, %v3009
        %v3021 = vsel %vm280, %v2978, 0
        %v3024 = vsel %vm280, %v2979, 0
        %v3026 = vsel %vm287, %v3011, 0
        %v3028 = vsel %vm287, %v3012, 0
        %v3030 = vsel %vm287, %v3013, 0
        %v3032 = vsel %vm287, %v3014, 0
        %v3034 = vsel %vm287, %v3015, 0
        %v3036 = vsel %vm287, %v3016, 0
        %v3038 = vsel %vm287, %v3017, 0
        %v3040 = vsel %vm287, %v3018, 0
        %v3042 = vsel %vm287, %v3019, 0
        %3044 = vmatprep.subr.mxu0 %v3028
        %3045 = vmatpush1.msra.mxu0 %v3026
        %3046 = vmatprep.subr.mxu0 0.0
        %3047 = vmatpush1.msra.mxu0 0.0
        %3048 = vmatprep.subr.mxu0 0.0
        %3049 = vmatpush1.msra.mxu0 0.0
        %3050 = vmatprep.subr.mxu0 0.0
        %3051 = vmatpush1.msra.mxu0 0.0
        %3052 = vmatprep.subr.mxu0 0.0
        %3053 = vmatpush1.msra.mxu0 0.0
        %3054 = vmatprep.subr.mxu0 0.0
        %3055 = vmatpush1.msra.mxu0 0.0
        %3056 = vmatprep.subr.mxu0 0.0
        %3057 = vmatpush1.msra.mxu0 0.0
        %3058 = vmatprep.subr.mxu0 0.0
        %3059 = vmatpush1.msra.mxu0 0.0
        %3060 = vmatprep.subr.mxu0 0.0
        %3061 = vmatpush1.msra.mxu0 0.0
        %3062 = vmatprep.subr.mxu0 0.0
        %3063 = vmatpush1.msra.mxu0 0.0
        %3064 = vmatprep.subr.mxu0 0.0
        %3065 = vmatpush1.msra.mxu0 0.0
        %3066 = vmatprep.subr.mxu0 0.0
        %3067 = vmatpush1.msra.mxu0 0.0
        %3068 = vmatprep.subr.mxu0 0.0
        %3069 = vmatpush1.msra.mxu0 0.0
        %3070 = vmatprep.subr.mxu0 0.0
        %3071 = vmatpush1.msra.mxu0 0.0
        %3072 = vmatprep.subr.mxu0 0.0
        %3073 = vmatpush1.msra.mxu0 0.0
        %3074 = vmatprep.subr.mxu0 0.0
        %3075 = vmatpush1.msra.mxu0 0.0
        %3076 = vmatprep.subr.mxu0 0.0
        %3077 = vmatpush1.msra.mxu0 0.0
        %3078 = vmatprep.subr.mxu0 0.0
        %3079 = vmatpush1.msra.mxu0 0.0
        %3080 = vmatprep.subr.mxu0 0.0
        %3081 = vmatpush1.msra.mxu0 0.0
        %3082 = vmatprep.subr.mxu0 0.0
        %3083 = vmatpush1.msra.mxu0 0.0
        %3084 = vmatprep.subr.mxu0 0.0
        %3085 = vmatpush1.msra.mxu0 0.0
        %3086 = vmatprep.subr.mxu0 0.0
        %3087 = vmatpush1.msra.mxu0 0.0
        %3088 = vmatprep.subr.mxu0 0.0
        %3089 = vmatpush1.msra.mxu0 0.0
        %3090 = vmatprep.subr.mxu0 0.0
        %3091 = vmatpush1.msra.mxu0 0.0
        %3092 = vmatprep.subr.mxu0 0.0
        %3093 = vmatpush1.msra.mxu0 0.0
        %3094 = vmatprep.subr.mxu0 0.0
        %3095 = vmatpush1.msra.mxu0 0.0
        %3096 = vmatprep.subr.mxu0 0.0
        %3097 = vmatpush1.msra.mxu0 0.0
        %3098 = vmatprep.subr.mxu0 0.0
        %3099 = vmatpush1.msra.mxu0 0.0
        %3100 = vmatprep.subr.mxu0 0.0
        %3101 = vmatpush1.msra.mxu0 0.0
        %3102 = vmatprep.subr.mxu0 0.0
        %3103 = vmatpush1.msra.mxu0 0.0
        %3104 = vmatprep.subr.mxu0 0.0
        %3105 = vmatpush1.msra.mxu0 0.0
        %3106 = vmatprep.subr.mxu0 0.0
        %3107 = vmatpush1.msra.mxu0 0.0
        %3108 = vmatprep.mubr.f32.mxu0 0.0
        %3109 = vmatmul.mubr.f32.gmra.mrb[0].mxu0 %v3021
        %v3110 = vpop.f32.mrb[0].mxu0
        %v3111 = vadd.f32 0.0, %v3110
        %v3112 = vpop.f32.mrb[0].mxu0
        %v3113 = vadd.f32 0.0, %v3112
        %3114 = vmatprep.mubr.f32.mxu0 0.0
        %3115 = vmatmul.mubr.f32.gmra.mrb[0].mxu0 %v3024
        %v3116 = vpop.f32.mrb[0].mxu0
        %v3117 = vadd.f32 0.0, %v3116
        %v3118 = vpop.f32.mrb[0].mxu0
        %v3119 = vadd.f32 0.0, %v3118
        %3120 = vdwg.mxu0
        %3121 = vmatprep.subr.mxu0 %v3032
        %3122 = vmatpush1.msra.mxu0 %v3030
        %3123 = vmatprep.subr.mxu0 0.0
        %3124 = vmatpush1.msra.mxu0 0.0
        %3125 = vmatprep.subr.mxu0 0.0
        %3126 = vmatpush1.msra.mxu0 0.0
        %3127 = vmatprep.subr.mxu0 0.0
        %3128 = vmatpush1.msra.mxu0 0.0
        %3129 = vmatprep.subr.mxu0 0.0
        %3130 = vmatpush1.msra.mxu0 0.0
        %3131 = vmatprep.subr.mxu0 0.0
        %3132 = vmatpush1.msra.mxu0 0.0
        %3133 = vmatprep.subr.mxu0 0.0
        %3134 = vmatpush1.msra.mxu0 0.0
        %3135 = vmatprep.subr.mxu0 0.0
        %3136 = vmatpush1.msra.mxu0 0.0
        %3137 = vmatprep.subr.mxu0 0.0
        %3138 = vmatpush1.msra.mxu0 0.0
        %3139 = vmatprep.subr.mxu0 0.0
        %3140 = vmatpush1.msra.mxu0 0.0
        %3141 = vmatprep.subr.mxu0 0.0
        %3142 = vmatpush1.msra.mxu0 0.0
        %3143 = vmatprep.subr.mxu0 0.0
        %3144 = vmatpush1.msra.mxu0 0.0
        %3145 = vmatprep.subr.mxu0 0.0
        %3146 = vmatpush1.msra.mxu0 0.0
        %3147 = vmatprep.subr.mxu0 0.0
        %3148 = vmatpush1.msra.mxu0 0.0
        %3149 = vmatprep.subr.mxu0 0.0
        %3150 = vmatpush1.msra.mxu0 0.0
        %3151 = vmatprep.subr.mxu0 0.0
        %3152 = vmatpush1.msra.mxu0 0.0
        %3153 = vmatprep.subr.mxu0 0.0
        %3154 = vmatpush1.msra.mxu0 0.0
        %3155 = vmatprep.subr.mxu0 0.0
        %3156 = vmatpush1.msra.mxu0 0.0
        %3157 = vmatprep.subr.mxu0 0.0
        %3158 = vmatpush1.msra.mxu0 0.0
        %3159 = vmatprep.subr.mxu0 0.0
        %3160 = vmatpush1.msra.mxu0 0.0
        %3161 = vmatprep.subr.mxu0 0.0
        %3162 = vmatpush1.msra.mxu0 0.0
        %3163 = vmatprep.subr.mxu0 0.0
        %3164 = vmatpush1.msra.mxu0 0.0
        %3165 = vmatprep.subr.mxu0 0.0
        %3166 = vmatpush1.msra.mxu0 0.0
        %3167 = vmatprep.subr.mxu0 0.0
        %3168 = vmatpush1.msra.mxu0 0.0
        %3169 = vmatprep.subr.mxu0 0.0
        %3170 = vmatpush1.msra.mxu0 0.0
        %3171 = vmatprep.subr.mxu0 0.0
        %3172 = vmatpush1.msra.mxu0 0.0
        %3173 = vmatprep.subr.mxu0 0.0
        %3174 = vmatpush1.msra.mxu0 0.0
        %3175 = vmatprep.subr.mxu0 0.0
        %3176 = vmatpush1.msra.mxu0 0.0
        %3177 = vmatprep.subr.mxu0 0.0
        %3178 = vmatpush1.msra.mxu0 0.0
        %3179 = vmatprep.subr.mxu0 0.0
        %3180 = vmatpush1.msra.mxu0 0.0
        %3181 = vmatprep.subr.mxu0 0.0
        %3182 = vmatpush1.msra.mxu0 0.0
        %3183 = vmatprep.subr.mxu0 0.0
        %3184 = vmatpush1.msra.mxu0 0.0
        %3185 = vmatprep.mubr.f32.mxu0 0.0
        %3186 = vmatmul.mubr.f32.gmra.mrb[0].mxu0 %v3021
        %v3187 = vpop.f32.mrb[0].mxu0
        %v3188 = vadd.f32 0.0, %v3187
        %v3189 = vpop.f32.mrb[0].mxu0
        %v3190 = vadd.f32 0.0, %v3189
        %3191 = vmatprep.mubr.f32.mxu0 0.0
        %3192 = vmatmul.mubr.f32.gmra.mrb[0].mxu0 %v3024
        %v3193 = vpop.f32.mrb[0].mxu0
        %v3194 = vadd.f32 0.0, %v3193
        %v3195 = vpop.f32.mrb[0].mxu0
        %v3196 = vadd.f32 0.0, %v3195
        %3197 = vdwg.mxu0
        %3198 = vmatprep.subr.mxu0 %v3036
        %3199 = vmatpush1.msra.mxu0 %v3034
        %3200 = vmatprep.subr.mxu0 0.0
        %3201 = vmatpush1.msra.mxu0 0.0
        %3202 = vmatprep.subr.mxu0 0.0
        %3203 = vmatpush1.msra.mxu0 0.0
        %3204 = vmatprep.subr.mxu0 0.0
        %3205 = vmatpush1.msra.mxu0 0.0
        %3206 = vmatprep.subr.mxu0 0.0
        %3207 = vmatpush1.msra.mxu0 0.0
        %3208 = vmatprep.subr.mxu0 0.0
        %3209 = vmatpush1.msra.mxu0 0.0
        %3210 = vmatprep.subr.mxu0 0.0
        %3211 = vmatpush1.msra.mxu0 0.0
        %3212 = vmatprep.subr.mxu0 0.0
        %3213 = vmatpush1.msra.mxu0 0.0
        %3214 = vmatprep.subr.mxu0 0.0
        %3215 = vmatpush1.msra.mxu0 0.0
        %3216 = vmatprep.subr.mxu0 0.0
        %3217 = vmatpush1.msra.mxu0 0.0
        %3218 = vmatprep.subr.mxu0 0.0
        %3219 = vmatpush1.msra.mxu0 0.0
        %3220 = vmatprep.subr.mxu0 0.0
        %3221 = vmatpush1.msra.mxu0 0.0
        %3222 = vmatprep.subr.mxu0 0.0
        %3223 = vmatpush1.msra.mxu0 0.0
        %3224 = vmatprep.subr.mxu0 0.0
        %3225 = vmatpush1.msra.mxu0 0.0
        %3226 = vmatprep.subr.mxu0 0.0
        %3227 = vmatpush1.msra.mxu0 0.0
        %3228 = vmatprep.subr.mxu0 0.0
        %3229 = vmatpush1.msra.mxu0 0.0
        %3230 = vmatprep.subr.mxu0 0.0
        %3231 = vmatpush1.msra.mxu0 0.0
        %3232 = vmatprep.subr.mxu0 0.0
        %3233 = vmatpush1.msra.mxu0 0.0
        %3234 = vmatprep.subr.mxu0 0.0
        %3235 = vmatpush1.msra.mxu0 0.0
        %3236 = vmatprep.subr.mxu0 0.0
        %3237 = vmatpush1.msra.mxu0 0.0
        %3238 = vmatprep.subr.mxu0 0.0
        %3239 = vmatpush1.msra.mxu0 0.0
        %3240 = vmatprep.subr.mxu0 0.0
        %3241 = vmatpush1.msra.mxu0 0.0
        %3242 = vmatprep.subr.mxu0 0.0
        %3243 = vmatpush1.msra.mxu0 0.0
        %3244 = vmatprep.subr.mxu0 0.0
        %3245 = vmatpush1.msra.mxu0 0.0
        %3246 = vmatprep.subr.mxu0 0.0
        %3247 = vmatpush1.msra.mxu0 0.0
        %3248 = vmatprep.subr.mxu0 0.0
        %3249 = vmatpush1.msra.mxu0 0.0
        %3250 = vmatprep.subr.mxu0 0.0
        %3251 = vmatpush1.msra.mxu0 0.0
        %3252 = vmatprep.subr.mxu0 0.0
        %3253 = vmatpush1.msra.mxu0 0.0
        %3254 = vmatprep.subr.mxu0 0.0
        %3255 = vmatpush1.msra.mxu0 0.0
        %3256 = vmatprep.subr.mxu0 0.0
        %3257 = vmatpush1.msra.mxu0 0.0
        %3258 = vmatprep.subr.mxu0 0.0
        %3259 = vmatpush1.msra.mxu0 0.0
        %3260 = vmatprep.subr.mxu0 0.0
        %3261 = vmatpush1.msra.mxu0 0.0
        %3262 = vmatprep.mubr.f32.mxu0 0.0
        %3263 = vmatmul.mubr.f32.gmra.mrb[0].mxu0 %v3021
        %v3264 = vpop.f32.mrb[0].mxu0
        %v3265 = vadd.f32 0.0, %v3264
        %v3266 = vpop.f32.mrb[0].mxu0
        %v3267 = vadd.f32 0.0, %v3266
        %3268 = vmatprep.mubr.f32.mxu0 0.0
        %3269 = vmatmul.mubr.f32.gmra.mrb[0].mxu0 %v3024
        %v3270 = vpop.f32.mrb[0].mxu0
        %v3271 = vadd.f32 0.0, %v3270
        %v3272 = vpop.f32.mrb[0].mxu0
        %v3273 = vadd.f32 0.0, %v3272
        %3274 = vdwg.mxu0
        %3275 = vmatprep.subr.mxu0 %v3040
        %3276 = vmatpush1.msra.mxu0 %v3038
        %3277 = vmatprep.subr.mxu0 0.0
        %3278 = vmatpush1.msra.mxu0 0.0
        %3279 = vmatprep.subr.mxu0 0.0
        %3280 = vmatpush1.msra.mxu0 0.0
        %3281 = vmatprep.subr.mxu0 0.0
        %3282 = vmatpush1.msra.mxu0 0.0
        %3283 = vmatprep.subr.mxu0 0.0
        %3284 = vmatpush1.msra.mxu0 0.0
        %3285 = vmatprep.subr.mxu0 0.0
        %3286 = vmatpush1.msra.mxu0 0.0
        %3287 = vmatprep.subr.mxu0 0.0
        %3288 = vmatpush1.msra.mxu0 0.0
        %3289 = vmatprep.subr.mxu0 0.0
        %3290 = vmatpush1.msra.mxu0 0.0
        %3291 = vmatprep.subr.mxu0 0.0
        %3292 = vmatpush1.msra.mxu0 0.0
        %3293 = vmatprep.subr.mxu0 0.0
        %3294 = vmatpush1.msra.mxu0 0.0
        %3295 = vmatprep.subr.mxu0 0.0
        %3296 = vmatpush1.msra.mxu0 0.0
        %3297 = vmatprep.subr.mxu0 0.0
        %3298 = vmatpush1.msra.mxu0 0.0
        %3299 = vmatprep.subr.mxu0 0.0
        %3300 = vmatpush1.msra.mxu0 0.0
        %3301 = vmatprep.subr.mxu0 0.0
        %3302 = vmatpush1.msra.mxu0 0.0
        %3303 = vmatprep.subr.mxu0 0.0
        %3304 = vmatpush1.msra.mxu0 0.0
        %3305 = vmatprep.subr.mxu0 0.0
        %3306 = vmatpush1.msra.mxu0 0.0
        %3307 = vmatprep.subr.mxu0 0.0
        %3308 = vmatpush1.msra.mxu0 0.0
        %3309 = vmatprep.subr.mxu0 0.0
        %3310 = vmatpush1.msra.mxu0 0.0
        %3311 = vmatprep.subr.mxu0 0.0
        %3312 = vmatpush1.msra.mxu0 0.0
        %3313 = vmatprep.subr.mxu0 0.0
        %3314 = vmatpush1.msra.mxu0 0.0
        %3315 = vmatprep.subr.mxu0 0.0
        %3316 = vmatpush1.msra.mxu0 0.0
        %3317 = vmatprep.subr.mxu0 0.0
        %3318 = vmatpush1.msra.mxu0 0.0
        %3319 = vmatprep.subr.mxu0 0.0
        %3320 = vmatpush1.msra.mxu0 0.0
        %3321 = vmatprep.subr.mxu0 0.0
        %3322 = vmatpush1.msra.mxu0 0.0
        %3323 = vmatprep.subr.mxu0 0.0
        %3324 = vmatpush1.msra.mxu0 0.0
        %3325 = vmatprep.subr.mxu0 0.0
        %3326 = vmatpush1.msra.mxu0 0.0
        %3327 = vmatprep.subr.mxu0 0.0
        %3328 = vmatpush1.msra.mxu0 0.0
        %3329 = vmatprep.subr.mxu0 0.0
        %3330 = vmatpush1.msra.mxu0 0.0
        %3331 = vmatprep.subr.mxu0 0.0
        %3332 = vmatpush1.msra.mxu0 0.0
        %3333 = vmatprep.subr.mxu0 0.0
        %3334 = vmatpush1.msra.mxu0 0.0
        %3335 = vmatprep.subr.mxu0 0.0
        %3336 = vmatpush1.msra.mxu0 0.0
        %3337 = vmatprep.subr.mxu0 0.0
        %3338 = vmatpush1.msra.mxu0 0.0
        %3339 = vmatprep.mubr.f32.mxu0 0.0
        %3340 = vmatmul.mubr.f32.gmra.mrb[0].mxu0 %v3021
        %v3341 = vpop.f32.mrb[0].mxu0
        %v3342 = vadd.f32 0.0, %v3341
        %v3343 = vpop.f32.mrb[0].mxu0
        %v3344 = vadd.f32 0.0, %v3343
        %3345 = vmatprep.mubr.f32.mxu0 0.0
        %3346 = vmatmul.mubr.f32.gmra.mrb[0].mxu0 %v3024
        %v3347 = vpop.f32.mrb[0].mxu0
        %v3348 = vadd.f32 0.0, %v3347
        %v3349 = vpop.f32.mrb[0].mxu0
        %v3350 = vadd.f32 0.0, %v3349
        %3351 = vdwg.mxu0
        %3352 = vmatprep.subr.mxu0 0.0
        %3353 = vmatpush1.msra.mxu0 %v3042
        %3354 = vmatprep.subr.mxu0 0.0
        %3355 = vmatpush1.msra.mxu0 0.0
        %3356 = vmatprep.subr.mxu0 0.0
        %3357 = vmatpush1.msra.mxu0 0.0
        %3358 = vmatprep.subr.mxu0 0.0
        %3359 = vmatpush1.msra.mxu0 0.0
        %3360 = vmatprep.subr.mxu0 0.0
        %3361 = vmatpush1.msra.mxu0 0.0
        %3362 = vmatprep.subr.mxu0 0.0
        %3363 = vmatpush1.msra.mxu0 0.0
        %3364 = vmatprep.subr.mxu0 0.0
        %3365 = vmatpush1.msra.mxu0 0.0
        %3366 = vmatprep.subr.mxu0 0.0
        %3367 = vmatpush1.msra.mxu0 0.0
        %3368 = vmatprep.subr.mxu0 0.0
        %3369 = vmatpush1.msra.mxu0 0.0
        %3370 = vmatprep.subr.mxu0 0.0
        %3371 = vmatpush1.msra.mxu0 0.0
        %3372 = vmatprep.subr.mxu0 0.0
        %3373 = vmatpush1.msra.mxu0 0.0
        %3374 = vmatprep.subr.mxu0 0.0
        %3375 = vmatpush1.msra.mxu0 0.0
        %3376 = vmatprep.subr.mxu0 0.0
        %3377 = vmatpush1.msra.mxu0 0.0
        %3378 = vmatprep.subr.mxu0 0.0
        %3379 = vmatpush1.msra.mxu0 0.0
        %3380 = vmatprep.subr.mxu0 0.0
        %3381 = vmatpush1.msra.mxu0 0.0
        %3382 = vmatprep.subr.mxu0 0.0
        %3383 = vmatpush1.msra.mxu0 0.0
        %3384 = vmatprep.subr.mxu0 0.0
        %3385 = vmatpush1.msra.mxu0 0.0
        %3386 = vmatprep.subr.mxu0 0.0
        %3387 = vmatpush1.msra.mxu0 0.0
        %3388 = vmatprep.subr.mxu0 0.0
        %3389 = vmatpush1.msra.mxu0 0.0
        %3390 = vmatprep.subr.mxu0 0.0
        %3391 = vmatpush1.msra.mxu0 0.0
        %3392 = vmatprep.subr.mxu0 0.0
        %3393 = vmatpush1.msra.mxu0 0.0
        %3394 = vmatprep.subr.mxu0 0.0
        %3395 = vmatpush1.msra.mxu0 0.0
        %3396 = vmatprep.subr.mxu0 0.0
        %3397 = vmatpush1.msra.mxu0 0.0
        %3398 = vmatprep.subr.mxu0 0.0
        %3399 = vmatpush1.msra.mxu0 0.0
        %3400 = vmatprep.subr.mxu0 0.0
        %3401 = vmatpush1.msra.mxu0 0.0
        %3402 = vmatprep.subr.mxu0 0.0
        %3403 = vmatpush1.msra.mxu0 0.0
        %3404 = vmatprep.subr.mxu0 0.0
        %3405 = vmatpush1.msra.mxu0 0.0
        %3406 = vmatprep.subr.mxu0 0.0
        %3407 = vmatpush1.msra.mxu0 0.0
        %3408 = vmatprep.subr.mxu0 0.0
        %3409 = vmatpush1.msra.mxu0 0.0
        %3410 = vmatprep.subr.mxu0 0.0
        %3411 = vmatpush1.msra.mxu0 0.0
        %3412 = vmatprep.subr.mxu0 0.0
        %3413 = vmatpush1.msra.mxu0 0.0
        %3414 = vmatprep.subr.mxu0 0.0
        %3415 = vmatpush1.msra.mxu0 0.0
        %3416 = vmatprep.mubr.f32.mxu0 0.0
        %3417 = vmatmul.mubr.f32.gmra.mrb[0].mxu0 %v3021
        %v3418 = vpop.f32.mrb[0].mxu0
        %v3419 = vadd.f32 0.0, %v3418
        %v3420 = vpop.f32.mrb[0].mxu0
        %3421 = vmatprep.mubr.f32.mxu0 0.0
        %3422 = vmatmul.mubr.f32.gmra.mrb[0].mxu0 %v3024
        %v3423 = vpop.f32.mrb[0].mxu0
        %v3424 = vadd.f32 0.0, %v3423
        %v3425 = vpop.f32.mrb[0].mxu0
        %3426 = vdwg.mxu0
        %v3427 = vadd.f32 %v2954, %v3111
        %v3428 = vadd.f32 %v2955, %v3113
        %v3429 = vadd.f32 %v2956, %v3188
        %v3430 = vadd.f32 %v2957, %v3190
        %v3431 = vadd.f32 %v2958, %v3265
        %v3432 = vadd.f32 %v2959, %v3267
        %v3433 = vadd.f32 %v2960, %v3342
        %v3434 = vadd.f32 %v2961, %v3344
        %v3435 = vadd.f32 %v2962, %v3419
        %v3436 = vadd.f32 %v2963, %v3117
        %v3437 = vadd.f32 %v2964, %v3119
        %v3438 = vadd.f32 %v2965, %v3194
        %v3439 = vadd.f32 %v2966, %v3196
        %v3440 = vadd.f32 %v2967, %v3271
        %v3441 = vadd.f32 %v2968, %v3273
        %v3442 = vadd.f32 %v2969, %v3348
        %v3443 = vadd.f32 %v2970, %v3350
        %v3444 = vadd.f32 %v2971, %v3424
        %v3445 = vld [vmem:[%s229] sm:$0xff]
        %v3446 = vld [vmem:[%s229 + $0x8] sm:$0xff]
        %v3447 = vld [vmem:[%s229 + $0x10] sm:$0xff]
        %v3448 = vld [vmem:[%s229 + $0x18] sm:$0xff]
        %v3449 = vld [vmem:[%s229 + $0x20] sm:$0xff]
        %s3450 = scalar_lea.vmem %s1, 112
        %v3451 = vld [vmem:[%s3450] sm:$0xff]
        %v3452 = vld [vmem:[%s3450 + $0x8] sm:$0xff]
        %v3458 = vcombine.high %v3445, %v3445
        %v3459 = vcombine.high %v3446, %v3446
        %v3460 = vcombine.high %v3447, %v3447
        %v3461 = vcombine.high %v3448, %v3448
        %v3462 = vcombine.high %v3449, %v3449
        %3463 = vrot.lane.b32.xlu0 %v3445, 59
        %v3464 = vpop.permute.xlu0 %3463
        %3465 = vrot.lane.b32.xlu0 %v3458, 59
        %v3466 = vpop.permute.xlu0 %3465
        %3467 = vrot.lane.b32.xlu0 %v3446, 59
        %v3468 = vpop.permute.xlu0 %3467
        %3469 = vrot.lane.b32.xlu0 %v3459, 59
        %v3470 = vpop.permute.xlu0 %3469
        %3471 = vrot.lane.b32.xlu0 %v3447, 59
        %v3472 = vpop.permute.xlu0 %3471
        %3473 = vrot.lane.b32.xlu0 %v3460, 59
        %v3474 = vpop.permute.xlu0 %3473
        %3475 = vrot.lane.b32.xlu0 %v3448, 59
        %v3476 = vpop.permute.xlu0 %3475
        %3477 = vrot.lane.b32.xlu0 %v3461, 59
        %v3478 = vpop.permute.xlu0 %3477
        %3479 = vrot.lane.b32.xlu0 %v3449, 59
        %v3480 = vpop.permute.xlu0 %3479
        %3481 = vrot.lane.b32.xlu0 %v3462, 59
        %v3482 = vpop.permute.xlu0 %3481
        %vm3483 = vcmask 482304
        %v3484 = vsel %vm3483, %v3464, %v3466
        %v3485 = vsel %vm3483, %v3466, %v3468
        %v3486 = vsel %vm3483, %v3468, %v3470
        %v3487 = vsel %vm3483, %v3470, %v3472
        %v3488 = vsel %vm3483, %v3472, %v3474
        %v3489 = vsel %vm3483, %v3474, %v3476
        %v3490 = vsel %vm3483, %v3476, %v3478
        %v3491 = vsel %vm3483, %v3478, %v3480
        %v3492 = vsel %vm3483, %v3480, %v3482
        %v3494 = vsel %vm280, %v3451, 0
        %v3497 = vsel %vm280, %v3452, 0
        %v3499 = vsel %vm287, %v3484, 0
        %v3501 = vsel %vm287, %v3485, 0
        %v3503 = vsel %vm287, %v3486, 0
        %v3505 = vsel %vm287, %v3487, 0
        %v3507 = vsel %vm287, %v3488, 0
        %v3509 = vsel %vm287, %v3489, 0
        %v3511 = vsel %vm287, %v3490, 0
        %v3513 = vsel %vm287, %v3491, 0
        %v3515 = vsel %vm287, %v3492, 0
        %3517 = vmatprep.subr.mxu0 %v3501
        %3518 = vmatpush1.msra.mxu0 %v3499
        %3519 = vmatprep.subr.mxu0 0.0
        %3520 = vmatpush1.msra.mxu0 0.0
        %3521 = vmatprep.subr.mxu0 0.0
        %3522 = vmatpush1.msra.mxu0 0.0
        %3523 = vmatprep.subr.mxu0 0.0
        %3524 = vmatpush1.msra.mxu0 0.0
        %3525 = vmatprep.subr.mxu0 0.0
        %3526 = vmatpush1.msra.mxu0 0.0
        %3527 = vmatprep.subr.mxu0 0.0
        %3528 = vmatpush1.msra.mxu0 0.0
        %3529 = vmatprep.subr.mxu0 0.0
        %3530 = vmatpush1.msra.mxu0 0.0
        %3531 = vmatprep.subr.mxu0 0.0
        %3532 = vmatpush1.msra.mxu0 0.0
        %3533 = vmatprep.subr.mxu0 0.0
        %3534 = vmatpush1.msra.mxu0 0.0
        %3535 = vmatprep.subr.mxu0 0.0
        %3536 = vmatpush1.msra.mxu0 0.0
        %3537 = vmatprep.subr.mxu0 0.0
        %3538 = vmatpush1.msra.mxu0 0.0
        %3539 = vmatprep.subr.mxu0 0.0
        %3540 = vmatpush1.msra.mxu0 0.0
        %3541 = vmatprep.subr.mxu0 0.0
        %3542 = vmatpush1.msra.mxu0 0.0
        %3543 = vmatprep.subr.mxu0 0.0
        %3544 = vmatpush1.msra.mxu0 0.0
        %3545 = vmatprep.subr.mxu0 0.0
        %3546 = vmatpush1.msra.mxu0 0.0
        %3547 = vmatprep.subr.mxu0 0.0
        %3548 = vmatpush1.msra.mxu0 0.0
        %3549 = vmatprep.subr.mxu0 0.0
        %3550 = vmatpush1.msra.mxu0 0.0
        %3551 = vmatprep.subr.mxu0 0.0
        %3552 = vmatpush1.msra.mxu0 0.0
        %3553 = vmatprep.subr.mxu0 0.0
        %3554 = vmatpush1.msra.mxu0 0.0
        %3555 = vmatprep.subr.mxu0 0.0
        %3556 = vmatpush1.msra.mxu0 0.0
        %3557 = vmatprep.subr.mxu0 0.0
        %3558 = vmatpush1.msra.mxu0 0.0
        %3559 = vmatprep.subr.mxu0 0.0
        %3560 = vmatpush1.msra.mxu0 0.0
        %3561 = vmatprep.subr.mxu0 0.0
        %3562 = vmatpush1.msra.mxu0 0.0
        %3563 = vmatprep.subr.mxu0 0.0
        %3564 = vmatpush1.msra.mxu0 0.0
        %3565 = vmatprep.subr.mxu0 0.0
        %3566 = vmatpush1.msra.mxu0 0.0
        %3567 = vmatprep.subr.mxu0 0.0
        %3568 = vmatpush1.msra.mxu0 0.0
        %3569 = vmatprep.subr.mxu0 0.0
        %3570 = vmatpush1.msra.mxu0 0.0
        %3571 = vmatprep.subr.mxu0 0.0
        %3572 = vmatpush1.msra.mxu0 0.0
        %3573 = vmatprep.subr.mxu0 0.0
        %3574 = vmatpush1.msra.mxu0 0.0
        %3575 = vmatprep.subr.mxu0 0.0
        %3576 = vmatpush1.msra.mxu0 0.0
        %3577 = vmatprep.subr.mxu0 0.0
        %3578 = vmatpush1.msra.mxu0 0.0
        %3579 = vmatprep.subr.mxu0 0.0
        %3580 = vmatpush1.msra.mxu0 0.0
        %3581 = vmatprep.mubr.f32.mxu0 0.0
        %3582 = vmatmul.mubr.f32.gmra.mrb[0].mxu0 %v3494
        %v3583 = vpop.f32.mrb[0].mxu0
        %v3584 = vadd.f32 0.0, %v3583
        %v3585 = vpop.f32.mrb[0].mxu0
        %v3586 = vadd.f32 0.0, %v3585
        %3587 = vmatprep.mubr.f32.mxu0 0.0
        %3588 = vmatmul.mubr.f32.gmra.mrb[0].mxu0 %v3497
        %v3589 = vpop.f32.mrb[0].mxu0
        %v3590 = vadd.f32 0.0, %v3589
        %v3591 = vpop.f32.mrb[0].mxu0
        %v3592 = vadd.f32 0.0, %v3591
        %3593 = vdwg.mxu0
        %3594 = vmatprep.subr.mxu0 %v3505
        %3595 = vmatpush1.msra.mxu0 %v3503
        %3596 = vmatprep.subr.mxu0 0.0
        %3597 = vmatpush1.msra.mxu0 0.0
        %3598 = vmatprep.subr.mxu0 0.0
        %3599 = vmatpush1.msra.mxu0 0.0
        %3600 = vmatprep.subr.mxu0 0.0
        %3601 = vmatpush1.msra.mxu0 0.0
        %3602 = vmatprep.subr.mxu0 0.0
        %3603 = vmatpush1.msra.mxu0 0.0
        %3604 = vmatprep.subr.mxu0 0.0
        %3605 = vmatpush1.msra.mxu0 0.0
        %3606 = vmatprep.subr.mxu0 0.0
        %3607 = vmatpush1.msra.mxu0 0.0
        %3608 = vmatprep.subr.mxu0 0.0
        %3609 = vmatpush1.msra.mxu0 0.0
        %3610 = vmatprep.subr.mxu0 0.0
        %3611 = vmatpush1.msra.mxu0 0.0
        %3612 = vmatprep.subr.mxu0 0.0
        %3613 = vmatpush1.msra.mxu0 0.0
        %3614 = vmatprep.subr.mxu0 0.0
        %3615 = vmatpush1.msra.mxu0 0.0
        %3616 = vmatprep.subr.mxu0 0.0
        %3617 = vmatpush1.msra.mxu0 0.0
        %3618 = vmatprep.subr.mxu0 0.0
        %3619 = vmatpush1.msra.mxu0 0.0
        %3620 = vmatprep.subr.mxu0 0.0
        %3621 = vmatpush1.msra.mxu0 0.0
        %3622 = vmatprep.subr.mxu0 0.0
        %3623 = vmatpush1.msra.mxu0 0.0
        %3624 = vmatprep.subr.mxu0 0.0
        %3625 = vmatpush1.msra.mxu0 0.0
        %3626 = vmatprep.subr.mxu0 0.0
        %3627 = vmatpush1.msra.mxu0 0.0
        %3628 = vmatprep.subr.mxu0 0.0
        %3629 = vmatpush1.msra.mxu0 0.0
        %3630 = vmatprep.subr.mxu0 0.0
        %3631 = vmatpush1.msra.mxu0 0.0
        %3632 = vmatprep.subr.mxu0 0.0
        %3633 = vmatpush1.msra.mxu0 0.0
        %3634 = vmatprep.subr.mxu0 0.0
        %3635 = vmatpush1.msra.mxu0 0.0
        %3636 = vmatprep.subr.mxu0 0.0
        %3637 = vmatpush1.msra.mxu0 0.0
        %3638 = vmatprep.subr.mxu0 0.0
        %3639 = vmatpush1.msra.mxu0 0.0
        %3640 = vmatprep.subr.mxu0 0.0
        %3641 = vmatpush1.msra.mxu0 0.0
        %3642 = vmatprep.subr.mxu0 0.0
        %3643 = vmatpush1.msra.mxu0 0.0
        %3644 = vmatprep.subr.mxu0 0.0
        %3645 = vmatpush1.msra.mxu0 0.0
        %3646 = vmatprep.subr.mxu0 0.0
        %3647 = vmatpush1.msra.mxu0 0.0
        %3648 = vmatprep.subr.mxu0 0.0
        %3649 = vmatpush1.msra.mxu0 0.0
        %3650 = vmatprep.subr.mxu0 0.0
        %3651 = vmatpush1.msra.mxu0 0.0
        %3652 = vmatprep.subr.mxu0 0.0
        %3653 = vmatpush1.msra.mxu0 0.0
        %3654 = vmatprep.subr.mxu0 0.0
        %3655 = vmatpush1.msra.mxu0 0.0
        %3656 = vmatprep.subr.mxu0 0.0
        %3657 = vmatpush1.msra.mxu0 0.0
        %3658 = vmatprep.mubr.f32.mxu0 0.0
        %3659 = vmatmul.mubr.f32.gmra.mrb[0].mxu0 %v3494
        %v3660 = vpop.f32.mrb[0].mxu0
        %v3661 = vadd.f32 0.0, %v3660
        %v3662 = vpop.f32.mrb[0].mxu0
        %v3663 = vadd.f32 0.0, %v3662
        %3664 = vmatprep.mubr.f32.mxu0 0.0
        %3665 = vmatmul.mubr.f32.gmra.mrb[0].mxu0 %v3497
        %v3666 = vpop.f32.mrb[0].mxu0
        %v3667 = vadd.f32 0.0, %v3666
        %v3668 = vpop.f32.mrb[0].mxu0
        %v3669 = vadd.f32 0.0, %v3668
        %3670 = vdwg.mxu0
        %3671 = vmatprep.subr.mxu0 %v3509
        %3672 = vmatpush1.msra.mxu0 %v3507
        %3673 = vmatprep.subr.mxu0 0.0
        %3674 = vmatpush1.msra.mxu0 0.0
        %3675 = vmatprep.subr.mxu0 0.0
        %3676 = vmatpush1.msra.mxu0 0.0
        %3677 = vmatprep.subr.mxu0 0.0
        %3678 = vmatpush1.msra.mxu0 0.0
        %3679 = vmatprep.subr.mxu0 0.0
        %3680 = vmatpush1.msra.mxu0 0.0
        %3681 = vmatprep.subr.mxu0 0.0
        %3682 = vmatpush1.msra.mxu0 0.0
        %3683 = vmatprep.subr.mxu0 0.0
        %3684 = vmatpush1.msra.mxu0 0.0
        %3685 = vmatprep.subr.mxu0 0.0
        %3686 = vmatpush1.msra.mxu0 0.0
        %3687 = vmatprep.subr.mxu0 0.0
        %3688 = vmatpush1.msra.mxu0 0.0
        %3689 = vmatprep.subr.mxu0 0.0
        %3690 = vmatpush1.msra.mxu0 0.0
        %3691 = vmatprep.subr.mxu0 0.0
        %3692 = vmatpush1.msra.mxu0 0.0
        %3693 = vmatprep.subr.mxu0 0.0
        %3694 = vmatpush1.msra.mxu0 0.0
        %3695 = vmatprep.subr.mxu0 0.0
        %3696 = vmatpush1.msra.mxu0 0.0
        %3697 = vmatprep.subr.mxu0 0.0
        %3698 = vmatpush1.msra.mxu0 0.0
        %3699 = vmatprep.subr.mxu0 0.0
        %3700 = vmatpush1.msra.mxu0 0.0
        %3701 = vmatprep.subr.mxu0 0.0
        %3702 = vmatpush1.msra.mxu0 0.0
        %3703 = vmatprep.subr.mxu0 0.0
        %3704 = vmatpush1.msra.mxu0 0.0
        %3705 = vmatprep.subr.mxu0 0.0
        %3706 = vmatpush1.msra.mxu0 0.0
        %3707 = vmatprep.subr.mxu0 0.0
        %3708 = vmatpush1.msra.mxu0 0.0
        %3709 = vmatprep.subr.mxu0 0.0
        %3710 = vmatpush1.msra.mxu0 0.0
        %3711 = vmatprep.subr.mxu0 0.0
        %3712 = vmatpush1.msra.mxu0 0.0
        %3713 = vmatprep.subr.mxu0 0.0
        %3714 = vmatpush1.msra.mxu0 0.0
        %3715 = vmatprep.subr.mxu0 0.0
        %3716 = vmatpush1.msra.mxu0 0.0
        %3717 = vmatprep.subr.mxu0 0.0
        %3718 = vmatpush1.msra.mxu0 0.0
        %3719 = vmatprep.subr.mxu0 0.0
        %3720 = vmatpush1.msra.mxu0 0.0
        %3721 = vmatprep.subr.mxu0 0.0
        %3722 = vmatpush1.msra.mxu0 0.0
        %3723 = vmatprep.subr.mxu0 0.0
        %3724 = vmatpush1.msra.mxu0 0.0
        %3725 = vmatprep.subr.mxu0 0.0
        %3726 = vmatpush1.msra.mxu0 0.0
        %3727 = vmatprep.subr.mxu0 0.0
        %3728 = vmatpush1.msra.mxu0 0.0
        %3729 = vmatprep.subr.mxu0 0.0
        %3730 = vmatpush1.msra.mxu0 0.0
        %3731 = vmatprep.subr.mxu0 0.0
        %3732 = vmatpush1.msra.mxu0 0.0
        %3733 = vmatprep.subr.mxu0 0.0
        %3734 = vmatpush1.msra.mxu0 0.0
        %3735 = vmatprep.mubr.f32.mxu0 0.0
        %3736 = vmatmul.mubr.f32.gmra.mrb[0].mxu0 %v3494
        %v3737 = vpop.f32.mrb[0].mxu0
        %v3738 = vadd.f32 0.0, %v3737
        %v3739 = vpop.f32.mrb[0].mxu0
        %v3740 = vadd.f32 0.0, %v3739
        %3741 = vmatprep.mubr.f32.mxu0 0.0
        %3742 = vmatmul.mubr.f32.gmra.mrb[0].mxu0 %v3497
        %v3743 = vpop.f32.mrb[0].mxu0
        %v3744 = vadd.f32 0.0, %v3743
        %v3745 = vpop.f32.mrb[0].mxu0
        %v3746 = vadd.f32 0.0, %v3745
        %3747 = vdwg.mxu0
        %3748 = vmatprep.subr.mxu0 %v3513
        %3749 = vmatpush1.msra.mxu0 %v3511
        %3750 = vmatprep.subr.mxu0 0.0
        %3751 = vmatpush1.msra.mxu0 0.0
        %3752 = vmatprep.subr.mxu0 0.0
        %3753 = vmatpush1.msra.mxu0 0.0
        %3754 = vmatprep.subr.mxu0 0.0
        %3755 = vmatpush1.msra.mxu0 0.0
        %3756 = vmatprep.subr.mxu0 0.0
        %3757 = vmatpush1.msra.mxu0 0.0
        %3758 = vmatprep.subr.mxu0 0.0
        %3759 = vmatpush1.msra.mxu0 0.0
        %3760 = vmatprep.subr.mxu0 0.0
        %3761 = vmatpush1.msra.mxu0 0.0
        %3762 = vmatprep.subr.mxu0 0.0
        %3763 = vmatpush1.msra.mxu0 0.0
        %3764 = vmatprep.subr.mxu0 0.0
        %3765 = vmatpush1.msra.mxu0 0.0
        %3766 = vmatprep.subr.mxu0 0.0
        %3767 = vmatpush1.msra.mxu0 0.0
        %3768 = vmatprep.subr.mxu0 0.0
        %3769 = vmatpush1.msra.mxu0 0.0
        %3770 = vmatprep.subr.mxu0 0.0
        %3771 = vmatpush1.msra.mxu0 0.0
        %3772 = vmatprep.subr.mxu0 0.0
        %3773 = vmatpush1.msra.mxu0 0.0
        %3774 = vmatprep.subr.mxu0 0.0
        %3775 = vmatpush1.msra.mxu0 0.0
        %3776 = vmatprep.subr.mxu0 0.0
        %3777 = vmatpush1.msra.mxu0 0.0
        %3778 = vmatprep.subr.mxu0 0.0
        %3779 = vmatpush1.msra.mxu0 0.0
        %3780 = vmatprep.subr.mxu0 0.0
        %3781 = vmatpush1.msra.mxu0 0.0
        %3782 = vmatprep.subr.mxu0 0.0
        %3783 = vmatpush1.msra.mxu0 0.0
        %3784 = vmatprep.subr.mxu0 0.0
        %3785 = vmatpush1.msra.mxu0 0.0
        %3786 = vmatprep.subr.mxu0 0.0
        %3787 = vmatpush1.msra.mxu0 0.0
        %3788 = vmatprep.subr.mxu0 0.0
        %3789 = vmatpush1.msra.mxu0 0.0
        %3790 = vmatprep.subr.mxu0 0.0
        %3791 = vmatpush1.msra.mxu0 0.0
        %3792 = vmatprep.subr.mxu0 0.0
        %3793 = vmatpush1.msra.mxu0 0.0
        %3794 = vmatprep.subr.mxu0 0.0
        %3795 = vmatpush1.msra.mxu0 0.0
        %3796 = vmatprep.subr.mxu0 0.0
        %3797 = vmatpush1.msra.mxu0 0.0
        %3798 = vmatprep.subr.mxu0 0.0
        %3799 = vmatpush1.msra.mxu0 0.0
        %3800 = vmatprep.subr.mxu0 0.0
        %3801 = vmatpush1.msra.mxu0 0.0
        %3802 = vmatprep.subr.mxu0 0.0
        %3803 = vmatpush1.msra.mxu0 0.0
        %3804 = vmatprep.subr.mxu0 0.0
        %3805 = vmatpush1.msra.mxu0 0.0
        %3806 = vmatprep.subr.mxu0 0.0
        %3807 = vmatpush1.msra.mxu0 0.0
        %3808 = vmatprep.subr.mxu0 0.0
        %3809 = vmatpush1.msra.mxu0 0.0
        %3810 = vmatprep.subr.mxu0 0.0
        %3811 = vmatpush1.msra.mxu0 0.0
        %3812 = vmatprep.mubr.f32.mxu0 0.0
        %3813 = vmatmul.mubr.f32.gmra.mrb[0].mxu0 %v3494
        %v3814 = vpop.f32.mrb[0].mxu0
        %v3815 = vadd.f32 0.0, %v3814
        %v3816 = vpop.f32.mrb[0].mxu0
        %v3817 = vadd.f32 0.0, %v3816
        %3818 = vmatprep.mubr.f32.mxu0 0.0
        %3819 = vmatmul.mubr.f32.gmra.mrb[0].mxu0 %v3497
        %v3820 = vpop.f32.mrb[0].mxu0
        %v3821 = vadd.f32 0.0, %v3820
        %v3822 = vpop.f32.mrb[0].mxu0
        %v3823 = vadd.f32 0.0, %v3822
        %3824 = vdwg.mxu0
        %3825 = vmatprep.subr.mxu0 0.0
        %3826 = vmatpush1.msra.mxu0 %v3515
        %3827 = vmatprep.subr.mxu0 0.0
        %3828 = vmatpush1.msra.mxu0 0.0
        %3829 = vmatprep.subr.mxu0 0.0
        %3830 = vmatpush1.msra.mxu0 0.0
        %3831 = vmatprep.subr.mxu0 0.0
        %3832 = vmatpush1.msra.mxu0 0.0
        %3833 = vmatprep.subr.mxu0 0.0
        %3834 = vmatpush1.msra.mxu0 0.0
        %3835 = vmatprep.subr.mxu0 0.0
        %3836 = vmatpush1.msra.mxu0 0.0
        %3837 = vmatprep.subr.mxu0 0.0
        %3838 = vmatpush1.msra.mxu0 0.0
        %3839 = vmatprep.subr.mxu0 0.0
        %3840 = vmatpush1.msra.mxu0 0.0
        %3841 = vmatprep.subr.mxu0 0.0
        %3842 = vmatpush1.msra.mxu0 0.0
        %3843 = vmatprep.subr.mxu0 0.0
        %3844 = vmatpush1.msra.mxu0 0.0
        %3845 = vmatprep.subr.mxu0 0.0
        %3846 = vmatpush1.msra.mxu0 0.0
        %3847 = vmatprep.subr.mxu0 0.0
        %3848 = vmatpush1.msra.mxu0 0.0
        %3849 = vmatprep.subr.mxu0 0.0
        %3850 = vmatpush1.msra.mxu0 0.0
        %3851 = vmatprep.subr.mxu0 0.0
        %3852 = vmatpush1.msra.mxu0 0.0
        %3853 = vmatprep.subr.mxu0 0.0
        %3854 = vmatpush1.msra.mxu0 0.0
        %3855 = vmatprep.subr.mxu0 0.0
        %3856 = vmatpush1.msra.mxu0 0.0
        %3857 = vmatprep.subr.mxu0 0.0
        %3858 = vmatpush1.msra.mxu0 0.0
        %3859 = vmatprep.subr.mxu0 0.0
        %3860 = vmatpush1.msra.mxu0 0.0
        %3861 = vmatprep.subr.mxu0 0.0
        %3862 = vmatpush1.msra.mxu0 0.0
        %3863 = vmatprep.subr.mxu0 0.0
        %3864 = vmatpush1.msra.mxu0 0.0
        %3865 = vmatprep.subr.mxu0 0.0
        %3866 = vmatpush1.msra.mxu0 0.0
        %3867 = vmatprep.subr.mxu0 0.0
        %3868 = vmatpush1.msra.mxu0 0.0
        %3869 = vmatprep.subr.mxu0 0.0
        %3870 = vmatpush1.msra.mxu0 0.0
        %3871 = vmatprep.subr.mxu0 0.0
        %3872 = vmatpush1.msra.mxu0 0.0
        %3873 = vmatprep.subr.mxu0 0.0
        %3874 = vmatpush1.msra.mxu0 0.0
        %3875 = vmatprep.subr.mxu0 0.0
        %3876 = vmatpush1.msra.mxu0 0.0
        %3877 = vmatprep.subr.mxu0 0.0
        %3878 = vmatpush1.msra.mxu0 0.0
        %3879 = vmatprep.subr.mxu0 0.0
        %3880 = vmatpush1.msra.mxu0 0.0
        %3881 = vmatprep.subr.mxu0 0.0
        %3882 = vmatpush1.msra.mxu0 0.0
        %3883 = vmatprep.subr.mxu0 0.0
        %3884 = vmatpush1.msra.mxu0 0.0
        %3885 = vmatprep.subr.mxu0 0.0
        %3886 = vmatpush1.msra.mxu0 0.0
        %3887 = vmatprep.subr.mxu0 0.0
        %3888 = vmatpush1.msra.mxu0 0.0
        %3889 = vmatprep.mubr.f32.mxu0 0.0
        %3890 = vmatmul.mubr.f32.gmra.mrb[0].mxu0 %v3494
        %v3891 = vpop.f32.mrb[0].mxu0
        %v3892 = vadd.f32 0.0, %v3891
        %v3893 = vpop.f32.mrb[0].mxu0
        %3894 = vmatprep.mubr.f32.mxu0 0.0
        %3895 = vmatmul.mubr.f32.gmra.mrb[0].mxu0 %v3497
        %v3896 = vpop.f32.mrb[0].mxu0
        %v3897 = vadd.f32 0.0, %v3896
        %v3898 = vpop.f32.mrb[0].mxu0
        %3899 = vdwg.mxu0
        %v3900 = vadd.f32 %v3427, %v3584
        %v3901 = vadd.f32 %v3428, %v3586
        %v3902 = vadd.f32 %v3429, %v3661
        %v3903 = vadd.f32 %v3430, %v3663
        %v3904 = vadd.f32 %v3431, %v3738
        %v3905 = vadd.f32 %v3432, %v3740
        %v3906 = vadd.f32 %v3433, %v3815
        %v3907 = vadd.f32 %v3434, %v3817
        %v3908 = vadd.f32 %v3435, %v3892
        %v3909 = vadd.f32 %v3436, %v3590
        %v3910 = vadd.f32 %v3437, %v3592
        %v3911 = vadd.f32 %v3438, %v3667
        %v3912 = vadd.f32 %v3439, %v3669
        %v3913 = vadd.f32 %v3440, %v3744
        %v3914 = vadd.f32 %v3441, %v3746
        %v3915 = vadd.f32 %v3442, %v3821
        %v3916 = vadd.f32 %v3443, %v3823
        %v3917 = vadd.f32 %v3444, %v3897
        %v3918 = vld [vmem:[%s229] sm:$0xff]
        %v3919 = vld [vmem:[%s229 + $0x8] sm:$0xff]
        %v3920 = vld [vmem:[%s229 + $0x10] sm:$0xff]
        %v3921 = vld [vmem:[%s229 + $0x18] sm:$0xff]
        %v3922 = vld [vmem:[%s229 + $0x20] sm:$0xff]
        %s3923 = scalar_lea.vmem %s1, 128
        %v3924 = vld [vmem:[%s3923] sm:$0xff]
        %v3925 = vld [vmem:[%s3923 + $0x8] sm:$0xff]
        %v3931 = vcombine.high %v3918, %v3918
        %v3932 = vcombine.high %v3919, %v3919
        %v3933 = vcombine.high %v3920, %v3920
        %v3934 = vcombine.high %v3921, %v3921
        %v3935 = vcombine.high %v3922, %v3922
        %3936 = vrot.lane.b32.xlu0 %v3918, 58
        %v3937 = vpop.permute.xlu0 %3936
        %3938 = vrot.lane.b32.xlu0 %v3931, 58
        %v3939 = vpop.permute.xlu0 %3938
        %3940 = vrot.lane.b32.xlu0 %v3919, 58
        %v3941 = vpop.permute.xlu0 %3940
        %3942 = vrot.lane.b32.xlu0 %v3932, 58
        %v3943 = vpop.permute.xlu0 %3942
        %3944 = vrot.lane.b32.xlu0 %v3920, 58
        %v3945 = vpop.permute.xlu0 %3944
        %3946 = vrot.lane.b32.xlu0 %v3933, 58
        %v3947 = vpop.permute.xlu0 %3946
        %3948 = vrot.lane.b32.xlu0 %v3921, 58
        %v3949 = vpop.permute.xlu0 %3948
        %3950 = vrot.lane.b32.xlu0 %v3934, 58
        %v3951 = vpop.permute.xlu0 %3950
        %3952 = vrot.lane.b32.xlu0 %v3922, 58
        %v3953 = vpop.permute.xlu0 %3952
        %3954 = vrot.lane.b32.xlu0 %v3935, 58
        %v3955 = vpop.permute.xlu0 %3954
        %vm3956 = vcmask 474112
        %v3957 = vsel %vm3956, %v3937, %v3939
        %v3958 = vsel %vm3956, %v3939, %v3941
        %v3959 = vsel %vm3956, %v3941, %v3943
        %v3960 = vsel %vm3956, %v3943, %v3945
        %v3961 = vsel %vm3956, %v3945, %v3947
        %v3962 = vsel %vm3956, %v3947, %v3949
        %v3963 = vsel %vm3956, %v3949, %v3951
        %v3964 = vsel %vm3956, %v3951, %v3953
        %v3965 = vsel %vm3956, %v3953, %v3955
        %v3967 = vsel %vm280, %v3924, 0
        %v3970 = vsel %vm280, %v3925, 0
        %v3972 = vsel %vm287, %v3957, 0
        %v3974 = vsel %vm287, %v3958, 0
        %v3976 = vsel %vm287, %v3959, 0
        %v3978 = vsel %vm287, %v3960, 0
        %v3980 = vsel %vm287, %v3961, 0
        %v3982 = vsel %vm287, %v3962, 0
        %v3984 = vsel %vm287, %v3963, 0
        %v3986 = vsel %vm287, %v3964, 0
        %v3988 = vsel %vm287, %v3965, 0
        %3990 = vmatprep.subr.mxu0 %v3974
        %3991 = vmatpush1.msra.mxu0 %v3972
        %3992 = vmatprep.subr.mxu0 0.0
        %3993 = vmatpush1.msra.mxu0 0.0
        %3994 = vmatprep.subr.mxu0 0.0
        %3995 = vmatpush1.msra.mxu0 0.0
        %3996 = vmatprep.subr.mxu0 0.0
        %3997 = vmatpush1.msra.mxu0 0.0
        %3998 = vmatprep.subr.mxu0 0.0
        %3999 = vmatpush1.msra.mxu0 0.0
        %4000 = vmatprep.subr.mxu0 0.0
        %4001 = vmatpush1.msra.mxu0 0.0
        %4002 = vmatprep.subr.mxu0 0.0
        %4003 = vmatpush1.msra.mxu0 0.0
        %4004 = vmatprep.subr.mxu0 0.0
        %4005 = vmatpush1.msra.mxu0 0.0
        %4006 = vmatprep.subr.mxu0 0.0
        %4007 = vmatpush1.msra.mxu0 0.0
        %4008 = vmatprep.subr.mxu0 0.0
        %4009 = vmatpush1.msra.mxu0 0.0
        %4010 = vmatprep.subr.mxu0 0.0
        %4011 = vmatpush1.msra.mxu0 0.0
        %4012 = vmatprep.subr.mxu0 0.0
        %4013 = vmatpush1.msra.mxu0 0.0
        %4014 = vmatprep.subr.mxu0 0.0
        %4015 = vmatpush1.msra.mxu0 0.0
        %4016 = vmatprep.subr.mxu0 0.0
        %4017 = vmatpush1.msra.mxu0 0.0
        %4018 = vmatprep.subr.mxu0 0.0
        %4019 = vmatpush1.msra.mxu0 0.0
        %4020 = vmatprep.subr.mxu0 0.0
        %4021 = vmatpush1.msra.mxu0 0.0
        %4022 = vmatprep.subr.mxu0 0.0
        %4023 = vmatpush1.msra.mxu0 0.0
        %4024 = vmatprep.subr.mxu0 0.0
        %4025 = vmatpush1.msra.mxu0 0.0
        %4026 = vmatprep.subr.mxu0 0.0
        %4027 = vmatpush1.msra.mxu0 0.0
        %4028 = vmatprep.subr.mxu0 0.0
        %4029 = vmatpush1.msra.mxu0 0.0
        %4030 = vmatprep.subr.mxu0 0.0
        %4031 = vmatpush1.msra.mxu0 0.0
        %4032 = vmatprep.subr.mxu0 0.0
        %4033 = vmatpush1.msra.mxu0 0.0
        %4034 = vmatprep.subr.mxu0 0.0
        %4035 = vmatpush1.msra.mxu0 0.0
        %4036 = vmatprep.subr.mxu0 0.0
        %4037 = vmatpush1.msra.mxu0 0.0
        %4038 = vmatprep.subr.mxu0 0.0
        %4039 = vmatpush1.msra.mxu0 0.0
        %4040 = vmatprep.subr.mxu0 0.0
        %4041 = vmatpush1.msra.mxu0 0.0
        %4042 = vmatprep.subr.mxu0 0.0
        %4043 = vmatpush1.msra.mxu0 0.0
        %4044 = vmatprep.subr.mxu0 0.0
        %4045 = vmatpush1.msra.mxu0 0.0
        %4046 = vmatprep.subr.mxu0 0.0
        %4047 = vmatpush1.msra.mxu0 0.0
        %4048 = vmatprep.subr.mxu0 0.0
        %4049 = vmatpush1.msra.mxu0 0.0
        %4050 = vmatprep.subr.mxu0 0.0
        %4051 = vmatpush1.msra.mxu0 0.0
        %4052 = vmatprep.subr.mxu0 0.0
        %4053 = vmatpush1.msra.mxu0 0.0
        %4054 = vmatprep.mubr.f32.mxu0 0.0
        %4055 = vmatmul.mubr.f32.gmra.mrb[0].mxu0 %v3967
        %v4056 = vpop.f32.mrb[0].mxu0
        %v4057 = vadd.f32 0.0, %v4056
        %v4058 = vpop.f32.mrb[0].mxu0
        %v4059 = vadd.f32 0.0, %v4058
        %4060 = vmatprep.mubr.f32.mxu0 0.0
        %4061 = vmatmul.mubr.f32.gmra.mrb[0].mxu0 %v3970
        %v4062 = vpop.f32.mrb[0].mxu0
        %v4063 = vadd.f32 0.0, %v4062
        %v4064 = vpop.f32.mrb[0].mxu0
        %v4065 = vadd.f32 0.0, %v4064
        %4066 = vdwg.mxu0
        %4067 = vmatprep.subr.mxu0 %v3978
        %4068 = vmatpush1.msra.mxu0 %v3976
        %4069 = vmatprep.subr.mxu0 0.0
        %4070 = vmatpush1.msra.mxu0 0.0
        %4071 = vmatprep.subr.mxu0 0.0
        %4072 = vmatpush1.msra.mxu0 0.0
        %4073 = vmatprep.subr.mxu0 0.0
        %4074 = vmatpush1.msra.mxu0 0.0
        %4075 = vmatprep.subr.mxu0 0.0
        %4076 = vmatpush1.msra.mxu0 0.0
        %4077 = vmatprep.subr.mxu0 0.0
        %4078 = vmatpush1.msra.mxu0 0.0
        %4079 = vmatprep.subr.mxu0 0.0
        %4080 = vmatpush1.msra.mxu0 0.0
        %4081 = vmatprep.subr.mxu0 0.0
        %4082 = vmatpush1.msra.mxu0 0.0
        %4083 = vmatprep.subr.mxu0 0.0
        %4084 = vmatpush1.msra.mxu0 0.0
        %4085 = vmatprep.subr.mxu0 0.0
        %4086 = vmatpush1.msra.mxu0 0.0
        %4087 = vmatprep.subr.mxu0 0.0
        %4088 = vmatpush1.msra.mxu0 0.0
        %4089 = vmatprep.subr.mxu0 0.0
        %4090 = vmatpush1.msra.mxu0 0.0
        %4091 = vmatprep.subr.mxu0 0.0
        %4092 = vmatpush1.msra.mxu0 0.0
        %4093 = vmatprep.subr.mxu0 0.0
        %4094 = vmatpush1.msra.mxu0 0.0
        %4095 = vmatprep.subr.mxu0 0.0
        %4096 = vmatpush1.msra.mxu0 0.0
        %4097 = vmatprep.subr.mxu0 0.0
        %4098 = vmatpush1.msra.mxu0 0.0
        %4099 = vmatprep.subr.mxu0 0.0
        %4100 = vmatpush1.msra.mxu0 0.0
        %4101 = vmatprep.subr.mxu0 0.0
        %4102 = vmatpush1.msra.mxu0 0.0
        %4103 = vmatprep.subr.mxu0 0.0
        %4104 = vmatpush1.msra.mxu0 0.0
        %4105 = vmatprep.subr.mxu0 0.0
        %4106 = vmatpush1.msra.mxu0 0.0
        %4107 = vmatprep.subr.mxu0 0.0
        %4108 = vmatpush1.msra.mxu0 0.0
        %4109 = vmatprep.subr.mxu0 0.0
        %4110 = vmatpush1.msra.mxu0 0.0
        %4111 = vmatprep.subr.mxu0 0.0
        %4112 = vmatpush1.msra.mxu0 0.0
        %4113 = vmatprep.subr.mxu0 0.0
        %4114 = vmatpush1.msra.mxu0 0.0
        %4115 = vmatprep.subr.mxu0 0.0
        %4116 = vmatpush1.msra.mxu0 0.0
        %4117 = vmatprep.subr.mxu0 0.0
        %4118 = vmatpush1.msra.mxu0 0.0
        %4119 = vmatprep.subr.mxu0 0.0
        %4120 = vmatpush1.msra.mxu0 0.0
        %4121 = vmatprep.subr.mxu0 0.0
        %4122 = vmatpush1.msra.mxu0 0.0
        %4123 = vmatprep.subr.mxu0 0.0
        %4124 = vmatpush1.msra.mxu0 0.0
        %4125 = vmatprep.subr.mxu0 0.0
        %4126 = vmatpush1.msra.mxu0 0.0
        %4127 = vmatprep.subr.mxu0 0.0
        %4128 = vmatpush1.msra.mxu0 0.0
        %4129 = vmatprep.subr.mxu0 0.0
        %4130 = vmatpush1.msra.mxu0 0.0
        %4131 = vmatprep.mubr.f32.mxu0 0.0
        %4132 = vmatmul.mubr.f32.gmra.mrb[0].mxu0 %v3967
        %v4133 = vpop.f32.mrb[0].mxu0
        %v4134 = vadd.f32 0.0, %v4133
        %v4135 = vpop.f32.mrb[0].mxu0
        %v4136 = vadd.f32 0.0, %v4135
        %4137 = vmatprep.mubr.f32.mxu0 0.0
        %4138 = vmatmul.mubr.f32.gmra.mrb[0].mxu0 %v3970
        %v4139 = vpop.f32.mrb[0].mxu0
        %v4140 = vadd.f32 0.0, %v4139
        %v4141 = vpop.f32.mrb[0].mxu0
        %v4142 = vadd.f32 0.0, %v4141
        %4143 = vdwg.mxu0
        %4144 = vmatprep.subr.mxu0 %v3982
        %4145 = vmatpush1.msra.mxu0 %v3980
        %4146 = vmatprep.subr.mxu0 0.0
        %4147 = vmatpush1.msra.mxu0 0.0
        %4148 = vmatprep.subr.mxu0 0.0
        %4149 = vmatpush1.msra.mxu0 0.0
        %4150 = vmatprep.subr.mxu0 0.0
        %4151 = vmatpush1.msra.mxu0 0.0
        %4152 = vmatprep.subr.mxu0 0.0
        %4153 = vmatpush1.msra.mxu0 0.0
        %4154 = vmatprep.subr.mxu0 0.0
        %4155 = vmatpush1.msra.mxu0 0.0
        %4156 = vmatprep.subr.mxu0 0.0
        %4157 = vmatpush1.msra.mxu0 0.0
        %4158 = vmatprep.subr.mxu0 0.0
        %4159 = vmatpush1.msra.mxu0 0.0
        %4160 = vmatprep.subr.mxu0 0.0
        %4161 = vmatpush1.msra.mxu0 0.0
        %4162 = vmatprep.subr.mxu0 0.0
        %4163 = vmatpush1.msra.mxu0 0.0
        %4164 = vmatprep.subr.mxu0 0.0
        %4165 = vmatpush1.msra.mxu0 0.0
        %4166 = vmatprep.subr.mxu0 0.0
        %4167 = vmatpush1.msra.mxu0 0.0
        %4168 = vmatprep.subr.mxu0 0.0
        %4169 = vmatpush1.msra.mxu0 0.0
        %4170 = vmatprep.subr.mxu0 0.0
        %4171 = vmatpush1.msra.mxu0 0.0
        %4172 = vmatprep.subr.mxu0 0.0
        %4173 = vmatpush1.msra.mxu0 0.0
        %4174 = vmatprep.subr.mxu0 0.0
        %4175 = vmatpush1.msra.mxu0 0.0
        %4176 = vmatprep.subr.mxu0 0.0
        %4177 = vmatpush1.msra.mxu0 0.0
        %4178 = vmatprep.subr.mxu0 0.0
        %4179 = vmatpush1.msra.mxu0 0.0
        %4180 = vmatprep.subr.mxu0 0.0
        %4181 = vmatpush1.msra.mxu0 0.0
        %4182 = vmatprep.subr.mxu0 0.0
        %4183 = vmatpush1.msra.mxu0 0.0
        %4184 = vmatprep.subr.mxu0 0.0
        %4185 = vmatpush1.msra.mxu0 0.0
        %4186 = vmatprep.subr.mxu0 0.0
        %4187 = vmatpush1.msra.mxu0 0.0
        %4188 = vmatprep.subr.mxu0 0.0
        %4189 = vmatpush1.msra.mxu0 0.0
        %4190 = vmatprep.subr.mxu0 0.0
        %4191 = vmatpush1.msra.mxu0 0.0
        %4192 = vmatprep.subr.mxu0 0.0
        %4193 = vmatpush1.msra.mxu0 0.0
        %4194 = vmatprep.subr.mxu0 0.0
        %4195 = vmatpush1.msra.mxu0 0.0
        %4196 = vmatprep.subr.mxu0 0.0
        %4197 = vmatpush1.msra.mxu0 0.0
        %4198 = vmatprep.subr.mxu0 0.0
        %4199 = vmatpush1.msra.mxu0 0.0
        %4200 = vmatprep.subr.mxu0 0.0
        %4201 = vmatpush1.msra.mxu0 0.0
        %4202 = vmatprep.subr.mxu0 0.0
        %4203 = vmatpush1.msra.mxu0 0.0
        %4204 = vmatprep.subr.mxu0 0.0
        %4205 = vmatpush1.msra.mxu0 0.0
        %4206 = vmatprep.subr.mxu0 0.0
        %4207 = vmatpush1.msra.mxu0 0.0
        %4208 = vmatprep.mubr.f32.mxu0 0.0
        %4209 = vmatmul.mubr.f32.gmra.mrb[0].mxu0 %v3967
        %v4210 = vpop.f32.mrb[0].mxu0
        %v4211 = vadd.f32 0.0, %v4210
        %v4212 = vpop.f32.mrb[0].mxu0
        %v4213 = vadd.f32 0.0, %v4212
        %4214 = vmatprep.mubr.f32.mxu0 0.0
        %4215 = vmatmul.mubr.f32.gmra.mrb[0].mxu0 %v3970
        %v4216 = vpop.f32.mrb[0].mxu0
        %v4217 = vadd.f32 0.0, %v4216
        %v4218 = vpop.f32.mrb[0].mxu0
        %v4219 = vadd.f32 0.0, %v4218
        %4220 = vdwg.mxu0
        %4221 = vmatprep.subr.mxu0 %v3986
        %4222 = vmatpush1.msra.mxu0 %v3984
        %4223 = vmatprep.subr.mxu0 0.0
        %4224 = vmatpush1.msra.mxu0 0.0
        %4225 = vmatprep.subr.mxu0 0.0
        %4226 = vmatpush1.msra.mxu0 0.0
        %4227 = vmatprep.subr.mxu0 0.0
        %4228 = vmatpush1.msra.mxu0 0.0
        %4229 = vmatprep.subr.mxu0 0.0
        %4230 = vmatpush1.msra.mxu0 0.0
        %4231 = vmatprep.subr.mxu0 0.0
        %4232 = vmatpush1.msra.mxu0 0.0
        %4233 = vmatprep.subr.mxu0 0.0
        %4234 = vmatpush1.msra.mxu0 0.0
        %4235 = vmatprep.subr.mxu0 0.0
        %4236 = vmatpush1.msra.mxu0 0.0
        %4237 = vmatprep.subr.mxu0 0.0
        %4238 = vmatpush1.msra.mxu0 0.0
        %4239 = vmatprep.subr.mxu0 0.0
        %4240 = vmatpush1.msra.mxu0 0.0
        %4241 = vmatprep.subr.mxu0 0.0
        %4242 = vmatpush1.msra.mxu0 0.0
        %4243 = vmatprep.subr.mxu0 0.0
        %4244 = vmatpush1.msra.mxu0 0.0
        %4245 = vmatprep.subr.mxu0 0.0
        %4246 = vmatpush1.msra.mxu0 0.0
        %4247 = vmatprep.subr.mxu0 0.0
        %4248 = vmatpush1.msra.mxu0 0.0
        %4249 = vmatprep.subr.mxu0 0.0
        %4250 = vmatpush1.msra.mxu0 0.0
        %4251 = vmatprep.subr.mxu0 0.0
        %4252 = vmatpush1.msra.mxu0 0.0
        %4253 = vmatprep.subr.mxu0 0.0
        %4254 = vmatpush1.msra.mxu0 0.0
        %4255 = vmatprep.subr.mxu0 0.0
        %4256 = vmatpush1.msra.mxu0 0.0
        %4257 = vmatprep.subr.mxu0 0.0
        %4258 = vmatpush1.msra.mxu0 0.0
        %4259 = vmatprep.subr.mxu0 0.0
        %4260 = vmatpush1.msra.mxu0 0.0
        %4261 = vmatprep.subr.mxu0 0.0
        %4262 = vmatpush1.msra.mxu0 0.0
        %4263 = vmatprep.subr.mxu0 0.0
        %4264 = vmatpush1.msra.mxu0 0.0
        %4265 = vmatprep.subr.mxu0 0.0
        %4266 = vmatpush1.msra.mxu0 0.0
        %4267 = vmatprep.subr.mxu0 0.0
        %4268 = vmatpush1.msra.mxu0 0.0
        %4269 = vmatprep.subr.mxu0 0.0
        %4270 = vmatpush1.msra.mxu0 0.0
        %4271 = vmatprep.subr.mxu0 0.0
        %4272 = vmatpush1.msra.mxu0 0.0
        %4273 = vmatprep.subr.mxu0 0.0
        %4274 = vmatpush1.msra.mxu0 0.0
        %4275 = vmatprep.subr.mxu0 0.0
        %4276 = vmatpush1.msra.mxu0 0.0
        %4277 = vmatprep.subr.mxu0 0.0
        %4278 = vmatpush1.msra.mxu0 0.0
        %4279 = vmatprep.subr.mxu0 0.0
        %4280 = vmatpush1.msra.mxu0 0.0
        %4281 = vmatprep.subr.mxu0 0.0
        %4282 = vmatpush1.msra.mxu0 0.0
        %4283 = vmatprep.subr.mxu0 0.0
        %4284 = vmatpush1.msra.mxu0 0.0
        %4285 = vmatprep.mubr.f32.mxu0 0.0
        %4286 = vmatmul.mubr.f32.gmra.mrb[0].mxu0 %v3967
        %v4287 = vpop.f32.mrb[0].mxu0
        %v4288 = vadd.f32 0.0, %v4287
        %v4289 = vpop.f32.mrb[0].mxu0
        %v4290 = vadd.f32 0.0, %v4289
        %4291 = vmatprep.mubr.f32.mxu0 0.0
        %4292 = vmatmul.mubr.f32.gmra.mrb[0].mxu0 %v3970
        %v4293 = vpop.f32.mrb[0].mxu0
        %v4294 = vadd.f32 0.0, %v4293
        %v4295 = vpop.f32.mrb[0].mxu0
        %v4296 = vadd.f32 0.0, %v4295
        %4297 = vdwg.mxu0
        %4298 = vmatprep.subr.mxu0 0.0
        %4299 = vmatpush1.msra.mxu0 %v3988
        %4300 = vmatprep.subr.mxu0 0.0
        %4301 = vmatpush1.msra.mxu0 0.0
        %4302 = vmatprep.subr.mxu0 0.0
        %4303 = vmatpush1.msra.mxu0 0.0
        %4304 = vmatprep.subr.mxu0 0.0
        %4305 = vmatpush1.msra.mxu0 0.0
        %4306 = vmatprep.subr.mxu0 0.0
        %4307 = vmatpush1.msra.mxu0 0.0
        %4308 = vmatprep.subr.mxu0 0.0
        %4309 = vmatpush1.msra.mxu0 0.0
        %4310 = vmatprep.subr.mxu0 0.0
        %4311 = vmatpush1.msra.mxu0 0.0
        %4312 = vmatprep.subr.mxu0 0.0
        %4313 = vmatpush1.msra.mxu0 0.0
        %4314 = vmatprep.subr.mxu0 0.0
        %4315 = vmatpush1.msra.mxu0 0.0
        %4316 = vmatprep.subr.mxu0 0.0
        %4317 = vmatpush1.msra.mxu0 0.0
        %4318 = vmatprep.subr.mxu0 0.0
        %4319 = vmatpush1.msra.mxu0 0.0
        %4320 = vmatprep.subr.mxu0 0.0
        %4321 = vmatpush1.msra.mxu0 0.0
        %4322 = vmatprep.subr.mxu0 0.0
        %4323 = vmatpush1.msra.mxu0 0.0
        %4324 = vmatprep.subr.mxu0 0.0
        %4325 = vmatpush1.msra.mxu0 0.0
        %4326 = vmatprep.subr.mxu0 0.0
        %4327 = vmatpush1.msra.mxu0 0.0
        %4328 = vmatprep.subr.mxu0 0.0
        %4329 = vmatpush1.msra.mxu0 0.0
        %4330 = vmatprep.subr.mxu0 0.0
        %4331 = vmatpush1.msra.mxu0 0.0
        %4332 = vmatprep.subr.mxu0 0.0
        %4333 = vmatpush1.msra.mxu0 0.0
        %4334 = vmatprep.subr.mxu0 0.0
        %4335 = vmatpush1.msra.mxu0 0.0
        %4336 = vmatprep.subr.mxu0 0.0
        %4337 = vmatpush1.msra.mxu0 0.0
        %4338 = vmatprep.subr.mxu0 0.0
        %4339 = vmatpush1.msra.mxu0 0.0
        %4340 = vmatprep.subr.mxu0 0.0
        %4341 = vmatpush1.msra.mxu0 0.0
        %4342 = vmatprep.subr.mxu0 0.0
        %4343 = vmatpush1.msra.mxu0 0.0
        %4344 = vmatprep.subr.mxu0 0.0
        %4345 = vmatpush1.msra.mxu0 0.0
        %4346 = vmatprep.subr.mxu0 0.0
        %4347 = vmatpush1.msra.mxu0 0.0
        %4348 = vmatprep.subr.mxu0 0.0
        %4349 = vmatpush1.msra.mxu0 0.0
        %4350 = vmatprep.subr.mxu0 0.0
        %4351 = vmatpush1.msra.mxu0 0.0
        %4352 = vmatprep.subr.mxu0 0.0
        %4353 = vmatpush1.msra.mxu0 0.0
        %4354 = vmatprep.subr.mxu0 0.0
        %4355 = vmatpush1.msra.mxu0 0.0
        %4356 = vmatprep.subr.mxu0 0.0
        %4357 = vmatpush1.msra.mxu0 0.0
        %4358 = vmatprep.subr.mxu0 0.0
        %4359 = vmatpush1.msra.mxu0 0.0
        %4360 = vmatprep.subr.mxu0 0.0
        %4361 = vmatpush1.msra.mxu0 0.0
        %4362 = vmatprep.mubr.f32.mxu0 0.0
        %4363 = vmatmul.mubr.f32.gmra.mrb[0].mxu0 %v3967
        %v4364 = vpop.f32.mrb[0].mxu0
        %v4365 = vadd.f32 0.0, %v4364
        %v4366 = vpop.f32.mrb[0].mxu0
        %4367 = vmatprep.mubr.f32.mxu0 0.0
        %4368 = vmatmul.mubr.f32.gmra.mrb[0].mxu0 %v3970
        %v4369 = vpop.f32.mrb[0].mxu0
        %v4370 = vadd.f32 0.0, %v4369
        %v4371 = vpop.f32.mrb[0].mxu0
        %4372 = vdwg.mxu0
        %v4373 = vadd.f32 %v3900, %v4057
        %v4374 = vadd.f32 %v3901, %v4059
        %v4375 = vadd.f32 %v3902, %v4134
        %v4376 = vadd.f32 %v3903, %v4136
        %v4377 = vadd.f32 %v3904, %v4211
        %v4378 = vadd.f32 %v3905, %v4213
        %v4379 = vadd.f32 %v3906, %v4288
        %v4380 = vadd.f32 %v3907, %v4290
        %v4381 = vadd.f32 %v3908, %v4365
        %v4382 = vadd.f32 %v3909, %v4063
        %v4383 = vadd.f32 %v3910, %v4065
        %v4384 = vadd.f32 %v3911, %v4140
        %v4385 = vadd.f32 %v3912, %v4142
        %v4386 = vadd.f32 %v3913, %v4217
        %v4387 = vadd.f32 %v3914, %v4219
        %v4388 = vadd.f32 %v3915, %v4294
        %v4389 = vadd.f32 %v3916, %v4296
        %v4390 = vadd.f32 %v3917, %v4370
        %v4391 = vld [vmem:[%s2] sm:$0xff]
        %v4392 = vld [vmem:[%s2 + $0x8] sm:$0xff]
        %4394 = vset.pattern.permute.xlu0 0
        %4395 = vperm.xlu0 %4394, %v4391
        %v4396 = vpop.permute.xlu0 %4395
        %4399 = vset.pattern.permute.xlu0 0
        %4400 = vperm.xlu0 %4399, %v4392
        %v4401 = vpop.permute.xlu0 %4400
        %v4403 = vadd.f32 %v4373, %v4396
        %v4404 = vadd.f32 %v4374, %v4396
        %v4405 = vadd.f32 %v4375, %v4396
        %v4406 = vadd.f32 %v4376, %v4396
        %v4407 = vadd.f32 %v4377, %v4396
        %v4408 = vadd.f32 %v4378, %v4396
        %v4409 = vadd.f32 %v4379, %v4396
        %v4410 = vadd.f32 %v4380, %v4396
        %v4411 = vadd.f32 %v4381, %v4396
        %v4412 = vadd.f32 %v4382, %v4401
        %v4413 = vadd.f32 %v4383, %v4401
        %v4414 = vadd.f32 %v4384, %v4401
        %v4415 = vadd.f32 %v4385, %v4401
        %v4416 = vadd.f32 %v4386, %v4401
        %v4417 = vadd.f32 %v4387, %v4401
        %v4418 = vadd.f32 %v4388, %v4401
        %v4419 = vadd.f32 %v4389, %v4401
        %v4420 = vadd.f32 %v4390, %v4401
        %vm4421 = vcmp.gt.f32.partialorder %v4403, 0.0
        %vm4422 = vcmp.gt.f32.partialorder %v4404, 0.0
        %vm4423 = vcmp.gt.f32.partialorder %v4405, 0.0
        %vm4424 = vcmp.gt.f32.partialorder %v4406, 0.0
        %vm4425 = vcmp.gt.f32.partialorder %v4407, 0.0
        %vm4426 = vcmp.gt.f32.partialorder %v4408, 0.0
        %vm4427 = vcmp.gt.f32.partialorder %v4409, 0.0
        %vm4428 = vcmp.gt.f32.partialorder %v4410, 0.0
        %vm4429 = vcmp.gt.f32.partialorder %v4411, 0.0
        %v4430 = vmul.f32 %v4403, 0.2
        %v4431 = vmul.f32 %v4404, 0.2
        %v4432 = vmul.f32 %v4405, 0.2
        %v4433 = vmul.f32 %v4406, 0.2
        %v4434 = vmul.f32 %v4407, 0.2
        %v4435 = vmul.f32 %v4408, 0.2
        %v4436 = vmul.f32 %v4409, 0.2
        %v4437 = vmul.f32 %v4410, 0.2
        %v4438 = vmul.f32 %v4411, 0.2
        %v4439 = vsel %vm4421, %v4403, %v4430
        %v4440 = vsel %vm4422, %v4404, %v4431
        %v4441 = vsel %vm4423, %v4405, %v4432
        %v4442 = vsel %vm4424, %v4406, %v4433
        %v4443 = vsel %vm4425, %v4407, %v4434
        %v4444 = vsel %vm4426, %v4408, %v4435
        %v4445 = vsel %vm4427, %v4409, %v4436
        %v4446 = vsel %vm4428, %v4410, %v4437
        %v4447 = vsel %vm4429, %v4411, %v4438
        %v4448 = vsub.f32 0.0, %v4412
        %v4449 = vsub.f32 0.0, %v4413
        %v4450 = vsub.f32 0.0, %v4414
        %v4451 = vsub.f32 0.0, %v4415
        %v4452 = vsub.f32 0.0, %v4416
        %v4453 = vsub.f32 0.0, %v4417
        %v4454 = vsub.f32 0.0, %v4418
        %v4455 = vsub.f32 0.0, %v4419
        %v4456 = vsub.f32 0.0, %v4420
        %v4457 = vmul.f32 %v4448, 1.442695
        %v4458 = vpow.pop %v4457
        %v4459 = vmul.f32 %v4449, 1.442695
        %v4460 = vpow.pop %v4459
        %v4461 = vmul.f32 %v4450, 1.442695
        %v4462 = vpow.pop %v4461
        %v4463 = vmul.f32 %v4451, 1.442695
        %v4464 = vpow.pop %v4463
        %v4465 = vmul.f32 %v4452, 1.442695
        %v4466 = vpow.pop %v4465
        %v4467 = vmul.f32 %v4453, 1.442695
        %v4468 = vpow.pop %v4467
        %v4469 = vmul.f32 %v4454, 1.442695
        %v4470 = vpow.pop %v4469
        %v4471 = vmul.f32 %v4455, 1.442695
        %v4472 = vpow.pop %v4471
        %v4473 = vmul.f32 %v4456, 1.442695
        %v4474 = vpow.pop %v4473
        %v4475 = vadd.f32 %v4458, 1.0
        %v4476 = vadd.f32 %v4460, 1.0
        %v4477 = vadd.f32 %v4462, 1.0
        %v4478 = vadd.f32 %v4464, 1.0
        %v4479 = vadd.f32 %v4466, 1.0
        %v4480 = vadd.f32 %v4468, 1.0
        %v4481 = vadd.f32 %v4470, 1.0
        %v4482 = vadd.f32 %v4472, 1.0
        %v4483 = vadd.f32 %v4474, 1.0
        %v4484 = vrcp.pop %v4475
        %v4485 = vmul.f32 1.0, %v4484
        %v4486 = vrcp.pop %v4476
        %v4487 = vmul.f32 1.0, %v4486
        %v4488 = vrcp.pop %v4477
        %v4489 = vmul.f32 1.0, %v4488
        %v4490 = vrcp.pop %v4478
        %v4491 = vmul.f32 1.0, %v4490
        %v4492 = vrcp.pop %v4479
        %v4493 = vmul.f32 1.0, %v4492
        %v4494 = vrcp.pop %v4480
        %v4495 = vmul.f32 1.0, %v4494
        %v4496 = vrcp.pop %v4481
        %v4497 = vmul.f32 1.0, %v4496
        %v4498 = vrcp.pop %v4482
        %v4499 = vmul.f32 1.0, %v4498
        %v4500 = vrcp.pop %v4483
        %v4501 = vmul.f32 1.0, %v4500
        %v4502 = vmul.f32 %v4439, %v4485
        %v4503 = vmul.f32 %v4440, %v4487
        %v4504 = vmul.f32 %v4441, %v4489
        %v4505 = vmul.f32 %v4442, %v4491
        %v4506 = vmul.f32 %v4443, %v4493
        %v4507 = vmul.f32 %v4444, %v4495
        %v4508 = vmul.f32 %v4445, %v4497
        %v4509 = vmul.f32 %v4446, %v4499
        %v4510 = vmul.f32 %v4447, %v4501
        %4511 = vst [vmem:[%s218] sm:$0xff] %v4502
        %4512 = vst [vmem:[%s218 + $0x8] sm:$0xff] %v4503
        %4513 = vst [vmem:[%s218 + $0x10] sm:$0xff] %v4504
        %4514 = vst [vmem:[%s218 + $0x18] sm:$0xff] %v4505
        %4515 = vst [vmem:[%s218 + $0x20] sm:$0xff] %v4506
        %4516 = vst [vmem:[%s218 + $0x28] sm:$0xff] %v4507
        %4517 = vst [vmem:[%s218 + $0x30] sm:$0xff] %v4508
        %4518 = vst [vmem:[%s218 + $0x38] sm:$0xff] %v4509
        %vm4519 = vcmask 523264
        %4520 = vst.msk [vmem:[%s218 + $0x40] sm:$0xff] %vm4519, %v4510
        %v4521 = vld [vmem:[%s3] sm:$0xff]
        %v4522 = vld [vmem:[%s3 + $0x8] sm:$0x1]
        %v4525 = vlaneseq
        %v4526 = vshrl.u32 %v4525, 7
        %v4527 = vsub.s32 0, %v4526
        %v4528 = vrot.slane %v4521, %v4527
        %v4529 = vlaneseq
        %v4530 = vshrl.u32 %v4529, 7
        %v4531 = vsub.s32 1, %v4530
        %v4532 = vrot.slane %v4521, %v4531
        %v4533 = vlaneseq
        %v4534 = vshrl.u32 %v4533, 7
        %v4535 = vsub.s32 2, %v4534
        %v4536 = vrot.slane %v4521, %v4535
        %v4537 = vlaneseq
        %v4538 = vshrl.u32 %v4537, 7
        %v4539 = vsub.s32 3, %v4538
        %v4540 = vrot.slane %v4521, %v4539
        %v4541 = vlaneseq
        %v4542 = vshrl.u32 %v4541, 7
        %v4543 = vsub.s32 4, %v4542
        %v4544 = vrot.slane %v4521, %v4543
        %v4545 = vlaneseq
        %v4546 = vshrl.u32 %v4545, 7
        %v4547 = vsub.s32 5, %v4546
        %v4548 = vrot.slane %v4521, %v4547
        %v4549 = vlaneseq
        %v4550 = vshrl.u32 %v4549, 7
        %v4551 = vsub.s32 6, %v4550
        %v4552 = vrot.slane %v4521, %v4551
        %v4553 = vlaneseq
        %v4554 = vshrl.u32 %v4553, 7
        %v4555 = vsub.s32 7, %v4554
        %v4556 = vrot.slane %v4521, %v4555
        %v4557 = vlaneseq
        %v4558 = vshrl.u32 %v4557, 7
        %v4559 = vsub.s32 0, %v4558
        %v4560 = vrot.slane %v4522, %v4559
        %v4570 = vmul.f32 %v4502, %v4528
        %v4571 = vmul.f32 %v4503, %v4532
        %v4572 = vmul.f32 %v4504, %v4536
        %v4573 = vmul.f32 %v4505, %v4540
        %v4574 = vmul.f32 %v4506, %v4544
        %v4575 = vmul.f32 %v4507, %v4548
        %v4576 = vmul.f32 %v4508, %v4552
        %v4577 = vmul.f32 %v4509, %v4556
        %v4578 = vmul.f32 %v4510, %v4560
        %v4579 = vadd.f32 %v4570, %v4571
        %v4580 = vadd.f32 %v4579, %v4572
        %v4581 = vadd.f32 %v4580, %v4573
        %v4582 = vadd.f32 %v4581, %v4574
        %v4583 = vadd.f32 %v4582, %v4575
        %v4584 = vadd.f32 %v4583, %v4576
        %v4585 = vadd.f32 %v4584, %v4577
        %v4586 = vsel %vm4519, %v4578, 0.0
        %v4587 = vadd.f32 %v4585, %v4586
        %4588 = vadd.xlane.f32.xlu0 %v4587
        %v4589 = vpop.xlane.xlu0 %4588
        %vm4590 = vcmask 7168
        %4591 = vst.msk [vmem:[%s233] sm:$0xff] %vm4590, %v4589
        %v4592 = vmul.f32 %v4570, %v4570
        %v4593 = vmul.f32 %v4571, %v4571
        %v4594 = vmul.f32 %v4572, %v4572
        %v4595 = vmul.f32 %v4573, %v4573
        %v4596 = vmul.f32 %v4574, %v4574
        %v4597 = vmul.f32 %v4575, %v4575
        %v4598 = vmul.f32 %v4576, %v4576
        %v4599 = vmul.f32 %v4577, %v4577
        %v4600 = vmul.f32 %v4578, %v4578
        %v4601 = vadd.f32 %v4592, %v4593
        %v4602 = vadd.f32 %v4601, %v4594
        %v4603 = vadd.f32 %v4602, %v4595
        %v4604 = vadd.f32 %v4603, %v4596
        %v4605 = vadd.f32 %v4604, %v4597
        %v4606 = vadd.f32 %v4605, %v4598
        %v4607 = vadd.f32 %v4606, %v4599
        %v4608 = vsel %vm4519, %v4600, 0.0
        %v4609 = vadd.f32 %v4607, %v4608
        %4610 = vadd.xlane.f32.xlu0 %v4609
        %v4611 = vpop.xlane.xlu0 %4610
        %vm4612 = vcmask 15368
        %4613 = vst.msk [vmem:[%s233] sm:$0xff] %vm4612, %v4611
        %s4614 = sand.u32 %s117, 1
        %s4615 = scalar_lea.sflag [#allocation3], %s4614
        %s4616 = sand.u32 %s117, 1
        %s4617 = smul.addr %s4616, 72
        %s4618 = scalar_lea.vmem [#allocation2], %s4617
        %p4619 = scmp.lt.s32.totalorder %s20, 1
        %s4620 = scalar_select %p4619, %s20, 1
        %s4621 = smul.addr %s4620, 8
        %s4622 = scalar_lea.vmem %s5, %s4621
        // Predicated region
        $region37: #{tpu_custom_call.1} parent=35 // pred_check
          %p4623 = pneg %p127
        $region38: #{tpu_custom_call.1} parent=35 // pred_check_branch
          %4625 = sbr.rel (%p4623) target = $region40
        $region39: #{tpu_custom_call.1} parent=35 // pred_region
          %s4627 = ssub.s32 1152, 1152
          %4628 = vsyncadd %s4615, %s4627
          %s4629 = smul.addr %s20, 9
          %s4630 = smul.addr %s4629, 128
          %s4631 = scalar_lea.hbm %s4, %s4630
          %s4633 = sshll.u32 %s4618, 4
          %s4634 = int_to_ptr.vmem [resolvable:$true] %s4633
          %4636 = dma.vmem_to_hbm [thread:$0]  %s4634, 1152, %s4631, %s4615
        $region40: #{tpu_custom_call.1} parent=35 // pred_fallthru
          _
        // Predicated region
        $region41: #{tpu_custom_call.1} parent=35 // pred_check
          %p4637 = pneg %p153
        $region42: #{tpu_custom_call.1} parent=35 // pred_check_branch
          %4639 = sbr.rel (%p4637) target = $region44
        $region43: #{tpu_custom_call.1} parent=35 // pred_region
          _
        $region44: #{tpu_custom_call.1} parent=35 // pred_fallthru
          _
      $region36: #{tpu_custom_call.1} parent=5 // pred_fallthru
        _
      %p4640 = scmp.le.s32.totalorder 2, %s15
      // Predicated region
      $region45: #{tpu_custom_call.1} parent=5 // pred_check
        %p4641 = pneg %p4640
      $region46: #{tpu_custom_call.1} parent=5 // pred_check_branch
        %4643 = sbr.rel (%p4641) target = $region48
      $region47: #{tpu_custom_call.1} parent=5 // pred_region
        %s4644 = ssub.s32 %s15, 2
        // Predicated region
        $region49: #{tpu_custom_call.1} parent=47 // pred_check
          %p4645 = pneg %p133
        $region50: #{tpu_custom_call.1} parent=47 // pred_check_branch
          %4647 = sbr.rel (%p4645) target = $region52
        $region51: #{tpu_custom_call.1} parent=47 // pred_region
          %s4648 = sand.u32 %s118, 1
          %s4649 = scalar_lea.sflag [#allocation3], %s4648
          %s4650 = sand.u32 %s118, 1
          %s4651 = smul.addr %s4650, 72
          %s4652 = scalar_lea.vmem [#allocation2], %s4651
          %4653 = dma.done %s4649, 1152
        $region52: #{tpu_custom_call.1} parent=47 // pred_fallthru
          _
        // Predicated region
        $region53: #{tpu_custom_call.1} parent=47 // pred_check
          %p4654 = pneg %p159
        $region54: #{tpu_custom_call.1} parent=47 // pred_check_branch
          %4656 = sbr.rel (%p4654) target = $region56
        $region55: #{tpu_custom_call.1} parent=47 // pred_region
          %p4657 = scmp.lt.s32.totalorder %s21, 1
          %s4658 = scalar_select %p4657, %s21, 1
          %s4659 = smul.addr %s4658, 8
          %s4660 = scalar_lea.vmem %s5, %s4659
        $region56: #{tpu_custom_call.1} parent=47 // pred_fallthru
          _
      $region48: #{tpu_custom_call.1} parent=5 // pred_fallthru
        _
    $region6: #{tpu_custom_call.1} parent=1 // loop_footer
      %s19 = sadd.s32 1, %s15
    $region7: #{tpu_custom_call.1} parent=1 // loop_footer_branch
      %14 = sbr.rel target = $region3
    $region8: #{tpu_custom_call.1} parent=1 // loop_exit
      _
    %4661 = vsyncpa [#allocation3], 1
    %s4662 = scalar_lea.sflag [#allocation3], 1
    %4663 = vsyncpa %s4662, 1

</llo_original>
